<compile_context>
chip_gen: v7x
topology: tpu7x:2x2x1
jax: 0.10.0
libtpu: 0.0.40
codegen_flags: <defaults>
</compile_context>

<pallas_src>
import functools

import jax
import jax.numpy as jnp
from jax.experimental import pallas as pl
from jax.experimental.pallas import tpu as pltpu


# ----------------------------- fused Pallas kernel --------------------------

def _fb_kernel(x1_ref, y1_ref, x2_ref, y2_ref, x3_ref, y3_ref, info_ref,
               a0x_ref, a0y_ref, b0a_ref, c0_ref, v0_ref,
               a1x_ref, a1y_ref, b1a_ref, c1_ref, v1_ref,
               a2x_ref, a2y_ref, a2i_ref, bf_ref,
               o_ref, *, nfH, W0, W1, K0, K1):
    """One grid step == one batch element.  All matrices are 2D:
       activations are (C*H, W) tiles, weights are pre-folded matrices."""

    def mm(a, b):
        return jnp.dot(a, b, preferred_element_type=jnp.float32)

    # fusion0: 1x1 conv (+ReLU) on [x1;y1] via split weights (no concat).
    z0 = jnp.maximum(mm(a0x_ref[...], x1_ref[0]) + mm(a0y_ref[...], y1_ref[0])
                     + b0a_ref[...], 0.0)                       # (nf*H0, W0)
    # fusion0 ConvTranspose2d(8,4,2), already folded with fusion2's f0 columns.
    g0 = mm(c0_ref[...], z0)                                    # (K0*nf*H, W0)
    acc = jnp.zeros(o_ref.shape[1:], jnp.float32)               # (nf*H, W)
    for kw in range(K0):
        acc = acc + mm(g0[kw * nfH:(kw + 1) * nfH, :],
                       v0_ref[kw * W0:(kw + 1) * W0, :])

    # fusion1: 1x1 conv (+ReLU) then ConvTranspose2d(3,2,1,op=1), folded.
    z1 = jnp.maximum(mm(a1x_ref[...], x2_ref[0]) + mm(a1y_ref[...], y2_ref[0])
                     + b1a_ref[...], 0.0)                       # (nf*H1, W1)
    g1 = mm(c1_ref[...], z1)                                    # (K1*nf*H, W1)
    for kw in range(K1):
        acc = acc + mm(g1[kw * nfH:(kw + 1) * nfH, :],
                       v1_ref[kw * W1:(kw + 1) * W1, :])

    # fusion2 direct 1x1 terms (x3, y3, information), folded biases, ReLU.
    acc = acc + (mm(a2x_ref[...], x3_ref[0]) + mm(a2y_ref[...], y3_ref[0])
                 + mm(a2i_ref[...], info_ref[0]) + bf_ref[...])
    o_ref[0] = jnp.maximum(acc, 0.0).astype(o_ref.dtype)


# -------------------- weight pre-folding (tiny, outside kernel) --------------

def _scatter(out_size, in_size, kernel, stride, pad):
    """S[o, i, k] = 1 iff o == i*stride - pad + k  (conv-transpose scatter)."""
    o = jnp.arange(out_size)[:, None, None]
    i = jnp.arange(in_size)[None, :, None]
    k = jnp.arange(kernel)[None, None, :]
    return (o == i * stride - pad + k).astype(jnp.float32)


def _ct_matrices(w_ct, w_mix, out_hw, in_hw, kernel, stride, pad):
    """ConvTranspose2d (torch weight (Cin, Cout, K, K)) folded with a trailing
    1x1 mix w_mix (Cf, Cout), expressed in the (C*H, W) layout as
        out = sum_kw (C_kw @ z) @ V_kw^T
    Returns C stacked over kw: (K*Cf*Hout, Cin*Hin), V^T stacked: (K*Win, Wout).
    """
    Hout, Wout = out_hw
    Hin, Win = in_hw
    cin = w_ct.shape[0]
    cf = w_mix.shape[0]
    U = _scatter(Hout, Hin, kernel, stride, pad)        # (Hout, Hin, K) over kh
    V = _scatter(Wout, Win, kernel, stride, pad)        # (Wout, Win, K) over kw
    wf = jnp.einsum('cokw,fo->cfkw', w_ct, w_mix)       # fold the 1x1 mix
    C = jnp.einsum('oih,cfhw->wfoci', U, wf).reshape(kernel * cf * Hout, cin * Hin)
    VT = jnp.transpose(V, (2, 1, 0)).reshape(kernel * Win, Wout)
    return C, VT


# ------------------------------ FB forward -----------------------------------

def fb_forward(params, x1, x2, x3, y1, y2, y3, information):
    f32 = jnp.float32
    B, _, H0, W0 = x1.shape
    _, _, H1, W1 = x2.shape
    _, nf, H, W = x3.shape
    nfH = nf * H

    p = {k: v.astype(f32) for k, v in params.items()}
    w2 = p["w2"]
    w2_f0, w2_f1 = w2[:, :nf], w2[:, nf:2 * nf]
    w2_x3 = w2[:, 2 * nf:3 * nf]
    w2_y3 = w2[:, 3 * nf:4 * nf]
    w2_in = w2[:, 4 * nf:5 * nf]

    eH0 = jnp.eye(H0, dtype=f32)
    eH1 = jnp.eye(H1, dtype=f32)
    eH = jnp.eye(H, dtype=f32)

    # 1x1 convs in (C*H, W) layout: kron(channel mix, I_H); split over [x;y].
    A0x = jnp.kron(p["w0a"][:, :4 * nf], eH0)
    A0y = jnp.kron(p["w0a"][:, 4 * nf:], eH0)
    b0a = jnp.repeat(p["b0a"], H0)[:, None]
    A1x = jnp.kron(p["w1a"][:, :2 * nf], eH1)
    A1y = jnp.kron(p["w1a"][:, 2 * nf:], eH1)
    b1a = jnp.repeat(p["b1a"], H1)[:, None]

    # Transposed convs folded with fusion2's f0/f1 weight columns.
    C0, V0T = _ct_matrices(p["w0b"], w2_f0, (H, W), (H0, W0), 8, 4, 2)
    C1, V1T = _ct_matrices(p["w1b"], w2_f1, (H, W), (H1, W1), 3, 2, 1)

    # fusion2 direct terms and fully folded bias.
    A2x = jnp.kron(w2_x3, eH)
    A2y = jnp.kron(w2_y3, eH)
    A2i = jnp.kron(w2_in, eH)
    bf = jnp.repeat(p["b2"] + w2_f0 @ p["b0b"] + w2_f1 @ p["b1b"], H)[:, None]

    # Free row-major reshapes of NCHW activations: (B, C, H, W) -> (B, C*H, W).
    x1r = x1.astype(f32).reshape(B, -1, W0)
    y1r = y1.astype(f32).reshape(B, -1, W0)
    x2r = x2.astype(f32).reshape(B, -1, W1)
    y2r = y2.astype(f32).reshape(B, -1, W1)
    x3r = x3.astype(f32).reshape(B, -1, W)
    y3r = y3.astype(f32).reshape(B, -1, W)
    inr = information.astype(f32).reshape(B, -1, W)

    acts = (x1r, y1r, x2r, y2r, x3r, y3r, inr)
    wts = (A0x, A0y, b0a, C0, V0T, A1x, A1y, b1a, C1, V1T, A2x, A2y, A2i, bf)

    def act_spec(a):
        return pl.BlockSpec((1,) + a.shape[1:], lambda b: (b, 0, 0))

    def wt_spec(a):
        return pl.BlockSpec(a.shape, lambda b: (0, 0))

    out = pl.pallas_call(
        functools.partial(_fb_kernel, nfH=nfH, W0=W0, W1=W1, K0=8, K1=3),
        out_shape=jax.ShapeDtypeStruct((B, nfH, W), f32),
        grid=(B,),
        in_specs=[act_spec(a) for a in acts] + [wt_spec(w) for w in wts],
        out_specs=pl.BlockSpec((1, nfH, W), lambda b: (b, 0, 0)),
        compiler_params=pltpu.CompilerParams(dimension_semantics=("parallel",)),
    )(*acts, *wts)

    # Free reshape back to NCHW.
    return out.reshape(B, nf, H, W)


# ------------------------- pure-JAX reference --------------------------------

def fb_reference(params, x1, x2, x3, y1, y2, y3, information):
    def conv1x1(x, w, b):
        return jnp.einsum("nchw,oc->nohw", x, w,
                          precision=jax.lax.Precision.HIGHEST) + b[None, :, None, None]

    def ctrans(x, w_ct, b, s, p, op):
        K = w_ct.shape[2]
        w_conv = jnp.flip(w_ct, axis=(2, 3)).transpose(1, 0, 2, 3)
        y = jax.lax.conv_general_dilated(
            x, w_conv, window_strides=(1, 1),
            padding=[(K - 1 - p, K - 1 - p + op)] * 2,
            lhs_dilation=(s, s),
            dimension_numbers=("NCHW", "OIHW", "NCHW"),
            precision=jax.lax.Precision.HIGHEST)
        return y + b[None, :, None, None]

    f0 = ctrans(jax.nn.relu(conv1x1(jnp.concatenate([x1, y1], 1),
                                    params["w0a"], params["b0a"])),
                params["w0b"], params["b0b"], 4, 2, 0)
    f1 = ctrans(jax.nn.relu(conv1x1(jnp.concatenate([x2, y2], 1),
                                    params["w1a"], params["b1a"])),
                params["w1b"], params["b1b"], 2, 1, 1)
    f = jax.nn.relu(conv1x1(jnp.concatenate([f0, f1, x3, y3, information], 1),
                            params["w2"], params["b2"]))
    return f


# ---------------------------------- main --------------------------------------

if __name__ == "__main__":
    nf = 4
    B, H, W = 2, 16, 16

    key = jax.random.PRNGKey(0)
    keys = jax.random.split(key, 18)

    def init(k, shape, scale=0.1):
        return (scale * jax.random.normal(k, shape)).astype(jnp.float32)

    params = {
        "w0a": init(keys[0], (nf, 8 * nf)),      "b0a": init(keys[1], (nf,)),
        "w0b": init(keys[2], (nf, nf, 8, 8)),    "b0b": init(keys[3], (nf,)),
        "w1a": init(keys[4], (nf, 4 * nf)),      "b1a": init(keys[5], (nf,)),
        "w1b": init(keys[6], (nf, nf, 3, 3)),    "b1b": init(keys[7], (nf,)),
        "w2":  init(keys[8], (nf, 5 * nf)),      "b2":  init(keys[9], (nf,)),
    }

    x1 = jax.random.normal(keys[10], (B, 4 * nf, H // 4, W // 4), jnp.float32)
    y1 = jax.random.normal(keys[11], (B, 4 * nf, H // 4, W // 4), jnp.float32)
    x2 = jax.random.normal(keys[12], (B, 2 * nf, H // 2, W // 2), jnp.float32)
    y2 = jax.random.normal(keys[13], (B, 2 * nf, H // 2, W // 2), jnp.float32)
    x3 = jax.random.normal(keys[14], (B, nf, H, W), jnp.float32)
    y3 = jax.random.normal(keys[15], (B, nf, H, W), jnp.float32)
    info = jax.random.normal(keys[16], (B, nf, H, W), jnp.float32)

    out = jax.jit(fb_forward)(params, x1, x2, x3, y1, y2, y3, info)
    out = jax.block_until_ready(out)
    assert out.shape == (B, nf, H, W), out.shape

    ref = fb_reference(params, x1, x2, x3, y1, y2, y3, info)
    max_err = float(jnp.max(jnp.abs(out - ref)))
    assert max_err < 1e-3, f"max abs error {max_err}"

    print("KERNEL_OK")
</pallas_src>

<mosaic_0001>
module attributes {stable_mosaic.version = 11 : i64} {
  func.func @_fb_kernel(%arg0: i32, %arg1: memref<1x64x4xf32, #tpu.memory_space<vmem>>, %arg2: memref<1x64x4xf32, #tpu.memory_space<vmem>>, %arg3: memref<1x64x8xf32, #tpu.memory_space<vmem>>, %arg4: memref<1x64x8xf32, #tpu.memory_space<vmem>>, %arg5: memref<1x64x16xf32, #tpu.memory_space<vmem>>, %arg6: memref<1x64x16xf32, #tpu.memory_space<vmem>>, %arg7: memref<1x64x16xf32, #tpu.memory_space<vmem>>, %arg8: memref<16x64xf32, #tpu.memory_space<vmem>>, %arg9: memref<16x64xf32, #tpu.memory_space<vmem>>, %arg10: memref<16x1xf32, #tpu.memory_space<vmem>>, %arg11: memref<512x16xf32, #tpu.memory_space<vmem>>, %arg12: memref<32x16xf32, #tpu.memory_space<vmem>>, %arg13: memref<32x64xf32, #tpu.memory_space<vmem>>, %arg14: memref<32x64xf32, #tpu.memory_space<vmem>>, %arg15: memref<32x1xf32, #tpu.memory_space<vmem>>, %arg16: memref<192x32xf32, #tpu.memory_space<vmem>>, %arg17: memref<24x16xf32, #tpu.memory_space<vmem>>, %arg18: memref<64x64xf32, #tpu.memory_space<vmem>>, %arg19: memref<64x64xf32, #tpu.memory_space<vmem>>, %arg20: memref<64x64xf32, #tpu.memory_space<vmem>>, %arg21: memref<64x1xf32, #tpu.memory_space<vmem>>, %arg22: memref<1x64x16xf32, #tpu.memory_space<vmem>>) attributes {dimension_semantics = [#tpu.dimension_semantics<parallel>], iteration_bounds = array<i64: 2>, scalar_prefetch = 0 : i64, scratch_operands = 0 : i64, tpu.core_type = #tpu.core_type<tc>, window_params = [{transform_indices = @transform_0, window_bounds = array<i64: 1, 64, 4>}, {transform_indices = @transform_1, window_bounds = array<i64: 1, 64, 4>}, {transform_indices = @transform_2, window_bounds = array<i64: 1, 64, 8>}, {transform_indices = @transform_3, window_bounds = array<i64: 1, 64, 8>}, {transform_indices = @transform_4, window_bounds = array<i64: 1, 64, 16>}, {transform_indices = @transform_5, window_bounds = array<i64: 1, 64, 16>}, {transform_indices = @transform_6, window_bounds = array<i64: 1, 64, 16>}, {pipeline_mode = #tpu.pipeline_mode<synchronous>, transform_indices = @transform_7, window_bounds = array<i64: 16, 64>}, {pipeline_mode = #tpu.pipeline_mode<synchronous>, transform_indices = @transform_8, window_bounds = array<i64: 16, 64>}, {pipeline_mode = #tpu.pipeline_mode<synchronous>, transform_indices = @transform_9, window_bounds = array<i64: 16, 1>}, {pipeline_mode = #tpu.pipeline_mode<synchronous>, transform_indices = @transform_10, window_bounds = array<i64: 512, 16>}, {pipeline_mode = #tpu.pipeline_mode<synchronous>, transform_indices = @transform_11, window_bounds = array<i64: 32, 16>}, {pipeline_mode = #tpu.pipeline_mode<synchronous>, transform_indices = @transform_12, window_bounds = array<i64: 32, 64>}, {pipeline_mode = #tpu.pipeline_mode<synchronous>, transform_indices = @transform_13, window_bounds = array<i64: 32, 64>}, {pipeline_mode = #tpu.pipeline_mode<synchronous>, transform_indices = @transform_14, window_bounds = array<i64: 32, 1>}, {pipeline_mode = #tpu.pipeline_mode<synchronous>, transform_indices = @transform_15, window_bounds = array<i64: 192, 32>}, {pipeline_mode = #tpu.pipeline_mode<synchronous>, transform_indices = @transform_16, window_bounds = array<i64: 24, 16>}, {pipeline_mode = #tpu.pipeline_mode<synchronous>, transform_indices = @transform_17, window_bounds = array<i64: 64, 64>}, {pipeline_mode = #tpu.pipeline_mode<synchronous>, transform_indices = @transform_18, window_bounds = array<i64: 64, 64>}, {pipeline_mode = #tpu.pipeline_mode<synchronous>, transform_indices = @transform_19, window_bounds = array<i64: 64, 64>}, {pipeline_mode = #tpu.pipeline_mode<synchronous>, transform_indices = @transform_20, window_bounds = array<i64: 64, 1>}, {transform_indices = @transform_21, window_bounds = array<i64: 1, 64, 16>}]} {
    %c0 = arith.constant 0 : index
    %c0_0 = arith.constant 0 : index
    %0 = vector.load %arg8[%c0, %c0_0] : memref<16x64xf32, #tpu.memory_space<vmem>>, vector<16x64xf32>
    %c0_1 = arith.constant 0 : index
    %c0_2 = arith.constant 0 : index
    %c0_3 = arith.constant 0 : index
    %1 = vector.load %arg1[%c0_1, %c0_2, %c0_3] : memref<1x64x4xf32, #tpu.memory_space<vmem>>, vector<1x64x4xf32>
    %2 = vector.shape_cast %1 : vector<1x64x4xf32> to vector<64x4xf32>
    %cst = arith.constant dense<0.000000e+00> : vector<16x4xf32>
    %3 = tpu.matmul %0, %2, %cst {dimension_numbers = #tpu.dot_dimension_numbers<[1], [0], [0], [1], [0, 0, 1, 1], [], []>} : vector<16x64xf32>, vector<64x4xf32>, vector<16x4xf32> -> vector<16x4xf32>
    %c0_4 = arith.constant 0 : index
    %c0_5 = arith.constant 0 : index
    %4 = vector.load %arg9[%c0_4, %c0_5] : memref<16x64xf32, #tpu.memory_space<vmem>>, vector<16x64xf32>
    %c0_6 = arith.constant 0 : index
    %c0_7 = arith.constant 0 : index
    %c0_8 = arith.constant 0 : index
    %5 = vector.load %arg2[%c0_6, %c0_7, %c0_8] : memref<1x64x4xf32, #tpu.memory_space<vmem>>, vector<1x64x4xf32>
    %6 = vector.shape_cast %5 : vector<1x64x4xf32> to vector<64x4xf32>
    %cst_9 = arith.constant dense<0.000000e+00> : vector<16x4xf32>
    %7 = tpu.matmul %4, %6, %cst_9 {dimension_numbers = #tpu.dot_dimension_numbers<[1], [0], [0], [1], [0, 0, 1, 1], [], []>} : vector<16x64xf32>, vector<64x4xf32>, vector<16x4xf32> -> vector<16x4xf32>
    %8 = arith.addf %3, %7 : vector<16x4xf32>
    %c0_10 = arith.constant 0 : index
    %c0_11 = arith.constant 0 : index
    %9 = vector.load %arg10[%c0_10, %c0_11] : memref<16x1xf32, #tpu.memory_space<vmem>>, vector<16x1xf32>
    %10 = vector.broadcast %9 : vector<16x1xf32> to vector<16x4xf32>
    %11 = arith.addf %8, %10 : vector<16x4xf32>
    %cst_12 = arith.constant 0.000000e+00 : f32
    %12 = vector.broadcast %cst_12 : f32 to vector<16x4xf32>
    %13 = arith.maximumf %11, %12 : vector<16x4xf32>
    %c0_13 = arith.constant 0 : index
    %c0_14 = arith.constant 0 : index
    %14 = vector.load %arg11[%c0_13, %c0_14] : memref<512x16xf32, #tpu.memory_space<vmem>>, vector<512x16xf32>
    %cst_15 = arith.constant dense<0.000000e+00> : vector<512x4xf32>
    %15 = tpu.matmul %14, %13, %cst_15 {dimension_numbers = #tpu.dot_dimension_numbers<[1], [0], [0], [1], [0, 0, 1, 1], [], []>} : vector<512x16xf32>, vector<16x4xf32>, vector<512x4xf32> -> vector<512x4xf32>
    %cst_16 = arith.constant 0.000000e+00 : f32
    %16 = vector.broadcast %cst_16 : f32 to vector<64x16xf32>
    %17 = vector.extract_strided_slice %15 {offsets = [0, 0], sizes = [64, 4], strides = [1, 1]} : vector<512x4xf32> to vector<64x4xf32>
    %c0_17 = arith.constant 0 : index
    %c0_18 = arith.constant 0 : index
    %18 = vector.load %arg12[%c0_17, %c0_18] : memref<32x16xf32, #tpu.memory_space<vmem>>, vector<4x16xf32>
    %cst_19 = arith.constant dense<0.000000e+00> : vector<64x16xf32>
    %19 = tpu.matmul %17, %18, %cst_19 {dimension_numbers = #tpu.dot_dimension_numbers<[1], [0], [0], [1], [0, 0, 1, 1], [], []>} : vector<64x4xf32>, vector<4x16xf32>, vector<64x16xf32> -> vector<64x16xf32>
    %20 = arith.addf %16, %19 : vector<64x16xf32>
    %21 = vector.extract_strided_slice %15 {offsets = [64, 0], sizes = [64, 4], strides = [1, 1]} : vector<512x4xf32> to vector<64x4xf32>
    %c4 = arith.constant 4 : index
    %c0_20 = arith.constant 0 : index
    %22 = vector.load %arg12[%c4, %c0_20] : memref<32x16xf32, #tpu.memory_space<vmem>>, vector<4x16xf32>
    %cst_21 = arith.constant dense<0.000000e+00> : vector<64x16xf32>
    %23 = tpu.matmul %21, %22, %cst_21 {dimension_numbers = #tpu.dot_dimension_numbers<[1], [0], [0], [1], [0, 0, 1, 1], [], []>} : vector<64x4xf32>, vector<4x16xf32>, vector<64x16xf32> -> vector<64x16xf32>
    %24 = arith.addf %20, %23 : vector<64x16xf32>
    %25 = vector.extract_strided_slice %15 {offsets = [128, 0], sizes = [64, 4], strides = [1, 1]} : vector<512x4xf32> to vector<64x4xf32>
    %c8 = arith.constant 8 : index
    %c0_22 = arith.constant 0 : index
    %26 = vector.load %arg12[%c8, %c0_22] : memref<32x16xf32, #tpu.memory_space<vmem>>, vector<4x16xf32>
    %cst_23 = arith.constant dense<0.000000e+00> : vector<64x16xf32>
    %27 = tpu.matmul %25, %26, %cst_23 {dimension_numbers = #tpu.dot_dimension_numbers<[1], [0], [0], [1], [0, 0, 1, 1], [], []>} : vector<64x4xf32>, vector<4x16xf32>, vector<64x16xf32> -> vector<64x16xf32>
    %28 = arith.addf %24, %27 : vector<64x16xf32>
    %29 = vector.extract_strided_slice %15 {offsets = [192, 0], sizes = [64, 4], strides = [1, 1]} : vector<512x4xf32> to vector<64x4xf32>
    %c12 = arith.constant 12 : index
    %c0_24 = arith.constant 0 : index
    %30 = vector.load %arg12[%c12, %c0_24] : memref<32x16xf32, #tpu.memory_space<vmem>>, vector<4x16xf32>
    %cst_25 = arith.constant dense<0.000000e+00> : vector<64x16xf32>
    %31 = tpu.matmul %29, %30, %cst_25 {dimension_numbers = #tpu.dot_dimension_numbers<[1], [0], [0], [1], [0, 0, 1, 1], [], []>} : vector<64x4xf32>, vector<4x16xf32>, vector<64x16xf32> -> vector<64x16xf32>
    %32 = arith.addf %28, %31 : vector<64x16xf32>
    %33 = vector.extract_strided_slice %15 {offsets = [256, 0], sizes = [64, 4], strides = [1, 1]} : vector<512x4xf32> to vector<64x4xf32>
    %c16 = arith.constant 16 : index
    %c0_26 = arith.constant 0 : index
    %34 = vector.load %arg12[%c16, %c0_26] : memref<32x16xf32, #tpu.memory_space<vmem>>, vector<4x16xf32>
    %cst_27 = arith.constant dense<0.000000e+00> : vector<64x16xf32>
    %35 = tpu.matmul %33, %34, %cst_27 {dimension_numbers = #tpu.dot_dimension_numbers<[1], [0], [0], [1], [0, 0, 1, 1], [], []>} : vector<64x4xf32>, vector<4x16xf32>, vector<64x16xf32> -> vector<64x16xf32>
    %36 = arith.addf %32, %35 : vector<64x16xf32>
    %37 = vector.extract_strided_slice %15 {offsets = [320, 0], sizes = [64, 4], strides = [1, 1]} : vector<512x4xf32> to vector<64x4xf32>
    %c20 = arith.constant 20 : index
    %c0_28 = arith.constant 0 : index
    %38 = vector.load %arg12[%c20, %c0_28] : memref<32x16xf32, #tpu.memory_space<vmem>>, vector<4x16xf32>
    %cst_29 = arith.constant dense<0.000000e+00> : vector<64x16xf32>
    %39 = tpu.matmul %37, %38, %cst_29 {dimension_numbers = #tpu.dot_dimension_numbers<[1], [0], [0], [1], [0, 0, 1, 1], [], []>} : vector<64x4xf32>, vector<4x16xf32>, vector<64x16xf32> -> vector<64x16xf32>
    %40 = arith.addf %36, %39 : vector<64x16xf32>
    %41 = vector.extract_strided_slice %15 {offsets = [384, 0], sizes = [64, 4], strides = [1, 1]} : vector<512x4xf32> to vector<64x4xf32>
    %c24 = arith.constant 24 : index
    %c0_30 = arith.constant 0 : index
    %42 = vector.load %arg12[%c24, %c0_30] : memref<32x16xf32, #tpu.memory_space<vmem>>, vector<4x16xf32>
    %cst_31 = arith.constant dense<0.000000e+00> : vector<64x16xf32>
    %43 = tpu.matmul %41, %42, %cst_31 {dimension_numbers = #tpu.dot_dimension_numbers<[1], [0], [0], [1], [0, 0, 1, 1], [], []>} : vector<64x4xf32>, vector<4x16xf32>, vector<64x16xf32> -> vector<64x16xf32>
    %44 = arith.addf %40, %43 : vector<64x16xf32>
    %45 = vector.extract_strided_slice %15 {offsets = [448, 0], sizes = [64, 4], strides = [1, 1]} : vector<512x4xf32> to vector<64x4xf32>
    %c28 = arith.constant 28 : index
    %c0_32 = arith.constant 0 : index
    %46 = vector.load %arg12[%c28, %c0_32] : memref<32x16xf32, #tpu.memory_space<vmem>>, vector<4x16xf32>
    %cst_33 = arith.constant dense<0.000000e+00> : vector<64x16xf32>
    %47 = tpu.matmul %45, %46, %cst_33 {dimension_numbers = #tpu.dot_dimension_numbers<[1], [0], [0], [1], [0, 0, 1, 1], [], []>} : vector<64x4xf32>, vector<4x16xf32>, vector<64x16xf32> -> vector<64x16xf32>
    %48 = arith.addf %44, %47 : vector<64x16xf32>
    %c0_34 = arith.constant 0 : index
    %c0_35 = arith.constant 0 : index
    %49 = vector.load %arg13[%c0_34, %c0_35] : memref<32x64xf32, #tpu.memory_space<vmem>>, vector<32x64xf32>
    %c0_36 = arith.constant 0 : index
    %c0_37 = arith.constant 0 : index
    %c0_38 = arith.constant 0 : index
    %50 = vector.load %arg3[%c0_36, %c0_37, %c0_38] : memref<1x64x8xf32, #tpu.memory_space<vmem>>, vector<1x64x8xf32>
    %51 = vector.shape_cast %50 : vector<1x64x8xf32> to vector<64x8xf32>
    %cst_39 = arith.constant dense<0.000000e+00> : vector<32x8xf32>
    %52 = tpu.matmul %49, %51, %cst_39 {dimension_numbers = #tpu.dot_dimension_numbers<[1], [0], [0], [1], [0, 0, 1, 1], [], []>} : vector<32x64xf32>, vector<64x8xf32>, vector<32x8xf32> -> vector<32x8xf32>
    %c0_40 = arith.constant 0 : index
    %c0_41 = arith.constant 0 : index
    %53 = vector.load %arg14[%c0_40, %c0_41] : memref<32x64xf32, #tpu.memory_space<vmem>>, vector<32x64xf32>
    %c0_42 = arith.constant 0 : index
    %c0_43 = arith.constant 0 : index
    %c0_44 = arith.constant 0 : index
    %54 = vector.load %arg4[%c0_42, %c0_43, %c0_44] : memref<1x64x8xf32, #tpu.memory_space<vmem>>, vector<1x64x8xf32>
    %55 = vector.shape_cast %54 : vector<1x64x8xf32> to vector<64x8xf32>
    %cst_45 = arith.constant dense<0.000000e+00> : vector<32x8xf32>
    %56 = tpu.matmul %53, %55, %cst_45 {dimension_numbers = #tpu.dot_dimension_numbers<[1], [0], [0], [1], [0, 0, 1, 1], [], []>} : vector<32x64xf32>, vector<64x8xf32>, vector<32x8xf32> -> vector<32x8xf32>
    %57 = arith.addf %52, %56 : vector<32x8xf32>
    %c0_46 = arith.constant 0 : index
    %c0_47 = arith.constant 0 : index
    %58 = vector.load %arg15[%c0_46, %c0_47] : memref<32x1xf32, #tpu.memory_space<vmem>>, vector<32x1xf32>
    %59 = vector.broadcast %58 : vector<32x1xf32> to vector<32x8xf32>
    %60 = arith.addf %57, %59 : vector<32x8xf32>
    %cst_48 = arith.constant 0.000000e+00 : f32
    %61 = vector.broadcast %cst_48 : f32 to vector<32x8xf32>
    %62 = arith.maximumf %60, %61 : vector<32x8xf32>
    %c0_49 = arith.constant 0 : index
    %c0_50 = arith.constant 0 : index
    %63 = vector.load %arg16[%c0_49, %c0_50] : memref<192x32xf32, #tpu.memory_space<vmem>>, vector<192x32xf32>
    %cst_51 = arith.constant dense<0.000000e+00> : vector<192x8xf32>
    %64 = tpu.matmul %63, %62, %cst_51 {dimension_numbers = #tpu.dot_dimension_numbers<[1], [0], [0], [1], [0, 0, 1, 1], [], []>} : vector<192x32xf32>, vector<32x8xf32>, vector<192x8xf32> -> vector<192x8xf32>
    %65 = vector.extract_strided_slice %64 {offsets = [0, 0], sizes = [64, 8], strides = [1, 1]} : vector<192x8xf32> to vector<64x8xf32>
    %c0_52 = arith.constant 0 : index
    %c0_53 = arith.constant 0 : index
    %66 = vector.load %arg17[%c0_52, %c0_53] : memref<24x16xf32, #tpu.memory_space<vmem>>, vector<8x16xf32>
    %cst_54 = arith.constant dense<0.000000e+00> : vector<64x16xf32>
    %67 = tpu.matmul %65, %66, %cst_54 {dimension_numbers = #tpu.dot_dimension_numbers<[1], [0], [0], [1], [0, 0, 1, 1], [], []>} : vector<64x8xf32>, vector<8x16xf32>, vector<64x16xf32> -> vector<64x16xf32>
    %68 = arith.addf %48, %67 : vector<64x16xf32>
    %69 = vector.extract_strided_slice %64 {offsets = [64, 0], sizes = [64, 8], strides = [1, 1]} : vector<192x8xf32> to vector<64x8xf32>
    %c8_55 = arith.constant 8 : index
    %c0_56 = arith.constant 0 : index
    %70 = vector.load %arg17[%c8_55, %c0_56] : memref<24x16xf32, #tpu.memory_space<vmem>>, vector<8x16xf32>
    %cst_57 = arith.constant dense<0.000000e+00> : vector<64x16xf32>
    %71 = tpu.matmul %69, %70, %cst_57 {dimension_numbers = #tpu.dot_dimension_numbers<[1], [0], [0], [1], [0, 0, 1, 1], [], []>} : vector<64x8xf32>, vector<8x16xf32>, vector<64x16xf32> -> vector<64x16xf32>
    %72 = arith.addf %68, %71 : vector<64x16xf32>
    %73 = vector.extract_strided_slice %64 {offsets = [128, 0], sizes = [64, 8], strides = [1, 1]} : vector<192x8xf32> to vector<64x8xf32>
    %c16_58 = arith.constant 16 : index
    %c0_59 = arith.constant 0 : index
    %74 = vector.load %arg17[%c16_58, %c0_59] : memref<24x16xf32, #tpu.memory_space<vmem>>, vector<8x16xf32>
    %cst_60 = arith.constant dense<0.000000e+00> : vector<64x16xf32>
    %75 = tpu.matmul %73, %74, %cst_60 {dimension_numbers = #tpu.dot_dimension_numbers<[1], [0], [0], [1], [0, 0, 1, 1], [], []>} : vector<64x8xf32>, vector<8x16xf32>, vector<64x16xf32> -> vector<64x16xf32>
    %76 = arith.addf %72, %75 : vector<64x16xf32>
    %c0_61 = arith.constant 0 : index
    %c0_62 = arith.constant 0 : index
    %77 = vector.load %arg18[%c0_61, %c0_62] : memref<64x64xf32, #tpu.memory_space<vmem>>, vector<64x64xf32>
    %c0_63 = arith.constant 0 : index
    %c0_64 = arith.constant 0 : index
    %c0_65 = arith.constant 0 : index
    %78 = vector.load %arg5[%c0_63, %c0_64, %c0_65] : memref<1x64x16xf32, #tpu.memory_space<vmem>>, vector<1x64x16xf32>
    %79 = vector.shape_cast %78 : vector<1x64x16xf32> to vector<64x16xf32>
    %cst_66 = arith.constant dense<0.000000e+00> : vector<64x16xf32>
    %80 = tpu.matmul %77, %79, %cst_66 {dimension_numbers = #tpu.dot_dimension_numbers<[1], [0], [0], [1], [0, 0, 1, 1], [], []>} : vector<64x64xf32>, vector<64x16xf32>, vector<64x16xf32> -> vector<64x16xf32>
    %c0_67 = arith.constant 0 : index
    %c0_68 = arith.constant 0 : index
    %81 = vector.load %arg19[%c0_67, %c0_68] : memref<64x64xf32, #tpu.memory_space<vmem>>, vector<64x64xf32>
    %c0_69 = arith.constant 0 : index
    %c0_70 = arith.constant 0 : index
    %c0_71 = arith.constant 0 : index
    %82 = vector.load %arg6[%c0_69, %c0_70, %c0_71] : memref<1x64x16xf32, #tpu.memory_space<vmem>>, vector<1x64x16xf32>
    %83 = vector.shape_cast %82 : vector<1x64x16xf32> to vector<64x16xf32>
    %cst_72 = arith.constant dense<0.000000e+00> : vector<64x16xf32>
    %84 = tpu.matmul %81, %83, %cst_72 {dimension_numbers = #tpu.dot_dimension_numbers<[1], [0], [0], [1], [0, 0, 1, 1], [], []>} : vector<64x64xf32>, vector<64x16xf32>, vector<64x16xf32> -> vector<64x16xf32>
    %85 = arith.addf %80, %84 : vector<64x16xf32>
    %c0_73 = arith.constant 0 : index
    %c0_74 = arith.constant 0 : index
    %86 = vector.load %arg20[%c0_73, %c0_74] : memref<64x64xf32, #tpu.memory_space<vmem>>, vector<64x64xf32>
    %c0_75 = arith.constant 0 : index
    %c0_76 = arith.constant 0 : index
    %c0_77 = arith.constant 0 : index
    %87 = vector.load %arg7[%c0_75, %c0_76, %c0_77] : memref<1x64x16xf32, #tpu.memory_space<vmem>>, vector<1x64x16xf32>
    %88 = vector.shape_cast %87 : vector<1x64x16xf32> to vector<64x16xf32>
    %cst_78 = arith.constant dense<0.000000e+00> : vector<64x16xf32>
    %89 = tpu.matmul %86, %88, %cst_78 {dimension_numbers = #tpu.dot_dimension_numbers<[1], [0], [0], [1], [0, 0, 1, 1], [], []>} : vector<64x64xf32>, vector<64x16xf32>, vector<64x16xf32> -> vector<64x16xf32>
    %90 = arith.addf %85, %89 : vector<64x16xf32>
    %c0_79 = arith.constant 0 : index
    %c0_80 = arith.constant 0 : index
    %91 = vector.load %arg21[%c0_79, %c0_80] : memref<64x1xf32, #tpu.memory_space<vmem>>, vector<64x1xf32>
    %92 = vector.broadcast %91 : vector<64x1xf32> to vector<64x16xf32>
    %93 = arith.addf %90, %92 : vector<64x16xf32>
    %94 = arith.addf %76, %93 : vector<64x16xf32>
    %cst_81 = arith.constant 0.000000e+00 : f32
    %95 = vector.broadcast %cst_81 : f32 to vector<64x16xf32>
    %96 = arith.maximumf %94, %95 : vector<64x16xf32>
    %c0_82 = arith.constant 0 : index
    %c0_83 = arith.constant 0 : index
    %c0_84 = arith.constant 0 : index
    %97 = vector.load %arg22[%c0_82, %c0_83, %c0_84] : memref<1x64x16xf32, #tpu.memory_space<vmem>>, vector<1x64x16xf32>
    %98 = vector.shape_cast %97 : vector<1x64x16xf32> to vector<64x16xf32>
    %99 = vector.shape_cast %96 : vector<64x16xf32> to vector<1x64x16xf32>
    tpu.vector_store %arg22[%c0_82, %c0_83, %c0_84], %99 {strides = array<i32>} : memref<1x64x16xf32, #tpu.memory_space<vmem>>, vector<1x64x16xf32>,
    return
  }
  func.func @transform_0(%arg0: i32) -> (i32, i32, i32) {
    %c0_i32 = arith.constant 0 : i32
    %c0_i32_0 = arith.constant 0 : i32
    %c0_i32_1 = arith.constant 0 : i32
    return %arg0, %c0_i32, %c0_i32_0 : i32, i32, i32
  }
  func.func @transform_1(%arg0: i32) -> (i32, i32, i32) {
    %c0_i32 = arith.constant 0 : i32
    %c0_i32_0 = arith.constant 0 : i32
    %c0_i32_1 = arith.constant 0 : i32
    return %arg0, %c0_i32, %c0_i32_0 : i32, i32, i32
  }
  func.func @transform_2(%arg0: i32) -> (i32, i32, i32) {
    %c0_i32 = arith.constant 0 : i32
    %c0_i32_0 = arith.constant 0 : i32
    %c0_i32_1 = arith.constant 0 : i32
    return %arg0, %c0_i32, %c0_i32_0 : i32, i32, i32
  }
  func.func @transform_3(%arg0: i32) -> (i32, i32, i32) {
    %c0_i32 = arith.constant 0 : i32
    %c0_i32_0 = arith.constant 0 : i32
    %c0_i32_1 = arith.constant 0 : i32
    return %arg0, %c0_i32, %c0_i32_0 : i32, i32, i32
  }
  func.func @transform_4(%arg0: i32) -> (i32, i32, i32) {
    %c0_i32 = arith.constant 0 : i32
    %c0_i32_0 = arith.constant 0 : i32
    %c0_i32_1 = arith.constant 0 : i32
    return %arg0, %c0_i32, %c0_i32_0 : i32, i32, i32
  }
  func.func @transform_5(%arg0: i32) -> (i32, i32, i32) {
    %c0_i32 = arith.constant 0 : i32
    %c0_i32_0 = arith.constant 0 : i32
    %c0_i32_1 = arith.constant 0 : i32
    return %arg0, %c0_i32, %c0_i32_0 : i32, i32, i32
  }
  func.func @transform_6(%arg0: i32) -> (i32, i32, i32) {
    %c0_i32 = arith.constant 0 : i32
    %c0_i32_0 = arith.constant 0 : i32
    %c0_i32_1 = arith.constant 0 : i32
    return %arg0, %c0_i32, %c0_i32_0 : i32, i32, i32
  }
  func.func @transform_7(%arg0: i32) -> (i32, i32) {
    %c0_i32 = arith.constant 0 : i32
    %c0_i32_0 = arith.constant 0 : i32
    %c0_i32_1 = arith.constant 0 : i32
    return %c0_i32, %c0_i32_0 : i32, i32
  }
  func.func @transform_8(%arg0: i32) -> (i32, i32) {
    %c0_i32 = arith.constant 0 : i32
    %c0_i32_0 = arith.constant 0 : i32
    %c0_i32_1 = arith.constant 0 : i32
    return %c0_i32, %c0_i32_0 : i32, i32
  }
  func.func @transform_9(%arg0: i32) -> (i32, i32) {
    %c0_i32 = arith.constant 0 : i32
    %c0_i32_0 = arith.constant 0 : i32
    %c0_i32_1 = arith.constant 0 : i32
    return %c0_i32, %c0_i32_0 : i32, i32
  }
  func.func @transform_10(%arg0: i32) -> (i32, i32) {
    %c0_i32 = arith.constant 0 : i32
    %c0_i32_0 = arith.constant 0 : i32
    %c0_i32_1 = arith.constant 0 : i32
    return %c0_i32, %c0_i32_0 : i32, i32
  }
  func.func @transform_11(%arg0: i32) -> (i32, i32) {
    %c0_i32 = arith.constant 0 : i32
    %c0_i32_0 = arith.constant 0 : i32
    %c0_i32_1 = arith.constant 0 : i32
    return %c0_i32, %c0_i32_0 : i32, i32
  }
  func.func @transform_12(%arg0: i32) -> (i32, i32) {
    %c0_i32 = arith.constant 0 : i32
    %c0_i32_0 = arith.constant 0 : i32
    %c0_i32_1 = arith.constant 0 : i32
    return %c0_i32, %c0_i32_0 : i32, i32
  }
  func.func @transform_13(%arg0: i32) -> (i32, i32) {
    %c0_i32 = arith.constant 0 : i32
    %c0_i32_0 = arith.constant 0 : i32
    %c0_i32_1 = arith.constant 0 : i32
    return %c0_i32, %c0_i32_0 : i32, i32
  }
  func.func @transform_14(%arg0: i32) -> (i32, i32) {
    %c0_i32 = arith.constant 0 : i32
    %c0_i32_0 = arith.constant 0 : i32
    %c0_i32_1 = arith.constant 0 : i32
    return %c0_i32, %c0_i32_0 : i32, i32
  }
  func.func @transform_15(%arg0: i32) -> (i32, i32) {
    %c0_i32 = arith.constant 0 : i32
    %c0_i32_0 = arith.constant 0 : i32
    %c0_i32_1 = arith.constant 0 : i32
    return %c0_i32, %c0_i32_0 : i32, i32
  }
  func.func @transform_16(%arg0: i32) -> (i32, i32) {
    %c0_i32 = arith.constant 0 : i32
    %c0_i32_0 = arith.constant 0 : i32
    %c0_i32_1 = arith.constant 0 : i32
    return %c0_i32, %c0_i32_0 : i32, i32
  }
  func.func @transform_17(%arg0: i32) -> (i32, i32) {
    %c0_i32 = arith.constant 0 : i32
    %c0_i32_0 = arith.constant 0 : i32
    %c0_i32_1 = arith.constant 0 : i32
    return %c0_i32, %c0_i32_0 : i32, i32
  }
  func.func @transform_18(%arg0: i32) -> (i32, i32) {
    %c0_i32 = arith.constant 0 : i32
    %c0_i32_0 = arith.constant 0 : i32
    %c0_i32_1 = arith.constant 0 : i32
    return %c0_i32, %c0_i32_0 : i32, i32
  }
  func.func @transform_19(%arg0: i32) -> (i32, i32) {
    %c0_i32 = arith.constant 0 : i32
    %c0_i32_0 = arith.constant 0 : i32
    %c0_i32_1 = arith.constant 0 : i32
    return %c0_i32, %c0_i32_0 : i32, i32
  }
  func.func @transform_20(%arg0: i32) -> (i32, i32) {
    %c0_i32 = arith.constant 0 : i32
    %c0_i32_0 = arith.constant 0 : i32
    %c0_i32_1 = arith.constant 0 : i32
    return %c0_i32, %c0_i32_0 : i32, i32
  }
  func.func @transform_21(%arg0: i32) -> (i32, i32, i32) {
    %c0_i32 = arith.constant 0 : i32
    %c0_i32_0 = arith.constant 0 : i32
    %c0_i32_1 = arith.constant 0 : i32
    return %arg0, %c0_i32, %c0_i32_0 : i32, i32, i32
  }
}

</mosaic_0001>

<llo_original>
// kernel: fb_forward.1
$region0: #{fb_forward.1}
  #allocation0 [shape = 'u32[]', space=smem, size = 0x4, offset = 0x4, fixed_abs, tag = 'smem constant byte address 0x4 - core index']
  #allocation1 [shape = 'u32[144,128]{1,0:T(1,128)}', space=vmem, size = 0x12000, scoped, tag = 'internal scratch']
  %s0 = inlined_call_operand.vmem [shape: f32[2,64,4], index: 0, kind: input, shape index: {}]
  %s1 = inlined_call_operand.vmem [shape: f32[2,64,4], index: 1, kind: input, shape index: {}]
  %s2 = inlined_call_operand.vmem [shape: f32[2,64,8], index: 2, kind: input, shape index: {}]
  %s3 = inlined_call_operand.vmem [shape: f32[2,64,8], index: 3, kind: input, shape index: {}]
  %s4 = inlined_call_operand.vmem [shape: f32[2,64,16], index: 4, kind: input, shape index: {}]
  %s5 = inlined_call_operand.vmem [shape: f32[2,64,16], index: 5, kind: input, shape index: {}]
  %s6 = inlined_call_operand.vmem [shape: f32[2,64,16], index: 6, kind: input, shape index: {}]
  %s7 = inlined_call_operand.vmem [shape: f32[16,64], index: 7, kind: input, shape index: {}]
  %s8 = inlined_call_operand.vmem [shape: f32[16,64], index: 8, kind: input, shape index: {}]
  %s9 = inlined_call_operand.vmem [shape: f32[16,1], index: 9, kind: input, shape index: {}]
  %s10 = inlined_call_operand.vmem [shape: f32[512,16], index: 10, kind: input, shape index: {}]
  %s11 = inlined_call_operand.vmem [shape: f32[32,16], index: 11, kind: input, shape index: {}]
  %s12 = inlined_call_operand.vmem [shape: f32[32,64], index: 12, kind: input, shape index: {}]
  %s13 = inlined_call_operand.vmem [shape: f32[32,64], index: 13, kind: input, shape index: {}]
  %s14 = inlined_call_operand.vmem [shape: f32[32,1], index: 14, kind: input, shape index: {}]
  %s15 = inlined_call_operand.vmem [shape: f32[192,32], index: 15, kind: input, shape index: {}]
  %s16 = inlined_call_operand.vmem [shape: f32[24,16], index: 16, kind: input, shape index: {}]
  %s17 = inlined_call_operand.vmem [shape: f32[64,64], index: 17, kind: input, shape index: {}]
  %s18 = inlined_call_operand.vmem [shape: f32[64,64], index: 18, kind: input, shape index: {}]
  %s19 = inlined_call_operand.vmem [shape: f32[64,64], index: 19, kind: input, shape index: {}]
  %s20 = inlined_call_operand.vmem [shape: f32[64,1], index: 20, kind: input, shape index: {}]
  %s21 = inlined_call_operand.hbm [shape: f32[2,64,16], index: 21, kind: output, shape index: {}]
  %s22 = sld [smem:[#allocation0]]
  $region117: #{fb_forward.1} parent=0
    _
  %s24 = ssub.s32 1, %s22
  %s25 = scalar_select 0, %s24, %s22
  $region1: #{fb_forward.1} parent=0
    #allocation2 [shape = 'u8[65536]{0}', space=vmem, size = 0x10000, scoped, tag = 'output window, operand 0']
    #allocation3 [shape = 's32[2]{0}', space=sflag, size = 0x8, scoped, tag = 'scoped memory for fb_forward.1']
    %26 = vsyncpa [#allocation3], 0
    %s27 = scalar_lea.sflag [#allocation3], 1
    %28 = vsyncpa %s27, 0
    loop: start=0, step=1, limit=4
    $region2: #{fb_forward.1} parent=1 // loop_pre_header
      _
    $region3: #{fb_forward.1} parent=1 // loop_header
      %s30 = sphi 0, %s34
      %p31 = scmp.ge.s32.totalorder %s30, 4
      %s40 = sphi 0, %s42
      %s43 = sphi 0, %s40
      %s44 = sphi 0, %s43
      %s60 = sphi 0, %s44
      %s66 = sphi 0, %s68
      %s69 = sphi 0, %s66
      %s70 = sphi 0, %s69
      %s86 = sphi 0, %s70
      %s92 = sphi 0, %s94
      %s95 = sphi 0, %s92
      %s96 = sphi 0, %s95
      %s112 = sphi 0, %s96
      %s118 = sphi 0, %s120
      %s121 = sphi 0, %s118
      %s122 = sphi 0, %s121
      %s138 = sphi 0, %s122
      %s144 = sphi 0, %s146
      %s147 = sphi 0, %s144
      %s148 = sphi 0, %s147
      %s164 = sphi 0, %s148
      %s170 = sphi 0, %s172
      %s173 = sphi 0, %s170
      %s174 = sphi 0, %s173
      %s190 = sphi 0, %s174
      %s196 = sphi 0, %s198
      %s199 = sphi 0, %s196
      %s200 = sphi 0, %s199
      %s216 = sphi 0, %s200
      %s220 = sphi 0, %s220
      %s222 = sphi 0, %s220
      %s223 = sphi 0, %s222
      %s237 = sphi 0, %s223
      %s241 = sphi 0, %s241
      %s243 = sphi 0, %s241
      %s244 = sphi 0, %s243
      %s258 = sphi 0, %s244
      %s262 = sphi 0, %s262
      %s264 = sphi 0, %s262
      %s265 = sphi 0, %s264
      %s279 = sphi 0, %s265
      %s283 = sphi 0, %s283
      %s285 = sphi 0, %s283
      %s286 = sphi 0, %s285
      %s300 = sphi 0, %s286
      %s304 = sphi 0, %s304
      %s306 = sphi 0, %s304
      %s307 = sphi 0, %s306
      %s321 = sphi 0, %s307
      %s325 = sphi 0, %s325
      %s327 = sphi 0, %s325
      %s328 = sphi 0, %s327
      %s342 = sphi 0, %s328
      %s346 = sphi 0, %s346
      %s348 = sphi 0, %s346
      %s349 = sphi 0, %s348
      %s363 = sphi 0, %s349
      %s367 = sphi 0, %s367
      %s369 = sphi 0, %s367
      %s370 = sphi 0, %s369
      %s384 = sphi 0, %s370
      %s388 = sphi 0, %s388
      %s390 = sphi 0, %s388
      %s391 = sphi 0, %s390
      %s405 = sphi 0, %s391
      %s409 = sphi 0, %s409
      %s411 = sphi 0, %s409
      %s412 = sphi 0, %s411
      %s426 = sphi 0, %s412
      %s430 = sphi 0, %s430
      %s432 = sphi 0, %s430
      %s433 = sphi 0, %s432
      %s447 = sphi 0, %s433
      %s451 = sphi 0, %s451
      %s453 = sphi 0, %s451
      %s454 = sphi 0, %s453
      %s468 = sphi 0, %s454
      %s472 = sphi 0, %s472
      %s474 = sphi 0, %s472
      %s475 = sphi 0, %s474
      %s489 = sphi 0, %s475
      %s493 = sphi 0, %s493
      %s495 = sphi 0, %s493
      %s496 = sphi 0, %s495
      %s510 = sphi 0, %s496
      %s516 = sphi 0, %s518
      %s519 = sphi 0, %s516
      %s520 = sphi 0, %s519
      %s536 = sphi 0, %s520
    $region4: #{fb_forward.1} parent=1 // loop_header_branch
      %33 = sbr.rel (%p31) target = $region8
    $region5: #{fb_forward.1} parent=1 // loop_body
      %s35 = ssub.s32 %s30, 1
      %s36 = ssub.s32 %s30, 2
      %s37 = sadd.s32 %s30, 1
      %s38 = ssub.s32 %s30, %s37
      %p39 = scmp.eq.s32.totalorder %s38, 0
      %s41 = sadd.s32 %s40, 1
      %s42 = scalar_select %p39, %s40, %s41
      %p45 = pneg %p39
      %p46 = scmp.eq.s32.totalorder %s30, 1
      %p47 = por %p45, %p46
      %p48 = scmp.ne.s32.totalorder %s40, %s43
      %p49 = scmp.eq.s32.totalorder %s30, 0
      %p50 = por %p48, %p49
      %p51 = scmp.ne.s32.totalorder %s40, %s43
      %p52 = scmp.eq.s32.totalorder %s35, 1
      %p53 = por %p51, %p52
      %p54 = scmp.ne.s32.totalorder %s43, %s44
      %p55 = scmp.eq.s32.totalorder %s35, 0
      %p56 = por %p54, %p55
      %p57 = scmp.ne.s32.totalorder %s43, %s44
      %p58 = scmp.eq.s32.totalorder %s36, 1
      %p59 = por %p57, %p58
      %p61 = scmp.ne.s32.totalorder %s44, %s60
      %p62 = scmp.eq.s32.totalorder %s36, 0
      %p63 = por %p61, %p62
      %s64 = ssub.s32 %s30, %s37
      %p65 = scmp.eq.s32.totalorder %s64, 0
      %s67 = sadd.s32 %s66, 1
      %s68 = scalar_select %p65, %s66, %s67
      %p71 = pneg %p65
      %p72 = scmp.eq.s32.totalorder %s30, 1
      %p73 = por %p71, %p72
      %p74 = scmp.ne.s32.totalorder %s66, %s69
      %p75 = scmp.eq.s32.totalorder %s30, 0
      %p76 = por %p74, %p75
      %p77 = scmp.ne.s32.totalorder %s66, %s69
      %p78 = scmp.eq.s32.totalorder %s35, 1
      %p79 = por %p77, %p78
      %p80 = scmp.ne.s32.totalorder %s69, %s70
      %p81 = scmp.eq.s32.totalorder %s35, 0
      %p82 = por %p80, %p81
      %p83 = scmp.ne.s32.totalorder %s69, %s70
      %p84 = scmp.eq.s32.totalorder %s36, 1
      %p85 = por %p83, %p84
      %p87 = scmp.ne.s32.totalorder %s70, %s86
      %p88 = scmp.eq.s32.totalorder %s36, 0
      %p89 = por %p87, %p88
      %s90 = ssub.s32 %s30, %s37
      %p91 = scmp.eq.s32.totalorder %s90, 0
      %s93 = sadd.s32 %s92, 1
      %s94 = scalar_select %p91, %s92, %s93
      %p97 = pneg %p91
      %p98 = scmp.eq.s32.totalorder %s30, 1
      %p99 = por %p97, %p98
      %p100 = scmp.ne.s32.totalorder %s92, %s95
      %p101 = scmp.eq.s32.totalorder %s30, 0
      %p102 = por %p100, %p101
      %p103 = scmp.ne.s32.totalorder %s92, %s95
      %p104 = scmp.eq.s32.totalorder %s35, 1
      %p105 = por %p103, %p104
      %p106 = scmp.ne.s32.totalorder %s95, %s96
      %p107 = scmp.eq.s32.totalorder %s35, 0
      %p108 = por %p106, %p107
      %p109 = scmp.ne.s32.totalorder %s95, %s96
      %p110 = scmp.eq.s32.totalorder %s36, 1
      %p111 = por %p109, %p110
      %p113 = scmp.ne.s32.totalorder %s96, %s112
      %p114 = scmp.eq.s32.totalorder %s36, 0
      %p115 = por %p113, %p114
      %s116 = ssub.s32 %s30, %s37
      %p117 = scmp.eq.s32.totalorder %s116, 0
      %s119 = sadd.s32 %s118, 1
      %s120 = scalar_select %p117, %s118, %s119
      %p123 = pneg %p117
      %p124 = scmp.eq.s32.totalorder %s30, 1
      %p125 = por %p123, %p124
      %p126 = scmp.ne.s32.totalorder %s118, %s121
      %p127 = scmp.eq.s32.totalorder %s30, 0
      %p128 = por %p126, %p127
      %p129 = scmp.ne.s32.totalorder %s118, %s121
      %p130 = scmp.eq.s32.totalorder %s35, 1
      %p131 = por %p129, %p130
      %p132 = scmp.ne.s32.totalorder %s121, %s122
      %p133 = scmp.eq.s32.totalorder %s35, 0
      %p134 = por %p132, %p133
      %p135 = scmp.ne.s32.totalorder %s121, %s122
      %p136 = scmp.eq.s32.totalorder %s36, 1
      %p137 = por %p135, %p136
      %p139 = scmp.ne.s32.totalorder %s122, %s138
      %p140 = scmp.eq.s32.totalorder %s36, 0
      %p141 = por %p139, %p140
      %s142 = ssub.s32 %s30, %s37
      %p143 = scmp.eq.s32.totalorder %s142, 0
      %s145 = sadd.s32 %s144, 1
      %s146 = scalar_select %p143, %s144, %s145
      %p149 = pneg %p143
      %p150 = scmp.eq.s32.totalorder %s30, 1
      %p151 = por %p149, %p150
      %p152 = scmp.ne.s32.totalorder %s144, %s147
      %p153 = scmp.eq.s32.totalorder %s30, 0
      %p154 = por %p152, %p153
      %p155 = scmp.ne.s32.totalorder %s144, %s147
      %p156 = scmp.eq.s32.totalorder %s35, 1
      %p157 = por %p155, %p156
      %p158 = scmp.ne.s32.totalorder %s147, %s148
      %p159 = scmp.eq.s32.totalorder %s35, 0
      %p160 = por %p158, %p159
      %p161 = scmp.ne.s32.totalorder %s147, %s148
      %p162 = scmp.eq.s32.totalorder %s36, 1
      %p163 = por %p161, %p162
      %p165 = scmp.ne.s32.totalorder %s148, %s164
      %p166 = scmp.eq.s32.totalorder %s36, 0
      %p167 = por %p165, %p166
      %s168 = ssub.s32 %s30, %s37
      %p169 = scmp.eq.s32.totalorder %s168, 0
      %s171 = sadd.s32 %s170, 1
      %s172 = scalar_select %p169, %s170, %s171
      %p175 = pneg %p169
      %p176 = scmp.eq.s32.totalorder %s30, 1
      %p177 = por %p175, %p176
      %p178 = scmp.ne.s32.totalorder %s170, %s173
      %p179 = scmp.eq.s32.totalorder %s30, 0
      %p180 = por %p178, %p179
      %p181 = scmp.ne.s32.totalorder %s170, %s173
      %p182 = scmp.eq.s32.totalorder %s35, 1
      %p183 = por %p181, %p182
      %p184 = scmp.ne.s32.totalorder %s173, %s174
      %p185 = scmp.eq.s32.totalorder %s35, 0
      %p186 = por %p184, %p185
      %p187 = scmp.ne.s32.totalorder %s173, %s174
      %p188 = scmp.eq.s32.totalorder %s36, 1
      %p189 = por %p187, %p188
      %p191 = scmp.ne.s32.totalorder %s174, %s190
      %p192 = scmp.eq.s32.totalorder %s36, 0
      %p193 = por %p191, %p192
      %s194 = ssub.s32 %s30, %s37
      %p195 = scmp.eq.s32.totalorder %s194, 0
      %s197 = sadd.s32 %s196, 1
      %s198 = scalar_select %p195, %s196, %s197
      %p201 = pneg %p195
      %p202 = scmp.eq.s32.totalorder %s30, 1
      %p203 = por %p201, %p202
      %p204 = scmp.ne.s32.totalorder %s196, %s199
      %p205 = scmp.eq.s32.totalorder %s30, 0
      %p206 = por %p204, %p205
      %p207 = scmp.ne.s32.totalorder %s196, %s199
      %p208 = scmp.eq.s32.totalorder %s35, 1
      %p209 = por %p207, %p208
      %p210 = scmp.ne.s32.totalorder %s199, %s200
      %p211 = scmp.eq.s32.totalorder %s35, 0
      %p212 = por %p210, %p211
      %p213 = scmp.ne.s32.totalorder %s199, %s200
      %p214 = scmp.eq.s32.totalorder %s36, 1
      %p215 = por %p213, %p214
      %p217 = scmp.ne.s32.totalorder %s200, %s216
      %p218 = scmp.eq.s32.totalorder %s36, 0
      %p219 = por %p217, %p218
      %s221 = sadd.s32 %s220, 1
      %p224 = scmp.eq.s32.totalorder %s30, 1
      %p225 = scmp.ne.s32.totalorder %s220, %s222
      %p226 = scmp.eq.s32.totalorder %s30, 0
      %p227 = por %p225, %p226
      %p228 = scmp.ne.s32.totalorder %s220, %s222
      %p229 = scmp.eq.s32.totalorder %s35, 1
      %p230 = por %p228, %p229
      %p231 = scmp.ne.s32.totalorder %s222, %s223
      %p232 = scmp.eq.s32.totalorder %s35, 0
      %p233 = por %p231, %p232
      %p234 = scmp.ne.s32.totalorder %s222, %s223
      %p235 = scmp.eq.s32.totalorder %s36, 1
      %p236 = por %p234, %p235
      %p238 = scmp.ne.s32.totalorder %s223, %s237
      %p239 = scmp.eq.s32.totalorder %s36, 0
      %p240 = por %p238, %p239
      %s242 = sadd.s32 %s241, 1
      %p245 = scmp.eq.s32.totalorder %s30, 1
      %p246 = scmp.ne.s32.totalorder %s241, %s243
      %p247 = scmp.eq.s32.totalorder %s30, 0
      %p248 = por %p246, %p247
      %p249 = scmp.ne.s32.totalorder %s241, %s243
      %p250 = scmp.eq.s32.totalorder %s35, 1
      %p251 = por %p249, %p250
      %p252 = scmp.ne.s32.totalorder %s243, %s244
      %p253 = scmp.eq.s32.totalorder %s35, 0
      %p254 = por %p252, %p253
      %p255 = scmp.ne.s32.totalorder %s243, %s244
      %p256 = scmp.eq.s32.totalorder %s36, 1
      %p257 = por %p255, %p256
      %p259 = scmp.ne.s32.totalorder %s244, %s258
      %p260 = scmp.eq.s32.totalorder %s36, 0
      %p261 = por %p259, %p260
      %s263 = sadd.s32 %s262, 1
      %p266 = scmp.eq.s32.totalorder %s30, 1
      %p267 = scmp.ne.s32.totalorder %s262, %s264
      %p268 = scmp.eq.s32.totalorder %s30, 0
      %p269 = por %p267, %p268
      %p270 = scmp.ne.s32.totalorder %s262, %s264
      %p271 = scmp.eq.s32.totalorder %s35, 1
      %p272 = por %p270, %p271
      %p273 = scmp.ne.s32.totalorder %s264, %s265
      %p274 = scmp.eq.s32.totalorder %s35, 0
      %p275 = por %p273, %p274
      %p276 = scmp.ne.s32.totalorder %s264, %s265
      %p277 = scmp.eq.s32.totalorder %s36, 1
      %p278 = por %p276, %p277
      %p280 = scmp.ne.s32.totalorder %s265, %s279
      %p281 = scmp.eq.s32.totalorder %s36, 0
      %p282 = por %p280, %p281
      %s284 = sadd.s32 %s283, 1
      %p287 = scmp.eq.s32.totalorder %s30, 1
      %p288 = scmp.ne.s32.totalorder %s283, %s285
      %p289 = scmp.eq.s32.totalorder %s30, 0
      %p290 = por %p288, %p289
      %p291 = scmp.ne.s32.totalorder %s283, %s285
      %p292 = scmp.eq.s32.totalorder %s35, 1
      %p293 = por %p291, %p292
      %p294 = scmp.ne.s32.totalorder %s285, %s286
      %p295 = scmp.eq.s32.totalorder %s35, 0
      %p296 = por %p294, %p295
      %p297 = scmp.ne.s32.totalorder %s285, %s286
      %p298 = scmp.eq.s32.totalorder %s36, 1
      %p299 = por %p297, %p298
      %p301 = scmp.ne.s32.totalorder %s286, %s300
      %p302 = scmp.eq.s32.totalorder %s36, 0
      %p303 = por %p301, %p302
      %s305 = sadd.s32 %s304, 1
      %p308 = scmp.eq.s32.totalorder %s30, 1
      %p309 = scmp.ne.s32.totalorder %s304, %s306
      %p310 = scmp.eq.s32.totalorder %s30, 0
      %p311 = por %p309, %p310
      %p312 = scmp.ne.s32.totalorder %s304, %s306
      %p313 = scmp.eq.s32.totalorder %s35, 1
      %p314 = por %p312, %p313
      %p315 = scmp.ne.s32.totalorder %s306, %s307
      %p316 = scmp.eq.s32.totalorder %s35, 0
      %p317 = por %p315, %p316
      %p318 = scmp.ne.s32.totalorder %s306, %s307
      %p319 = scmp.eq.s32.totalorder %s36, 1
      %p320 = por %p318, %p319
      %p322 = scmp.ne.s32.totalorder %s307, %s321
      %p323 = scmp.eq.s32.totalorder %s36, 0
      %p324 = por %p322, %p323
      %s326 = sadd.s32 %s325, 1
      %p329 = scmp.eq.s32.totalorder %s30, 1
      %p330 = scmp.ne.s32.totalorder %s325, %s327
      %p331 = scmp.eq.s32.totalorder %s30, 0
      %p332 = por %p330, %p331
      %p333 = scmp.ne.s32.totalorder %s325, %s327
      %p334 = scmp.eq.s32.totalorder %s35, 1
      %p335 = por %p333, %p334
      %p336 = scmp.ne.s32.totalorder %s327, %s328
      %p337 = scmp.eq.s32.totalorder %s35, 0
      %p338 = por %p336, %p337
      %p339 = scmp.ne.s32.totalorder %s327, %s328
      %p340 = scmp.eq.s32.totalorder %s36, 1
      %p341 = por %p339, %p340
      %p343 = scmp.ne.s32.totalorder %s328, %s342
      %p344 = scmp.eq.s32.totalorder %s36, 0
      %p345 = por %p343, %p344
      %s347 = sadd.s32 %s346, 1
      %p350 = scmp.eq.s32.totalorder %s30, 1
      %p351 = scmp.ne.s32.totalorder %s346, %s348
      %p352 = scmp.eq.s32.totalorder %s30, 0
      %p353 = por %p351, %p352
      %p354 = scmp.ne.s32.totalorder %s346, %s348
      %p355 = scmp.eq.s32.totalorder %s35, 1
      %p356 = por %p354, %p355
      %p357 = scmp.ne.s32.totalorder %s348, %s349
      %p358 = scmp.eq.s32.totalorder %s35, 0
      %p359 = por %p357, %p358
      %p360 = scmp.ne.s32.totalorder %s348, %s349
      %p361 = scmp.eq.s32.totalorder %s36, 1
      %p362 = por %p360, %p361
      %p364 = scmp.ne.s32.totalorder %s349, %s363
      %p365 = scmp.eq.s32.totalorder %s36, 0
      %p366 = por %p364, %p365
      %s368 = sadd.s32 %s367, 1
      %p371 = scmp.eq.s32.totalorder %s30, 1
      %p372 = scmp.ne.s32.totalorder %s367, %s369
      %p373 = scmp.eq.s32.totalorder %s30, 0
      %p374 = por %p372, %p373
      %p375 = scmp.ne.s32.totalorder %s367, %s369
      %p376 = scmp.eq.s32.totalorder %s35, 1
      %p377 = por %p375, %p376
      %p378 = scmp.ne.s32.totalorder %s369, %s370
      %p379 = scmp.eq.s32.totalorder %s35, 0
      %p380 = por %p378, %p379
      %p381 = scmp.ne.s32.totalorder %s369, %s370
      %p382 = scmp.eq.s32.totalorder %s36, 1
      %p383 = por %p381, %p382
      %p385 = scmp.ne.s32.totalorder %s370, %s384
      %p386 = scmp.eq.s32.totalorder %s36, 0
      %p387 = por %p385, %p386
      %s389 = sadd.s32 %s388, 1
      %p392 = scmp.eq.s32.totalorder %s30, 1
      %p393 = scmp.ne.s32.totalorder %s388, %s390
      %p394 = scmp.eq.s32.totalorder %s30, 0
      %p395 = por %p393, %p394
      %p396 = scmp.ne.s32.totalorder %s388, %s390
      %p397 = scmp.eq.s32.totalorder %s35, 1
      %p398 = por %p396, %p397
      %p399 = scmp.ne.s32.totalorder %s390, %s391
      %p400 = scmp.eq.s32.totalorder %s35, 0
      %p401 = por %p399, %p400
      %p402 = scmp.ne.s32.totalorder %s390, %s391
      %p403 = scmp.eq.s32.totalorder %s36, 1
      %p404 = por %p402, %p403
      %p406 = scmp.ne.s32.totalorder %s391, %s405
      %p407 = scmp.eq.s32.totalorder %s36, 0
      %p408 = por %p406, %p407
      %s410 = sadd.s32 %s409, 1
      %p413 = scmp.eq.s32.totalorder %s30, 1
      %p414 = scmp.ne.s32.totalorder %s409, %s411
      %p415 = scmp.eq.s32.totalorder %s30, 0
      %p416 = por %p414, %p415
      %p417 = scmp.ne.s32.totalorder %s409, %s411
      %p418 = scmp.eq.s32.totalorder %s35, 1
      %p419 = por %p417, %p418
      %p420 = scmp.ne.s32.totalorder %s411, %s412
      %p421 = scmp.eq.s32.totalorder %s35, 0
      %p422 = por %p420, %p421
      %p423 = scmp.ne.s32.totalorder %s411, %s412
      %p424 = scmp.eq.s32.totalorder %s36, 1
      %p425 = por %p423, %p424
      %p427 = scmp.ne.s32.totalorder %s412, %s426
      %p428 = scmp.eq.s32.totalorder %s36, 0
      %p429 = por %p427, %p428
      %s431 = sadd.s32 %s430, 1
      %p434 = scmp.eq.s32.totalorder %s30, 1
      %p435 = scmp.ne.s32.totalorder %s430, %s432
      %p436 = scmp.eq.s32.totalorder %s30, 0
      %p437 = por %p435, %p436
      %p438 = scmp.ne.s32.totalorder %s430, %s432
      %p439 = scmp.eq.s32.totalorder %s35, 1
      %p440 = por %p438, %p439
      %p441 = scmp.ne.s32.totalorder %s432, %s433
      %p442 = scmp.eq.s32.totalorder %s35, 0
      %p443 = por %p441, %p442
      %p444 = scmp.ne.s32.totalorder %s432, %s433
      %p445 = scmp.eq.s32.totalorder %s36, 1
      %p446 = por %p444, %p445
      %p448 = scmp.ne.s32.totalorder %s433, %s447
      %p449 = scmp.eq.s32.totalorder %s36, 0
      %p450 = por %p448, %p449
      %s452 = sadd.s32 %s451, 1
      %p455 = scmp.eq.s32.totalorder %s30, 1
      %p456 = scmp.ne.s32.totalorder %s451, %s453
      %p457 = scmp.eq.s32.totalorder %s30, 0
      %p458 = por %p456, %p457
      %p459 = scmp.ne.s32.totalorder %s451, %s453
      %p460 = scmp.eq.s32.totalorder %s35, 1
      %p461 = por %p459, %p460
      %p462 = scmp.ne.s32.totalorder %s453, %s454
      %p463 = scmp.eq.s32.totalorder %s35, 0
      %p464 = por %p462, %p463
      %p465 = scmp.ne.s32.totalorder %s453, %s454
      %p466 = scmp.eq.s32.totalorder %s36, 1
      %p467 = por %p465, %p466
      %p469 = scmp.ne.s32.totalorder %s454, %s468
      %p470 = scmp.eq.s32.totalorder %s36, 0
      %p471 = por %p469, %p470
      %s473 = sadd.s32 %s472, 1
      %p476 = scmp.eq.s32.totalorder %s30, 1
      %p477 = scmp.ne.s32.totalorder %s472, %s474
      %p478 = scmp.eq.s32.totalorder %s30, 0
      %p479 = por %p477, %p478
      %p480 = scmp.ne.s32.totalorder %s472, %s474
      %p481 = scmp.eq.s32.totalorder %s35, 1
      %p482 = por %p480, %p481
      %p483 = scmp.ne.s32.totalorder %s474, %s475
      %p484 = scmp.eq.s32.totalorder %s35, 0
      %p485 = por %p483, %p484
      %p486 = scmp.ne.s32.totalorder %s474, %s475
      %p487 = scmp.eq.s32.totalorder %s36, 1
      %p488 = por %p486, %p487
      %p490 = scmp.ne.s32.totalorder %s475, %s489
      %p491 = scmp.eq.s32.totalorder %s36, 0
      %p492 = por %p490, %p491
      %s494 = sadd.s32 %s493, 1
      %p497 = scmp.eq.s32.totalorder %s30, 1
      %p498 = scmp.ne.s32.totalorder %s493, %s495
      %p499 = scmp.eq.s32.totalorder %s30, 0
      %p500 = por %p498, %p499
      %p501 = scmp.ne.s32.totalorder %s493, %s495
      %p502 = scmp.eq.s32.totalorder %s35, 1
      %p503 = por %p501, %p502
      %p504 = scmp.ne.s32.totalorder %s495, %s496
      %p505 = scmp.eq.s32.totalorder %s35, 0
      %p506 = por %p504, %p505
      %p507 = scmp.ne.s32.totalorder %s495, %s496
      %p508 = scmp.eq.s32.totalorder %s36, 1
      %p509 = por %p507, %p508
      %p511 = scmp.ne.s32.totalorder %s496, %s510
      %p512 = scmp.eq.s32.totalorder %s36, 0
      %p513 = por %p511, %p512
      %s514 = ssub.s32 %s30, %s37
      %p515 = scmp.eq.s32.totalorder %s514, 0
      %s517 = sadd.s32 %s516, 1
      %s518 = scalar_select %p515, %s516, %s517
      %p521 = pneg %p515
      %p522 = scmp.eq.s32.totalorder %s30, 1
      %p523 = por %p521, %p522
      %p524 = scmp.ne.s32.totalorder %s516, %s519
      %p525 = scmp.eq.s32.totalorder %s30, 0
      %p526 = por %p524, %p525
      %p527 = scmp.ne.s32.totalorder %s516, %s519
      %p528 = scmp.eq.s32.totalorder %s35, 1
      %p529 = por %p527, %p528
      %p530 = scmp.ne.s32.totalorder %s519, %s520
      %p531 = scmp.eq.s32.totalorder %s35, 0
      %p532 = por %p530, %p531
      %p533 = scmp.ne.s32.totalorder %s519, %s520
      %p534 = scmp.eq.s32.totalorder %s36, 1
      %p535 = por %p533, %p534
      %p537 = scmp.ne.s32.totalorder %s520, %s536
      %p538 = scmp.eq.s32.totalorder %s36, 0
      %p539 = por %p537, %p538
      %p540 = scmp.le.s32.totalorder 1, %s30
      %p541 = scmp.lt.s32.totalorder %s30, 3
      %p542 = pnand %p540, %p541
      %p543 = pneg %p542
      // Predicated region
      $region9: #{fb_forward.1} parent=5 // pred_check
        _
      $region10: #{fb_forward.1} parent=5 // pred_check_branch
        %545 = sbr.rel (%p542) target = $region12
      $region11: #{fb_forward.1} parent=5 // pred_region
        %s546 = ssub.s32 %s30, 1
        // Predicated region
        $region13: #{fb_forward.1} parent=11 // pred_check
          %p547 = pneg %p233
        $region14: #{fb_forward.1} parent=11 // pred_check_branch
          %549 = sbr.rel (%p547) target = $region16
        $region15: #{fb_forward.1} parent=11 // pred_region
          _
        $region16: #{fb_forward.1} parent=11 // pred_fallthru
          _
        // Predicated region
        $region17: #{fb_forward.1} parent=11 // pred_check
          %p550 = pneg %p254
        $region18: #{fb_forward.1} parent=11 // pred_check_branch
          %552 = sbr.rel (%p550) target = $region20
        $region19: #{fb_forward.1} parent=11 // pred_region
          _
        $region20: #{fb_forward.1} parent=11 // pred_fallthru
          _
        // Predicated region
        $region21: #{fb_forward.1} parent=11 // pred_check
          %p553 = pneg %p275
        $region22: #{fb_forward.1} parent=11 // pred_check_branch
          %555 = sbr.rel (%p553) target = $region24
        $region23: #{fb_forward.1} parent=11 // pred_region
          _
        $region24: #{fb_forward.1} parent=11 // pred_fallthru
          _
        // Predicated region
        $region25: #{fb_forward.1} parent=11 // pred_check
          %p556 = pneg %p296
        $region26: #{fb_forward.1} parent=11 // pred_check_branch
          %558 = sbr.rel (%p556) target = $region28
        $region27: #{fb_forward.1} parent=11 // pred_region
          _
        $region28: #{fb_forward.1} parent=11 // pred_fallthru
          _
        // Predicated region
        $region29: #{fb_forward.1} parent=11 // pred_check
          %p559 = pneg %p317
        $region30: #{fb_forward.1} parent=11 // pred_check_branch
          %561 = sbr.rel (%p559) target = $region32
        $region31: #{fb_forward.1} parent=11 // pred_region
          _
        $region32: #{fb_forward.1} parent=11 // pred_fallthru
          _
        // Predicated region
        $region33: #{fb_forward.1} parent=11 // pred_check
          %p562 = pneg %p338
        $region34: #{fb_forward.1} parent=11 // pred_check_branch
          %564 = sbr.rel (%p562) target = $region36
        $region35: #{fb_forward.1} parent=11 // pred_region
          _
        $region36: #{fb_forward.1} parent=11 // pred_fallthru
          _
        // Predicated region
        $region37: #{fb_forward.1} parent=11 // pred_check
          %p565 = pneg %p359
        $region38: #{fb_forward.1} parent=11 // pred_check_branch
          %567 = sbr.rel (%p565) target = $region40
        $region39: #{fb_forward.1} parent=11 // pred_region
          _
        $region40: #{fb_forward.1} parent=11 // pred_fallthru
          _
        // Predicated region
        $region41: #{fb_forward.1} parent=11 // pred_check
          %p568 = pneg %p380
        $region42: #{fb_forward.1} parent=11 // pred_check_branch
          %570 = sbr.rel (%p568) target = $region44
        $region43: #{fb_forward.1} parent=11 // pred_region
          _
        $region44: #{fb_forward.1} parent=11 // pred_fallthru
          _
        // Predicated region
        $region45: #{fb_forward.1} parent=11 // pred_check
          %p571 = pneg %p401
        $region46: #{fb_forward.1} parent=11 // pred_check_branch
          %573 = sbr.rel (%p571) target = $region48
        $region47: #{fb_forward.1} parent=11 // pred_region
          _
        $region48: #{fb_forward.1} parent=11 // pred_fallthru
          _
        // Predicated region
        $region49: #{fb_forward.1} parent=11 // pred_check
          %p574 = pneg %p422
        $region50: #{fb_forward.1} parent=11 // pred_check_branch
          %576 = sbr.rel (%p574) target = $region52
        $region51: #{fb_forward.1} parent=11 // pred_region
          _
        $region52: #{fb_forward.1} parent=11 // pred_fallthru
          _
        // Predicated region
        $region53: #{fb_forward.1} parent=11 // pred_check
          %p577 = pneg %p443
        $region54: #{fb_forward.1} parent=11 // pred_check_branch
          %579 = sbr.rel (%p577) target = $region56
        $region55: #{fb_forward.1} parent=11 // pred_region
          _
        $region56: #{fb_forward.1} parent=11 // pred_fallthru
          _
        // Predicated region
        $region57: #{fb_forward.1} parent=11 // pred_check
          %p580 = pneg %p464
        $region58: #{fb_forward.1} parent=11 // pred_check_branch
          %582 = sbr.rel (%p580) target = $region60
        $region59: #{fb_forward.1} parent=11 // pred_region
          _
        $region60: #{fb_forward.1} parent=11 // pred_fallthru
          _
        // Predicated region
        $region61: #{fb_forward.1} parent=11 // pred_check
          %p583 = pneg %p485
        $region62: #{fb_forward.1} parent=11 // pred_check_branch
          %585 = sbr.rel (%p583) target = $region64
        $region63: #{fb_forward.1} parent=11 // pred_region
          _
        $region64: #{fb_forward.1} parent=11 // pred_fallthru
          _
        // Predicated region
        $region65: #{fb_forward.1} parent=11 // pred_check
          %p586 = pneg %p506
        $region66: #{fb_forward.1} parent=11 // pred_check_branch
          %588 = sbr.rel (%p586) target = $region68
        $region67: #{fb_forward.1} parent=11 // pred_region
          _
        $region68: #{fb_forward.1} parent=11 // pred_fallthru
          _
      $region12: #{fb_forward.1} parent=5 // pred_fallthru
        _
      %p589 = scmp.lt.s32.totalorder %s30, 2
      // Predicated region
      $region69: #{fb_forward.1} parent=5 // pred_check
        %p590 = pneg %p589
      $region70: #{fb_forward.1} parent=5 // pred_check_branch
        %592 = sbr.rel (%p590) target = $region72
      $region71: #{fb_forward.1} parent=5 // pred_region
        // Predicated region
        $region73: #{fb_forward.1} parent=71 // pred_check
          %p593 = pneg %p50
        $region74: #{fb_forward.1} parent=71 // pred_check_branch
          %595 = sbr.rel (%p593) target = $region76
        $region75: #{fb_forward.1} parent=71 // pred_region
          %p596 = scmp.lt.s32.totalorder %s30, 1
          %s597 = scalar_select %p596, %s30, 1
          %s598 = smul.addr %s597, 8
          %s599 = smul.addr %s598, 8
          %s600 = scalar_lea.vmem %s0, %s599
        $region76: #{fb_forward.1} parent=71 // pred_fallthru
          _
        // Predicated region
        $region77: #{fb_forward.1} parent=71 // pred_check
          %p601 = pneg %p76
        $region78: #{fb_forward.1} parent=71 // pred_check_branch
          %603 = sbr.rel (%p601) target = $region80
        $region79: #{fb_forward.1} parent=71 // pred_region
          %p604 = scmp.lt.s32.totalorder %s30, 1
          %s605 = scalar_select %p604, %s30, 1
          %s606 = smul.addr %s605, 8
          %s607 = smul.addr %s606, 8
          %s608 = scalar_lea.vmem %s1, %s607
        $region80: #{fb_forward.1} parent=71 // pred_fallthru
          _
        // Predicated region
        $region81: #{fb_forward.1} parent=71 // pred_check
          %p609 = pneg %p102
        $region82: #{fb_forward.1} parent=71 // pred_check_branch
          %611 = sbr.rel (%p609) target = $region84
        $region83: #{fb_forward.1} parent=71 // pred_region
          %p612 = scmp.lt.s32.totalorder %s30, 1
          %s613 = scalar_select %p612, %s30, 1
          %s614 = smul.addr %s613, 8
          %s615 = smul.addr %s614, 8
          %s616 = scalar_lea.vmem %s2, %s615
        $region84: #{fb_forward.1} parent=71 // pred_fallthru
          _
        // Predicated region
        $region85: #{fb_forward.1} parent=71 // pred_check
          %p617 = pneg %p128
        $region86: #{fb_forward.1} parent=71 // pred_check_branch
          %619 = sbr.rel (%p617) target = $region88
        $region87: #{fb_forward.1} parent=71 // pred_region
          %p620 = scmp.lt.s32.totalorder %s30, 1
          %s621 = scalar_select %p620, %s30, 1
          %s622 = smul.addr %s621, 8
          %s623 = smul.addr %s622, 8
          %s624 = scalar_lea.vmem %s3, %s623
        $region88: #{fb_forward.1} parent=71 // pred_fallthru
          _
        // Predicated region
        $region89: #{fb_forward.1} parent=71 // pred_check
          %p625 = pneg %p154
        $region90: #{fb_forward.1} parent=71 // pred_check_branch
          %627 = sbr.rel (%p625) target = $region92
        $region91: #{fb_forward.1} parent=71 // pred_region
          %p628 = scmp.lt.s32.totalorder %s30, 1
          %s629 = scalar_select %p628, %s30, 1
          %s630 = smul.addr %s629, 8
          %s631 = smul.addr %s630, 8
          %s632 = scalar_lea.vmem %s4, %s631
        $region92: #{fb_forward.1} parent=71 // pred_fallthru
          _
        // Predicated region
        $region93: #{fb_forward.1} parent=71 // pred_check
          %p633 = pneg %p180
        $region94: #{fb_forward.1} parent=71 // pred_check_branch
          %635 = sbr.rel (%p633) target = $region96
        $region95: #{fb_forward.1} parent=71 // pred_region
          %p636 = scmp.lt.s32.totalorder %s30, 1
          %s637 = scalar_select %p636, %s30, 1
          %s638 = smul.addr %s637, 8
          %s639 = smul.addr %s638, 8
          %s640 = scalar_lea.vmem %s5, %s639
        $region96: #{fb_forward.1} parent=71 // pred_fallthru
          _
        // Predicated region
        $region97: #{fb_forward.1} parent=71 // pred_check
          %p641 = pneg %p206
        $region98: #{fb_forward.1} parent=71 // pred_check_branch
          %643 = sbr.rel (%p641) target = $region100
        $region99: #{fb_forward.1} parent=71 // pred_region
          %p644 = scmp.lt.s32.totalorder %s30, 1
          %s645 = scalar_select %p644, %s30, 1
          %s646 = smul.addr %s645, 8
          %s647 = smul.addr %s646, 8
          %s648 = scalar_lea.vmem %s6, %s647
        $region100: #{fb_forward.1} parent=71 // pred_fallthru
          _
      $region72: #{fb_forward.1} parent=5 // pred_fallthru
        _
      %p649 = scmp.le.s32.totalorder 1, %s30
      %p650 = scmp.lt.s32.totalorder %s30, 3
      %p651 = pnand %p649, %p650
      %p652 = pneg %p651
      // Predicated region
      $region101: #{fb_forward.1} parent=5 // pred_check
        _
      $region102: #{fb_forward.1} parent=5 // pred_check_branch
        %654 = sbr.rel (%p651) target = $region104
      $region103: #{fb_forward.1} parent=5 // pred_region
        %s655 = ssub.s32 %s30, 1
        %p656 = scmp.lt.s32.totalorder %s35, 1
        %s657 = scalar_select %p656, %s35, 1
        %s658 = smul.addr %s657, 8
        %s659 = smul.addr %s658, 8
        %s660 = scalar_lea.vmem %s0, %s659
        %p661 = pneg %p56
        %p662 = pneg %p53
        %p663 = scmp.lt.s32.totalorder %s35, 1
        %s664 = scalar_select %p663, %s35, 1
        %s665 = smul.addr %s664, 8
        %s666 = smul.addr %s665, 8
        %s667 = scalar_lea.vmem %s1, %s666
        %p668 = pneg %p82
        %p669 = pneg %p79
        %p670 = scmp.lt.s32.totalorder %s35, 1
        %s671 = scalar_select %p670, %s35, 1
        %s672 = smul.addr %s671, 8
        %s673 = smul.addr %s672, 8
        %s674 = scalar_lea.vmem %s2, %s673
        %p675 = pneg %p108
        %p676 = pneg %p105
        %p677 = scmp.lt.s32.totalorder %s35, 1
        %s678 = scalar_select %p677, %s35, 1
        %s679 = smul.addr %s678, 8
        %s680 = smul.addr %s679, 8
        %s681 = scalar_lea.vmem %s3, %s680
        %p682 = pneg %p134
        %p683 = pneg %p131
        %p684 = scmp.lt.s32.totalorder %s35, 1
        %s685 = scalar_select %p684, %s35, 1
        %s686 = smul.addr %s685, 8
        %s687 = smul.addr %s686, 8
        %s688 = scalar_lea.vmem %s4, %s687
        %p689 = pneg %p160
        %p690 = pneg %p157
        %p691 = scmp.lt.s32.totalorder %s35, 1
        %s692 = scalar_select %p691, %s35, 1
        %s693 = smul.addr %s692, 8
        %s694 = smul.addr %s693, 8
        %s695 = scalar_lea.vmem %s5, %s694
        %p696 = pneg %p186
        %p697 = pneg %p183
        %p698 = scmp.lt.s32.totalorder %s35, 1
        %s699 = scalar_select %p698, %s35, 1
        %s700 = smul.addr %s699, 8
        %s701 = smul.addr %s700, 8
        %s702 = scalar_lea.vmem %s6, %s701
        %p703 = pneg %p212
        %p704 = pneg %p209
        %p705 = pneg %p233
        %p706 = pneg %p230
        %p707 = pneg %p254
        %p708 = pneg %p251
        %p709 = pneg %p275
        %p710 = pneg %p272
        %p711 = pneg %p296
        %p712 = pneg %p293
        %p713 = pneg %p317
        %p714 = pneg %p314
        %p715 = pneg %p338
        %p716 = pneg %p335
        %p717 = pneg %p359
        %p718 = pneg %p356
        %p719 = pneg %p380
        %p720 = pneg %p377
        %p721 = pneg %p401
        %p722 = pneg %p398
        %p723 = pneg %p422
        %p724 = pneg %p419
        %p725 = pneg %p443
        %p726 = pneg %p440
        %p727 = pneg %p464
        %p728 = pneg %p461
        %p729 = pneg %p485
        %p730 = pneg %p482
        %p731 = pneg %p506
        %p732 = pneg %p503
        %p733 = pneg %p532
        %p734 = pneg %p529
        %s735 = sand.u32 %s519, 1
        %s736 = scalar_lea.sflag [#allocation3], %s735
        %s737 = sand.u32 %s519, 1
        %s738 = smul.addr %s737, 64
        %s739 = scalar_lea.vmem [#allocation2], %s738
        %p740 = scmp.lt.s32.totalorder %s35, 1
        %s741 = scalar_select %p740, %s35, 1
        %s742 = smul.addr %s741, 8
        %s743 = smul.addr %s742, 8
        %s744 = scalar_lea.vmem %s0, %s743
        %p745 = scmp.lt.s32.totalorder %s35, 1
        %s746 = scalar_select %p745, %s35, 1
        %s747 = smul.addr %s746, 8
        %s748 = smul.addr %s747, 8
        %s749 = scalar_lea.vmem %s1, %s748
        %p750 = scmp.lt.s32.totalorder %s35, 1
        %s751 = scalar_select %p750, %s35, 1
        %s752 = smul.addr %s751, 8
        %s753 = smul.addr %s752, 8
        %s754 = scalar_lea.vmem %s2, %s753
        %p755 = scmp.lt.s32.totalorder %s35, 1
        %s756 = scalar_select %p755, %s35, 1
        %s757 = smul.addr %s756, 8
        %s758 = smul.addr %s757, 8
        %s759 = scalar_lea.vmem %s3, %s758
        %p760 = scmp.lt.s32.totalorder %s35, 1
        %s761 = scalar_select %p760, %s35, 1
        %s762 = smul.addr %s761, 8
        %s763 = smul.addr %s762, 8
        %s764 = scalar_lea.vmem %s4, %s763
        %p765 = scmp.lt.s32.totalorder %s35, 1
        %s766 = scalar_select %p765, %s35, 1
        %s767 = smul.addr %s766, 8
        %s768 = smul.addr %s767, 8
        %s769 = scalar_lea.vmem %s5, %s768
        %p770 = scmp.lt.s32.totalorder %s35, 1
        %s771 = scalar_select %p770, %s35, 1
        %s772 = smul.addr %s771, 8
        %s773 = smul.addr %s772, 8
        %s774 = scalar_lea.vmem %s6, %s773
        %v775 = vld [vmem:[%s7] sm:$0xff]
        %v776 = vld [vmem:[%s7 + $0x8] sm:$0xff]
        %v777 = vld [vmem:[%s744] sm:$0xff]
        %v778 = vld [vmem:[%s744 + $0x8] sm:$0xff]
        %v779 = vld [vmem:[%s744 + $0x10] sm:$0xff]
        %v780 = vld [vmem:[%s744 + $0x18] sm:$0xff]
        %v781 = vld [vmem:[%s744 + $0x20] sm:$0xff]
        %v782 = vld [vmem:[%s744 + $0x28] sm:$0xff]
        %v783 = vld [vmem:[%s744 + $0x30] sm:$0xff]
        %v784 = vld [vmem:[%s744 + $0x38] sm:$0xff]
        %v785 = vld [vmem:[%s8] sm:$0xff]
        %v786 = vld [vmem:[%s8 + $0x8] sm:$0xff]
        %v787 = vld [vmem:[%s749] sm:$0xff]
        %v788 = vld [vmem:[%s749 + $0x8] sm:$0xff]
        %v789 = vld [vmem:[%s749 + $0x10] sm:$0xff]
        %v790 = vld [vmem:[%s749 + $0x18] sm:$0xff]
        %v791 = vld [vmem:[%s749 + $0x20] sm:$0xff]
        %v792 = vld [vmem:[%s749 + $0x28] sm:$0xff]
        %v793 = vld [vmem:[%s749 + $0x30] sm:$0xff]
        %v794 = vld [vmem:[%s749 + $0x38] sm:$0xff]
        %vm795 = vcmask 523264
        %v797 = vsel %vm795, %v785, 0
        %v800 = vsel %vm795, %v786, 0
        %802 = vmatprep.subr.mxu0 0.0
        %803 = vmatpush1.msra.mxu0 %v787
        %804 = vmatprep.subr.mxu0 0.0
        %805 = vmatpush1.msra.mxu0 %v788
        %806 = vmatprep.subr.mxu0 0.0
        %807 = vmatpush1.msra.mxu0 %v789
        %808 = vmatprep.subr.mxu0 0.0
        %809 = vmatpush1.msra.mxu0 %v790
        %810 = vmatprep.subr.mxu0 0.0
        %811 = vmatpush1.msra.mxu0 %v791
        %812 = vmatprep.subr.mxu0 0.0
        %813 = vmatpush1.msra.mxu0 %v792
        %814 = vmatprep.subr.mxu0 0.0
        %815 = vmatpush1.msra.mxu0 %v793
        %816 = vmatprep.subr.mxu0 0.0
        %817 = vmatpush1.msra.mxu0 %v794
        %818 = vmatprep.subr.mxu0 0.0
        %819 = vmatpush1.msra.mxu0 0.0
        %820 = vmatprep.subr.mxu0 0.0
        %821 = vmatpush1.msra.mxu0 0.0
        %822 = vmatprep.subr.mxu0 0.0
        %823 = vmatpush1.msra.mxu0 0.0
        %824 = vmatprep.subr.mxu0 0.0
        %825 = vmatpush1.msra.mxu0 0.0
        %826 = vmatprep.subr.mxu0 0.0
        %827 = vmatpush1.msra.mxu0 0.0
        %828 = vmatprep.subr.mxu0 0.0
        %829 = vmatpush1.msra.mxu0 0.0
        %830 = vmatprep.subr.mxu0 0.0
        %831 = vmatpush1.msra.mxu0 0.0
        %832 = vmatprep.subr.mxu0 0.0
        %833 = vmatpush1.msra.mxu0 0.0
        %834 = vmatprep.subr.mxu0 0.0
        %835 = vmatpush1.msra.mxu0 0.0
        %836 = vmatprep.subr.mxu0 0.0
        %837 = vmatpush1.msra.mxu0 0.0
        %838 = vmatprep.subr.mxu0 0.0
        %839 = vmatpush1.msra.mxu0 0.0
        %840 = vmatprep.subr.mxu0 0.0
        %841 = vmatpush1.msra.mxu0 0.0
        %842 = vmatprep.subr.mxu0 0.0
        %843 = vmatpush1.msra.mxu0 0.0
        %844 = vmatprep.subr.mxu0 0.0
        %845 = vmatpush1.msra.mxu0 0.0
        %846 = vmatprep.subr.mxu0 0.0
        %847 = vmatpush1.msra.mxu0 0.0
        %848 = vmatprep.subr.mxu0 0.0
        %849 = vmatpush1.msra.mxu0 0.0
        %850 = vmatprep.subr.mxu0 0.0
        %851 = vmatpush1.msra.mxu0 0.0
        %852 = vmatprep.subr.mxu0 0.0
        %853 = vmatpush1.msra.mxu0 0.0
        %854 = vmatprep.subr.mxu0 0.0
        %855 = vmatpush1.msra.mxu0 0.0
        %856 = vmatprep.subr.mxu0 0.0
        %857 = vmatpush1.msra.mxu0 0.0
        %858 = vmatprep.subr.mxu0 0.0
        %859 = vmatpush1.msra.mxu0 0.0
        %860 = vmatprep.subr.mxu0 0.0
        %861 = vmatpush1.msra.mxu0 0.0
        %862 = vmatprep.subr.mxu0 0.0
        %863 = vmatpush1.msra.mxu0 0.0
        %864 = vmatprep.subr.mxu0 0.0
        %865 = vmatpush1.msra.mxu0 0.0
        %866 = vmatprep.mubr.f32.mxu0 0.0
        %867 = vmatmul.mubr.f32.gmra.mrb[0].mxu0 %v797
        %v868 = vpop.f32.mrb[0].mxu0
        %v869 = vadd.f32 0.0, %v868
        %v870 = vpop.f32.mrb[0].mxu0
        %871 = vmatprep.mubr.f32.mxu0 0.0
        %872 = vmatmul.mubr.f32.gmra.mrb[0].mxu0 %v800
        %v873 = vpop.f32.mrb[0].mxu0
        %v874 = vadd.f32 0.0, %v873
        %v875 = vpop.f32.mrb[0].mxu0
        %876 = vdwg.mxu0
        %v878 = vsel %vm795, %v775, 0
        %v881 = vsel %vm795, %v776, 0
        %883 = vmatprep.subr.mxu0 0.0
        %884 = vmatpush1.msra.mxu0 %v777
        %885 = vmatprep.subr.mxu0 0.0
        %886 = vmatpush1.msra.mxu0 %v778
        %887 = vmatprep.subr.mxu0 0.0
        %888 = vmatpush1.msra.mxu0 %v779
        %889 = vmatprep.subr.mxu0 0.0
        %890 = vmatpush1.msra.mxu0 %v780
        %891 = vmatprep.subr.mxu0 0.0
        %892 = vmatpush1.msra.mxu0 %v781
        %893 = vmatprep.subr.mxu0 0.0
        %894 = vmatpush1.msra.mxu0 %v782
        %895 = vmatprep.subr.mxu0 0.0
        %896 = vmatpush1.msra.mxu0 %v783
        %897 = vmatprep.subr.mxu0 0.0
        %898 = vmatpush1.msra.mxu0 %v784
        %899 = vmatprep.subr.mxu0 0.0
        %900 = vmatpush1.msra.mxu0 0.0
        %901 = vmatprep.subr.mxu0 0.0
        %902 = vmatpush1.msra.mxu0 0.0
        %903 = vmatprep.subr.mxu0 0.0
        %904 = vmatpush1.msra.mxu0 0.0
        %905 = vmatprep.subr.mxu0 0.0
        %906 = vmatpush1.msra.mxu0 0.0
        %907 = vmatprep.subr.mxu0 0.0
        %908 = vmatpush1.msra.mxu0 0.0
        %909 = vmatprep.subr.mxu0 0.0
        %910 = vmatpush1.msra.mxu0 0.0
        %911 = vmatprep.subr.mxu0 0.0
        %912 = vmatpush1.msra.mxu0 0.0
        %913 = vmatprep.subr.mxu0 0.0
        %914 = vmatpush1.msra.mxu0 0.0
        %915 = vmatprep.subr.mxu0 0.0
        %916 = vmatpush1.msra.mxu0 0.0
        %917 = vmatprep.subr.mxu0 0.0
        %918 = vmatpush1.msra.mxu0 0.0
        %919 = vmatprep.subr.mxu0 0.0
        %920 = vmatpush1.msra.mxu0 0.0
        %921 = vmatprep.subr.mxu0 0.0
        %922 = vmatpush1.msra.mxu0 0.0
        %923 = vmatprep.subr.mxu0 0.0
        %924 = vmatpush1.msra.mxu0 0.0
        %925 = vmatprep.subr.mxu0 0.0
        %926 = vmatpush1.msra.mxu0 0.0
        %927 = vmatprep.subr.mxu0 0.0
        %928 = vmatpush1.msra.mxu0 0.0
        %929 = vmatprep.subr.mxu0 0.0
        %930 = vmatpush1.msra.mxu0 0.0
        %931 = vmatprep.subr.mxu0 0.0
        %932 = vmatpush1.msra.mxu0 0.0
        %933 = vmatprep.subr.mxu0 0.0
        %934 = vmatpush1.msra.mxu0 0.0
        %935 = vmatprep.subr.mxu0 0.0
        %936 = vmatpush1.msra.mxu0 0.0
        %937 = vmatprep.subr.mxu0 0.0
        %938 = vmatpush1.msra.mxu0 0.0
        %939 = vmatprep.subr.mxu0 0.0
        %940 = vmatpush1.msra.mxu0 0.0
        %941 = vmatprep.subr.mxu0 0.0
        %942 = vmatpush1.msra.mxu0 0.0
        %943 = vmatprep.subr.mxu0 0.0
        %944 = vmatpush1.msra.mxu0 0.0
        %945 = vmatprep.subr.mxu0 0.0
        %946 = vmatpush1.msra.mxu0 0.0
        %947 = vmatprep.mubr.f32.mxu0 0.0
        %948 = vmatmul.mubr.f32.gmra.mrb[0].mxu0 %v878
        %v949 = vpop.f32.mrb[0].mxu0
        %v950 = vadd.f32 %v869, %v949
        %v951 = vpop.f32.mrb[0].mxu0
        %952 = vmatprep.mubr.f32.mxu0 0.0
        %953 = vmatmul.mubr.f32.gmra.mrb[0].mxu0 %v881
        %v954 = vpop.f32.mrb[0].mxu0
        %v955 = vadd.f32 %v874, %v954
        %v956 = vpop.f32.mrb[0].mxu0
        %957 = vdwg.mxu0
        %v958 = vld [vmem:[%s9] sm:$0xff]
        %v959 = vld [vmem:[%s9 + $0x8] sm:$0xff]
        %961 = vset.pattern.permute.xlu0 0
        %962 = vperm.xlu0 %961, %v958
        %v963 = vpop.permute.xlu0 %962
        %966 = vset.pattern.permute.xlu0 0
        %967 = vperm.xlu0 %966, %v959
        %v968 = vpop.permute.xlu0 %967
        %v970 = vadd.f32 %v950, %v963
        %v971 = vadd.f32 %v955, %v968
        %v972 = vmax.f32 %v970, 0.0
        %v973 = vmax.f32 %v971, 0.0
        %v974 = vld [vmem:[%s10] sm:$0xff]
        %v975 = vld [vmem:[%s10 + $0x8] sm:$0xff]
        %v976 = vld [vmem:[%s10 + $0x10] sm:$0xff]
        %v977 = vld [vmem:[%s10 + $0x18] sm:$0xff]
        %v978 = vld [vmem:[%s10 + $0x20] sm:$0xff]
        %v979 = vld [vmem:[%s10 + $0x28] sm:$0xff]
        %v980 = vld [vmem:[%s10 + $0x30] sm:$0xff]
        %v981 = vld [vmem:[%s10 + $0x38] sm:$0xff]
        %v982 = vld [vmem:[%s10 + $0x40] sm:$0xff]
        %v983 = vld [vmem:[%s10 + $0x48] sm:$0xff]
        %v984 = vld [vmem:[%s10 + $0x50] sm:$0xff]
        %v985 = vld [vmem:[%s10 + $0x58] sm:$0xff]
        %v986 = vld [vmem:[%s10 + $0x60] sm:$0xff]
        %v987 = vld [vmem:[%s10 + $0x68] sm:$0xff]
        %v988 = vld [vmem:[%s10 + $0x70] sm:$0xff]
        %v989 = vld [vmem:[%s10 + $0x78] sm:$0xff]
        %v990 = vld [vmem:[%s10 + $0x80] sm:$0xff]
        %v991 = vld [vmem:[%s10 + $0x88] sm:$0xff]
        %v992 = vld [vmem:[%s10 + $0x90] sm:$0xff]
        %v993 = vld [vmem:[%s10 + $0x98] sm:$0xff]
        %v994 = vld [vmem:[%s10 + $0xa0] sm:$0xff]
        %v995 = vld [vmem:[%s10 + $0xa8] sm:$0xff]
        %v996 = vld [vmem:[%s10 + $0xb0] sm:$0xff]
        %v997 = vld [vmem:[%s10 + $0xb8] sm:$0xff]
        %v998 = vld [vmem:[%s10 + $0xc0] sm:$0xff]
        %v999 = vld [vmem:[%s10 + $0xc8] sm:$0xff]
        %v1000 = vld [vmem:[%s10 + $0xd0] sm:$0xff]
        %v1001 = vld [vmem:[%s10 + $0xd8] sm:$0xff]
        %v1002 = vld [vmem:[%s10 + $0xe0] sm:$0xff]
        %v1003 = vld [vmem:[%s10 + $0xe8] sm:$0xff]
        %v1004 = vld [vmem:[%s10 + $0xf0] sm:$0xff]
        %v1005 = vld [vmem:[%s10 + $0xf8] sm:$0xff]
        %v1006 = vld [vmem:[%s10 + $0x100] sm:$0xff]
        %v1007 = vld [vmem:[%s10 + $0x108] sm:$0xff]
        %v1008 = vld [vmem:[%s10 + $0x110] sm:$0xff]
        %v1009 = vld [vmem:[%s10 + $0x118] sm:$0xff]
        %v1010 = vld [vmem:[%s10 + $0x120] sm:$0xff]
        %v1011 = vld [vmem:[%s10 + $0x128] sm:$0xff]
        %v1012 = vld [vmem:[%s10 + $0x130] sm:$0xff]
        %v1013 = vld [vmem:[%s10 + $0x138] sm:$0xff]
        %v1014 = vld [vmem:[%s10 + $0x140] sm:$0xff]
        %v1015 = vld [vmem:[%s10 + $0x148] sm:$0xff]
        %v1016 = vld [vmem:[%s10 + $0x150] sm:$0xff]
        %v1017 = vld [vmem:[%s10 + $0x158] sm:$0xff]
        %v1018 = vld [vmem:[%s10 + $0x160] sm:$0xff]
        %v1019 = vld [vmem:[%s10 + $0x168] sm:$0xff]
        %v1020 = vld [vmem:[%s10 + $0x170] sm:$0xff]
        %v1021 = vld [vmem:[%s10 + $0x178] sm:$0xff]
        %v1022 = vld [vmem:[%s10 + $0x180] sm:$0xff]
        %v1023 = vld [vmem:[%s10 + $0x188] sm:$0xff]
        %v1024 = vld [vmem:[%s10 + $0x190] sm:$0xff]
        %v1025 = vld [vmem:[%s10 + $0x198] sm:$0xff]
        %v1026 = vld [vmem:[%s10 + $0x1a0] sm:$0xff]
        %v1027 = vld [vmem:[%s10 + $0x1a8] sm:$0xff]
        %v1028 = vld [vmem:[%s10 + $0x1b0] sm:$0xff]
        %v1029 = vld [vmem:[%s10 + $0x1b8] sm:$0xff]
        %v1030 = vld [vmem:[%s10 + $0x1c0] sm:$0xff]
        %v1031 = vld [vmem:[%s10 + $0x1c8] sm:$0xff]
        %v1032 = vld [vmem:[%s10 + $0x1d0] sm:$0xff]
        %v1033 = vld [vmem:[%s10 + $0x1d8] sm:$0xff]
        %v1034 = vld [vmem:[%s10 + $0x1e0] sm:$0xff]
        %v1035 = vld [vmem:[%s10 + $0x1e8] sm:$0xff]
        %v1036 = vld [vmem:[%s10 + $0x1f0] sm:$0xff]
        %v1037 = vld [vmem:[%s10 + $0x1f8] sm:$0xff]
        %vm1038 = vcmask 130048
        %v1040 = vsel %vm1038, %v974, 0
        %v1043 = vsel %vm1038, %v975, 0
        %v1046 = vsel %vm1038, %v976, 0
        %v1049 = vsel %vm1038, %v977, 0
        %v1052 = vsel %vm1038, %v978, 0
        %v1055 = vsel %vm1038, %v979, 0
        %v1058 = vsel %vm1038, %v980, 0
        %v1061 = vsel %vm1038, %v981, 0
        %v1064 = vsel %vm1038, %v982, 0
        %v1067 = vsel %vm1038, %v983, 0
        %v1070 = vsel %vm1038, %v984, 0
        %v1073 = vsel %vm1038, %v985, 0
        %v1076 = vsel %vm1038, %v986, 0
        %v1079 = vsel %vm1038, %v987, 0
        %v1082 = vsel %vm1038, %v988, 0
        %v1085 = vsel %vm1038, %v989, 0
        %v1088 = vsel %vm1038, %v990, 0
        %v1091 = vsel %vm1038, %v991, 0
        %v1094 = vsel %vm1038, %v992, 0
        %v1097 = vsel %vm1038, %v993, 0
        %v1100 = vsel %vm1038, %v994, 0
        %v1103 = vsel %vm1038, %v995, 0
        %v1106 = vsel %vm1038, %v996, 0
        %v1109 = vsel %vm1038, %v997, 0
        %v1112 = vsel %vm1038, %v998, 0
        %v1115 = vsel %vm1038, %v999, 0
        %v1118 = vsel %vm1038, %v1000, 0
        %v1121 = vsel %vm1038, %v1001, 0
        %v1124 = vsel %vm1038, %v1002, 0
        %v1127 = vsel %vm1038, %v1003, 0
        %v1130 = vsel %vm1038, %v1004, 0
        %v1133 = vsel %vm1038, %v1005, 0
        %v1136 = vsel %vm1038, %v1006, 0
        %v1139 = vsel %vm1038, %v1007, 0
        %v1142 = vsel %vm1038, %v1008, 0
        %v1145 = vsel %vm1038, %v1009, 0
        %v1148 = vsel %vm1038, %v1010, 0
        %v1151 = vsel %vm1038, %v1011, 0
        %v1154 = vsel %vm1038, %v1012, 0
        %v1157 = vsel %vm1038, %v1013, 0
        %v1160 = vsel %vm1038, %v1014, 0
        %v1163 = vsel %vm1038, %v1015, 0
        %v1166 = vsel %vm1038, %v1016, 0
        %v1169 = vsel %vm1038, %v1017, 0
        %v1172 = vsel %vm1038, %v1018, 0
        %v1175 = vsel %vm1038, %v1019, 0
        %v1178 = vsel %vm1038, %v1020, 0
        %v1181 = vsel %vm1038, %v1021, 0
        %v1184 = vsel %vm1038, %v1022, 0
        %v1187 = vsel %vm1038, %v1023, 0
        %v1190 = vsel %vm1038, %v1024, 0
        %v1193 = vsel %vm1038, %v1025, 0
        %v1196 = vsel %vm1038, %v1026, 0
        %v1199 = vsel %vm1038, %v1027, 0
        %v1202 = vsel %vm1038, %v1028, 0
        %v1205 = vsel %vm1038, %v1029, 0
        %v1208 = vsel %vm1038, %v1030, 0
        %v1211 = vsel %vm1038, %v1031, 0
        %v1214 = vsel %vm1038, %v1032, 0
        %v1217 = vsel %vm1038, %v1033, 0
        %v1220 = vsel %vm1038, %v1034, 0
        %v1223 = vsel %vm1038, %v1035, 0
        %v1226 = vsel %vm1038, %v1036, 0
        %v1229 = vsel %vm1038, %v1037, 0
        %1231 = vmatprep.subr.mxu0 0.0
        %1232 = vmatpush1.msra.mxu0 %v972
        %1233 = vmatprep.subr.mxu0 0.0
        %1234 = vmatpush1.msra.mxu0 %v973
        %1235 = vmatprep.subr.mxu0 0.0
        %1236 = vmatpush1.msra.mxu0 0.0
        %1237 = vmatprep.subr.mxu0 0.0
        %1238 = vmatpush1.msra.mxu0 0.0
        %1239 = vmatprep.subr.mxu0 0.0
        %1240 = vmatpush1.msra.mxu0 0.0
        %1241 = vmatprep.subr.mxu0 0.0
        %1242 = vmatpush1.msra.mxu0 0.0
        %1243 = vmatprep.subr.mxu0 0.0
        %1244 = vmatpush1.msra.mxu0 0.0
        %1245 = vmatprep.subr.mxu0 0.0
        %1246 = vmatpush1.msra.mxu0 0.0
        %1247 = vmatprep.subr.mxu0 0.0
        %1248 = vmatpush1.msra.mxu0 0.0
        %1249 = vmatprep.subr.mxu0 0.0
        %1250 = vmatpush1.msra.mxu0 0.0
        %1251 = vmatprep.subr.mxu0 0.0
        %1252 = vmatpush1.msra.mxu0 0.0
        %1253 = vmatprep.subr.mxu0 0.0
        %1254 = vmatpush1.msra.mxu0 0.0
        %1255 = vmatprep.subr.mxu0 0.0
        %1256 = vmatpush1.msra.mxu0 0.0
        %1257 = vmatprep.subr.mxu0 0.0
        %1258 = vmatpush1.msra.mxu0 0.0
        %1259 = vmatprep.subr.mxu0 0.0
        %1260 = vmatpush1.msra.mxu0 0.0
        %1261 = vmatprep.subr.mxu0 0.0
        %1262 = vmatpush1.msra.mxu0 0.0
        %1263 = vmatprep.subr.mxu0 0.0
        %1264 = vmatpush1.msra.mxu0 0.0
        %1265 = vmatprep.subr.mxu0 0.0
        %1266 = vmatpush1.msra.mxu0 0.0
        %1267 = vmatprep.subr.mxu0 0.0
        %1268 = vmatpush1.msra.mxu0 0.0
        %1269 = vmatprep.subr.mxu0 0.0
        %1270 = vmatpush1.msra.mxu0 0.0
        %1271 = vmatprep.subr.mxu0 0.0
        %1272 = vmatpush1.msra.mxu0 0.0
        %1273 = vmatprep.subr.mxu0 0.0
        %1274 = vmatpush1.msra.mxu0 0.0
        %1275 = vmatprep.subr.mxu0 0.0
        %1276 = vmatpush1.msra.mxu0 0.0
        %1277 = vmatprep.subr.mxu0 0.0
        %1278 = vmatpush1.msra.mxu0 0.0
        %1279 = vmatprep.subr.mxu0 0.0
        %1280 = vmatpush1.msra.mxu0 0.0
        %1281 = vmatprep.subr.mxu0 0.0
        %1282 = vmatpush1.msra.mxu0 0.0
        %1283 = vmatprep.subr.mxu0 0.0
        %1284 = vmatpush1.msra.mxu0 0.0
        %1285 = vmatprep.subr.mxu0 0.0
        %1286 = vmatpush1.msra.mxu0 0.0
        %1287 = vmatprep.subr.mxu0 0.0
        %1288 = vmatpush1.msra.mxu0 0.0
        %1289 = vmatprep.subr.mxu0 0.0
        %1290 = vmatpush1.msra.mxu0 0.0
        %1291 = vmatprep.subr.mxu0 0.0
        %1292 = vmatpush1.msra.mxu0 0.0
        %1293 = vmatprep.subr.mxu0 0.0
        %1294 = vmatpush1.msra.mxu0 0.0
        %1295 = vmatprep.mubr.f32.mxu0 0.0
        %1296 = vmatmul.mubr.f32.gmra.mrb[0].mxu0 %v1040
        %v1297 = vpop.f32.mrb[0].mxu0
        %v1298 = vadd.f32 0.0, %v1297
        %v1299 = vpop.f32.mrb[0].mxu0
        %1300 = vmatprep.mubr.f32.mxu0 0.0
        %1301 = vmatmul.mubr.f32.gmra.mrb[0].mxu0 %v1043
        %v1302 = vpop.f32.mrb[0].mxu0
        %v1303 = vadd.f32 0.0, %v1302
        %v1304 = vpop.f32.mrb[0].mxu0
        %1305 = vmatprep.mubr.f32.mxu0 0.0
        %1306 = vmatmul.mubr.f32.gmra.mrb[0].mxu0 %v1046
        %v1307 = vpop.f32.mrb[0].mxu0
        %v1308 = vadd.f32 0.0, %v1307
        %v1309 = vpop.f32.mrb[0].mxu0
        %1310 = vmatprep.mubr.f32.mxu0 0.0
        %1311 = vmatmul.mubr.f32.gmra.mrb[0].mxu0 %v1049
        %v1312 = vpop.f32.mrb[0].mxu0
        %v1313 = vadd.f32 0.0, %v1312
        %v1314 = vpop.f32.mrb[0].mxu0
        %1315 = vmatprep.mubr.f32.mxu0 0.0
        %1316 = vmatmul.mubr.f32.gmra.mrb[0].mxu0 %v1052
        %v1317 = vpop.f32.mrb[0].mxu0
        %v1318 = vadd.f32 0.0, %v1317
        %v1319 = vpop.f32.mrb[0].mxu0
        %1320 = vmatprep.mubr.f32.mxu0 0.0
        %1321 = vmatmul.mubr.f32.gmra.mrb[0].mxu0 %v1055
        %v1322 = vpop.f32.mrb[0].mxu0
        %v1323 = vadd.f32 0.0, %v1322
        %v1324 = vpop.f32.mrb[0].mxu0
        %1325 = vmatprep.mubr.f32.mxu0 0.0
        %1326 = vmatmul.mubr.f32.gmra.mrb[0].mxu0 %v1058
        %v1327 = vpop.f32.mrb[0].mxu0
        %v1328 = vadd.f32 0.0, %v1327
        %v1329 = vpop.f32.mrb[0].mxu0
        %1330 = vmatprep.mubr.f32.mxu0 0.0
        %1331 = vmatmul.mubr.f32.gmra.mrb[0].mxu0 %v1061
        %v1332 = vpop.f32.mrb[0].mxu0
        %v1333 = vadd.f32 0.0, %v1332
        %v1334 = vpop.f32.mrb[0].mxu0
        %1335 = vmatprep.mubr.f32.mxu0 0.0
        %1336 = vmatmul.mubr.f32.gmra.mrb[0].mxu0 %v1064
        %v1337 = vpop.f32.mrb[0].mxu0
        %v1338 = vadd.f32 0.0, %v1337
        %v1339 = vpop.f32.mrb[0].mxu0
        %1340 = vmatprep.mubr.f32.mxu0 0.0
        %1341 = vmatmul.mubr.f32.gmra.mrb[0].mxu0 %v1067
        %v1342 = vpop.f32.mrb[0].mxu0
        %v1343 = vadd.f32 0.0, %v1342
        %v1344 = vpop.f32.mrb[0].mxu0
        %1345 = vmatprep.mubr.f32.mxu0 0.0
        %1346 = vmatmul.mubr.f32.gmra.mrb[0].mxu0 %v1070
        %v1347 = vpop.f32.mrb[0].mxu0
        %v1348 = vadd.f32 0.0, %v1347
        %v1349 = vpop.f32.mrb[0].mxu0
        %1350 = vmatprep.mubr.f32.mxu0 0.0
        %1351 = vmatmul.mubr.f32.gmra.mrb[0].mxu0 %v1073
        %v1352 = vpop.f32.mrb[0].mxu0
        %v1353 = vadd.f32 0.0, %v1352
        %v1354 = vpop.f32.mrb[0].mxu0
        %1355 = vmatprep.mubr.f32.mxu0 0.0
        %1356 = vmatmul.mubr.f32.gmra.mrb[0].mxu0 %v1076
        %v1357 = vpop.f32.mrb[0].mxu0
        %v1358 = vadd.f32 0.0, %v1357
        %v1359 = vpop.f32.mrb[0].mxu0
        %1360 = vmatprep.mubr.f32.mxu0 0.0
        %1361 = vmatmul.mubr.f32.gmra.mrb[0].mxu0 %v1079
        %v1362 = vpop.f32.mrb[0].mxu0
        %v1363 = vadd.f32 0.0, %v1362
        %v1364 = vpop.f32.mrb[0].mxu0
        %1365 = vmatprep.mubr.f32.mxu0 0.0
        %1366 = vmatmul.mubr.f32.gmra.mrb[0].mxu0 %v1082
        %v1367 = vpop.f32.mrb[0].mxu0
        %v1368 = vadd.f32 0.0, %v1367
        %v1369 = vpop.f32.mrb[0].mxu0
        %1370 = vmatprep.mubr.f32.mxu0 0.0
        %1371 = vmatmul.mubr.f32.gmra.mrb[0].mxu0 %v1085
        %v1372 = vpop.f32.mrb[0].mxu0
        %v1373 = vadd.f32 0.0, %v1372
        %v1374 = vpop.f32.mrb[0].mxu0
        %1375 = vmatprep.mubr.f32.mxu0 0.0
        %1376 = vmatmul.mubr.f32.gmra.mrb[0].mxu0 %v1088
        %v1377 = vpop.f32.mrb[0].mxu0
        %v1378 = vadd.f32 0.0, %v1377
        %v1379 = vpop.f32.mrb[0].mxu0
        %1380 = vmatprep.mubr.f32.mxu0 0.0
        %1381 = vmatmul.mubr.f32.gmra.mrb[0].mxu0 %v1091
        %v1382 = vpop.f32.mrb[0].mxu0
        %v1383 = vadd.f32 0.0, %v1382
        %v1384 = vpop.f32.mrb[0].mxu0
        %1385 = vmatprep.mubr.f32.mxu0 0.0
        %1386 = vmatmul.mubr.f32.gmra.mrb[0].mxu0 %v1094
        %v1387 = vpop.f32.mrb[0].mxu0
        %v1388 = vadd.f32 0.0, %v1387
        %v1389 = vpop.f32.mrb[0].mxu0
        %1390 = vmatprep.mubr.f32.mxu0 0.0
        %1391 = vmatmul.mubr.f32.gmra.mrb[0].mxu0 %v1097
        %v1392 = vpop.f32.mrb[0].mxu0
        %v1393 = vadd.f32 0.0, %v1392
        %v1394 = vpop.f32.mrb[0].mxu0
        %1395 = vmatprep.mubr.f32.mxu0 0.0
        %1396 = vmatmul.mubr.f32.gmra.mrb[0].mxu0 %v1100
        %v1397 = vpop.f32.mrb[0].mxu0
        %v1398 = vadd.f32 0.0, %v1397
        %v1399 = vpop.f32.mrb[0].mxu0
        %1400 = vmatprep.mubr.f32.mxu0 0.0
        %1401 = vmatmul.mubr.f32.gmra.mrb[0].mxu0 %v1103
        %v1402 = vpop.f32.mrb[0].mxu0
        %v1403 = vadd.f32 0.0, %v1402
        %v1404 = vpop.f32.mrb[0].mxu0
        %1405 = vmatprep.mubr.f32.mxu0 0.0
        %1406 = vmatmul.mubr.f32.gmra.mrb[0].mxu0 %v1106
        %v1407 = vpop.f32.mrb[0].mxu0
        %v1408 = vadd.f32 0.0, %v1407
        %v1409 = vpop.f32.mrb[0].mxu0
        %1410 = vmatprep.mubr.f32.mxu0 0.0
        %1411 = vmatmul.mubr.f32.gmra.mrb[0].mxu0 %v1109
        %v1412 = vpop.f32.mrb[0].mxu0
        %v1413 = vadd.f32 0.0, %v1412
        %v1414 = vpop.f32.mrb[0].mxu0
        %1415 = vmatprep.mubr.f32.mxu0 0.0
        %1416 = vmatmul.mubr.f32.gmra.mrb[0].mxu0 %v1112
        %v1417 = vpop.f32.mrb[0].mxu0
        %v1418 = vadd.f32 0.0, %v1417
        %v1419 = vpop.f32.mrb[0].mxu0
        %1420 = vmatprep.mubr.f32.mxu0 0.0
        %1421 = vmatmul.mubr.f32.gmra.mrb[0].mxu0 %v1115
        %v1422 = vpop.f32.mrb[0].mxu0
        %v1423 = vadd.f32 0.0, %v1422
        %v1424 = vpop.f32.mrb[0].mxu0
        %1425 = vmatprep.mubr.f32.mxu0 0.0
        %1426 = vmatmul.mubr.f32.gmra.mrb[0].mxu0 %v1118
        %v1427 = vpop.f32.mrb[0].mxu0
        %v1428 = vadd.f32 0.0, %v1427
        %v1429 = vpop.f32.mrb[0].mxu0
        %1430 = vmatprep.mubr.f32.mxu0 0.0
        %1431 = vmatmul.mubr.f32.gmra.mrb[0].mxu0 %v1121
        %v1432 = vpop.f32.mrb[0].mxu0
        %v1433 = vadd.f32 0.0, %v1432
        %v1434 = vpop.f32.mrb[0].mxu0
        %1435 = vmatprep.mubr.f32.mxu0 0.0
        %1436 = vmatmul.mubr.f32.gmra.mrb[0].mxu0 %v1124
        %v1437 = vpop.f32.mrb[0].mxu0
        %v1438 = vadd.f32 0.0, %v1437
        %v1439 = vpop.f32.mrb[0].mxu0
        %1440 = vmatprep.mubr.f32.mxu0 0.0
        %1441 = vmatmul.mubr.f32.gmra.mrb[0].mxu0 %v1127
        %v1442 = vpop.f32.mrb[0].mxu0
        %v1443 = vadd.f32 0.0, %v1442
        %v1444 = vpop.f32.mrb[0].mxu0
        %1445 = vmatprep.mubr.f32.mxu0 0.0
        %1446 = vmatmul.mubr.f32.gmra.mrb[0].mxu0 %v1130
        %v1447 = vpop.f32.mrb[0].mxu0
        %v1448 = vadd.f32 0.0, %v1447
        %v1449 = vpop.f32.mrb[0].mxu0
        %1450 = vmatprep.mubr.f32.mxu0 0.0
        %1451 = vmatmul.mubr.f32.gmra.mrb[0].mxu0 %v1133
        %v1452 = vpop.f32.mrb[0].mxu0
        %v1453 = vadd.f32 0.0, %v1452
        %v1454 = vpop.f32.mrb[0].mxu0
        %1455 = vmatprep.mubr.f32.mxu0 0.0
        %1456 = vmatmul.mubr.f32.gmra.mrb[0].mxu0 %v1136
        %v1457 = vpop.f32.mrb[0].mxu0
        %v1458 = vadd.f32 0.0, %v1457
        %v1459 = vpop.f32.mrb[0].mxu0
        %1460 = vmatprep.mubr.f32.mxu0 0.0
        %1461 = vmatmul.mubr.f32.gmra.mrb[0].mxu0 %v1139
        %v1462 = vpop.f32.mrb[0].mxu0
        %v1463 = vadd.f32 0.0, %v1462
        %v1464 = vpop.f32.mrb[0].mxu0
        %1465 = vmatprep.mubr.f32.mxu0 0.0
        %1466 = vmatmul.mubr.f32.gmra.mrb[0].mxu0 %v1142
        %v1467 = vpop.f32.mrb[0].mxu0
        %v1468 = vadd.f32 0.0, %v1467
        %v1469 = vpop.f32.mrb[0].mxu0
        %1470 = vmatprep.mubr.f32.mxu0 0.0
        %1471 = vmatmul.mubr.f32.gmra.mrb[0].mxu0 %v1145
        %v1472 = vpop.f32.mrb[0].mxu0
        %v1473 = vadd.f32 0.0, %v1472
        %v1474 = vpop.f32.mrb[0].mxu0
        %1475 = vmatprep.mubr.f32.mxu0 0.0
        %1476 = vmatmul.mubr.f32.gmra.mrb[0].mxu0 %v1148
        %v1477 = vpop.f32.mrb[0].mxu0
        %v1478 = vadd.f32 0.0, %v1477
        %v1479 = vpop.f32.mrb[0].mxu0
        %1480 = vmatprep.mubr.f32.mxu0 0.0
        %1481 = vmatmul.mubr.f32.gmra.mrb[0].mxu0 %v1151
        %v1482 = vpop.f32.mrb[0].mxu0
        %v1483 = vadd.f32 0.0, %v1482
        %v1484 = vpop.f32.mrb[0].mxu0
        %1485 = vmatprep.mubr.f32.mxu0 0.0
        %1486 = vmatmul.mubr.f32.gmra.mrb[0].mxu0 %v1154
        %v1487 = vpop.f32.mrb[0].mxu0
        %v1488 = vadd.f32 0.0, %v1487
        %v1489 = vpop.f32.mrb[0].mxu0
        %1490 = vmatprep.mubr.f32.mxu0 0.0
        %1491 = vmatmul.mubr.f32.gmra.mrb[0].mxu0 %v1157
        %v1492 = vpop.f32.mrb[0].mxu0
        %v1493 = vadd.f32 0.0, %v1492
        %v1494 = vpop.f32.mrb[0].mxu0
        %1495 = vmatprep.mubr.f32.mxu0 0.0
        %1496 = vmatmul.mubr.f32.gmra.mrb[0].mxu0 %v1160
        %v1497 = vpop.f32.mrb[0].mxu0
        %v1498 = vadd.f32 0.0, %v1497
        %v1499 = vpop.f32.mrb[0].mxu0
        %1500 = vmatprep.mubr.f32.mxu0 0.0
        %1501 = vmatmul.mubr.f32.gmra.mrb[0].mxu0 %v1163
        %v1502 = vpop.f32.mrb[0].mxu0
        %v1503 = vadd.f32 0.0, %v1502
        %v1504 = vpop.f32.mrb[0].mxu0
        %1505 = vmatprep.mubr.f32.mxu0 0.0
        %1506 = vmatmul.mubr.f32.gmra.mrb[0].mxu0 %v1166
        %v1507 = vpop.f32.mrb[0].mxu0
        %v1508 = vadd.f32 0.0, %v1507
        %v1509 = vpop.f32.mrb[0].mxu0
        %1510 = vmatprep.mubr.f32.mxu0 0.0
        %1511 = vmatmul.mubr.f32.gmra.mrb[0].mxu0 %v1169
        %v1512 = vpop.f32.mrb[0].mxu0
        %v1513 = vadd.f32 0.0, %v1512
        %v1514 = vpop.f32.mrb[0].mxu0
        %1515 = vmatprep.mubr.f32.mxu0 0.0
        %1516 = vmatmul.mubr.f32.gmra.mrb[0].mxu0 %v1172
        %v1517 = vpop.f32.mrb[0].mxu0
        %v1518 = vadd.f32 0.0, %v1517
        %v1519 = vpop.f32.mrb[0].mxu0
        %1520 = vmatprep.mubr.f32.mxu0 0.0
        %1521 = vmatmul.mubr.f32.gmra.mrb[0].mxu0 %v1175
        %v1522 = vpop.f32.mrb[0].mxu0
        %v1523 = vadd.f32 0.0, %v1522
        %v1524 = vpop.f32.mrb[0].mxu0
        %1525 = vmatprep.mubr.f32.mxu0 0.0
        %1526 = vmatmul.mubr.f32.gmra.mrb[0].mxu0 %v1178
        %v1527 = vpop.f32.mrb[0].mxu0
        %v1528 = vadd.f32 0.0, %v1527
        %v1529 = vpop.f32.mrb[0].mxu0
        %1530 = vmatprep.mubr.f32.mxu0 0.0
        %1531 = vmatmul.mubr.f32.gmra.mrb[0].mxu0 %v1181
        %v1532 = vpop.f32.mrb[0].mxu0
        %v1533 = vadd.f32 0.0, %v1532
        %v1534 = vpop.f32.mrb[0].mxu0
        %1535 = vmatprep.mubr.f32.mxu0 0.0
        %1536 = vmatmul.mubr.f32.gmra.mrb[0].mxu0 %v1184
        %v1537 = vpop.f32.mrb[0].mxu0
        %v1538 = vadd.f32 0.0, %v1537
        %v1539 = vpop.f32.mrb[0].mxu0
        %1540 = vmatprep.mubr.f32.mxu0 0.0
        %1541 = vmatmul.mubr.f32.gmra.mrb[0].mxu0 %v1187
        %v1542 = vpop.f32.mrb[0].mxu0
        %v1543 = vadd.f32 0.0, %v1542
        %v1544 = vpop.f32.mrb[0].mxu0
        %1545 = vmatprep.mubr.f32.mxu0 0.0
        %1546 = vmatmul.mubr.f32.gmra.mrb[0].mxu0 %v1190
        %v1547 = vpop.f32.mrb[0].mxu0
        %v1548 = vadd.f32 0.0, %v1547
        %v1549 = vpop.f32.mrb[0].mxu0
        %1550 = vmatprep.mubr.f32.mxu0 0.0
        %1551 = vmatmul.mubr.f32.gmra.mrb[0].mxu0 %v1193
        %v1552 = vpop.f32.mrb[0].mxu0
        %v1553 = vadd.f32 0.0, %v1552
        %v1554 = vpop.f32.mrb[0].mxu0
        %1555 = vmatprep.mubr.f32.mxu0 0.0
        %1556 = vmatmul.mubr.f32.gmra.mrb[0].mxu0 %v1196
        %v1557 = vpop.f32.mrb[0].mxu0
        %v1558 = vadd.f32 0.0, %v1557
        %v1559 = vpop.f32.mrb[0].mxu0
        %1560 = vmatprep.mubr.f32.mxu0 0.0
        %1561 = vmatmul.mubr.f32.gmra.mrb[0].mxu0 %v1199
        %v1562 = vpop.f32.mrb[0].mxu0
        %v1563 = vadd.f32 0.0, %v1562
        %v1564 = vpop.f32.mrb[0].mxu0
        %1565 = vmatprep.mubr.f32.mxu0 0.0
        %1566 = vmatmul.mubr.f32.gmra.mrb[0].mxu0 %v1202
        %v1567 = vpop.f32.mrb[0].mxu0
        %v1568 = vadd.f32 0.0, %v1567
        %v1569 = vpop.f32.mrb[0].mxu0
        %1570 = vmatprep.mubr.f32.mxu0 0.0
        %1571 = vmatmul.mubr.f32.gmra.mrb[0].mxu0 %v1205
        %v1572 = vpop.f32.mrb[0].mxu0
        %v1573 = vadd.f32 0.0, %v1572
        %v1574 = vpop.f32.mrb[0].mxu0
        %1575 = vmatprep.mubr.f32.mxu0 0.0
        %1576 = vmatmul.mubr.f32.gmra.mrb[0].mxu0 %v1208
        %v1577 = vpop.f32.mrb[0].mxu0
        %v1578 = vadd.f32 0.0, %v1577
        %v1579 = vpop.f32.mrb[0].mxu0
        %1580 = vmatprep.mubr.f32.mxu0 0.0
        %1581 = vmatmul.mubr.f32.gmra.mrb[0].mxu0 %v1211
        %v1582 = vpop.f32.mrb[0].mxu0
        %v1583 = vadd.f32 0.0, %v1582
        %v1584 = vpop.f32.mrb[0].mxu0
        %1585 = vmatprep.mubr.f32.mxu0 0.0
        %1586 = vmatmul.mubr.f32.gmra.mrb[0].mxu0 %v1214
        %v1587 = vpop.f32.mrb[0].mxu0
        %v1588 = vadd.f32 0.0, %v1587
        %v1589 = vpop.f32.mrb[0].mxu0
        %1590 = vmatprep.mubr.f32.mxu0 0.0
        %1591 = vmatmul.mubr.f32.gmra.mrb[0].mxu0 %v1217
        %v1592 = vpop.f32.mrb[0].mxu0
        %v1593 = vadd.f32 0.0, %v1592
        %v1594 = vpop.f32.mrb[0].mxu0
        %1595 = vmatprep.mubr.f32.mxu0 0.0
        %1596 = vmatmul.mubr.f32.gmra.mrb[0].mxu0 %v1220
        %v1597 = vpop.f32.mrb[0].mxu0
        %v1598 = vadd.f32 0.0, %v1597
        %v1599 = vpop.f32.mrb[0].mxu0
        %1600 = vmatprep.mubr.f32.mxu0 0.0
        %1601 = vmatmul.mubr.f32.gmra.mrb[0].mxu0 %v1223
        %v1602 = vpop.f32.mrb[0].mxu0
        %v1603 = vadd.f32 0.0, %v1602
        %v1604 = vpop.f32.mrb[0].mxu0
        %1605 = vmatprep.mubr.f32.mxu0 0.0
        %1606 = vmatmul.mubr.f32.gmra.mrb[0].mxu0 %v1226
        %v1607 = vpop.f32.mrb[0].mxu0
        %v1608 = vadd.f32 0.0, %v1607
        %v1609 = vpop.f32.mrb[0].mxu0
        %1610 = vmatprep.mubr.f32.mxu0 0.0
        %1611 = vmatmul.mubr.f32.gmra.mrb[0].mxu0 %v1229
        %v1612 = vpop.f32.mrb[0].mxu0
        %v1613 = vadd.f32 0.0, %v1612
        %v1614 = vpop.f32.mrb[0].mxu0
        %1615 = vdwg.mxu0
        %v1616 = vld [vmem:[%s11] sm:$0xf]
        %v1617 = vld [vmem:[%s11 + $0x4] sm:$0xf]
        %vm1618 = vcmask 31744
        %v1620 = vsel %vm1618, %v1338, 0
        %v1623 = vsel %vm1618, %v1343, 0
        %v1626 = vsel %vm1618, %v1348, 0
        %v1629 = vsel %vm1618, %v1353, 0
        %v1632 = vsel %vm1618, %v1358, 0
        %v1635 = vsel %vm1618, %v1363, 0
        %v1638 = vsel %vm1618, %v1368, 0
        %v1641 = vsel %vm1618, %v1373, 0
        %vm1643 = vcmask 1043456
        %v1645 = vsel %vm1643, %v1617, 0
        %1647 = vmatprep.subr.mxu0 0.0
        %1648 = vmatpush1.msra.mxu0 %v1645
        %1649 = vmatprep.subr.mxu0 0.0
        %1650 = vmatpush1.msra.mxu0 0.0
        %1651 = vmatprep.subr.mxu0 0.0
        %1652 = vmatpush1.msra.mxu0 0.0
        %1653 = vmatprep.subr.mxu0 0.0
        %1654 = vmatpush1.msra.mxu0 0.0
        %1655 = vmatprep.subr.mxu0 0.0
        %1656 = vmatpush1.msra.mxu0 0.0
        %1657 = vmatprep.subr.mxu0 0.0
        %1658 = vmatpush1.msra.mxu0 0.0
        %1659 = vmatprep.subr.mxu0 0.0
        %1660 = vmatpush1.msra.mxu0 0.0
        %1661 = vmatprep.subr.mxu0 0.0
        %1662 = vmatpush1.msra.mxu0 0.0
        %1663 = vmatprep.subr.mxu0 0.0
        %1664 = vmatpush1.msra.mxu0 0.0
        %1665 = vmatprep.subr.mxu0 0.0
        %1666 = vmatpush1.msra.mxu0 0.0
        %1667 = vmatprep.subr.mxu0 0.0
        %1668 = vmatpush1.msra.mxu0 0.0
        %1669 = vmatprep.subr.mxu0 0.0
        %1670 = vmatpush1.msra.mxu0 0.0
        %1671 = vmatprep.subr.mxu0 0.0
        %1672 = vmatpush1.msra.mxu0 0.0
        %1673 = vmatprep.subr.mxu0 0.0
        %1674 = vmatpush1.msra.mxu0 0.0
        %1675 = vmatprep.subr.mxu0 0.0
        %1676 = vmatpush1.msra.mxu0 0.0
        %1677 = vmatprep.subr.mxu0 0.0
        %1678 = vmatpush1.msra.mxu0 0.0
        %1679 = vmatprep.subr.mxu0 0.0
        %1680 = vmatpush1.msra.mxu0 0.0
        %1681 = vmatprep.subr.mxu0 0.0
        %1682 = vmatpush1.msra.mxu0 0.0
        %1683 = vmatprep.subr.mxu0 0.0
        %1684 = vmatpush1.msra.mxu0 0.0
        %1685 = vmatprep.subr.mxu0 0.0
        %1686 = vmatpush1.msra.mxu0 0.0
        %1687 = vmatprep.subr.mxu0 0.0
        %1688 = vmatpush1.msra.mxu0 0.0
        %1689 = vmatprep.subr.mxu0 0.0
        %1690 = vmatpush1.msra.mxu0 0.0
        %1691 = vmatprep.subr.mxu0 0.0
        %1692 = vmatpush1.msra.mxu0 0.0
        %1693 = vmatprep.subr.mxu0 0.0
        %1694 = vmatpush1.msra.mxu0 0.0
        %1695 = vmatprep.subr.mxu0 0.0
        %1696 = vmatpush1.msra.mxu0 0.0
        %1697 = vmatprep.subr.mxu0 0.0
        %1698 = vmatpush1.msra.mxu0 0.0
        %1699 = vmatprep.subr.mxu0 0.0
        %1700 = vmatpush1.msra.mxu0 0.0
        %1701 = vmatprep.subr.mxu0 0.0
        %1702 = vmatpush1.msra.mxu0 0.0
        %1703 = vmatprep.subr.mxu0 0.0
        %1704 = vmatpush1.msra.mxu0 0.0
        %1705 = vmatprep.subr.mxu0 0.0
        %1706 = vmatpush1.msra.mxu0 0.0
        %1707 = vmatprep.subr.mxu0 0.0
        %1708 = vmatpush1.msra.mxu0 0.0
        %1709 = vmatprep.subr.mxu0 0.0
        %1710 = vmatpush1.msra.mxu0 0.0
        %1711 = vmatprep.mubr.f32.mxu0 0.0
        %1712 = vmatmul.mubr.f32.gmra.mrb[0].mxu0 %v1620
        %v1713 = vpop.f32.mrb[0].mxu0
        %v1714 = vadd.f32 0.0, %v1713
        %v1715 = vpop.f32.mrb[0].mxu0
        %1716 = vmatprep.mubr.f32.mxu0 0.0
        %1717 = vmatmul.mubr.f32.gmra.mrb[0].mxu0 %v1623
        %v1718 = vpop.f32.mrb[0].mxu0
        %v1719 = vadd.f32 0.0, %v1718
        %v1720 = vpop.f32.mrb[0].mxu0
        %1721 = vmatprep.mubr.f32.mxu0 0.0
        %1722 = vmatmul.mubr.f32.gmra.mrb[0].mxu0 %v1626
        %v1723 = vpop.f32.mrb[0].mxu0
        %v1724 = vadd.f32 0.0, %v1723
        %v1725 = vpop.f32.mrb[0].mxu0
        %1726 = vmatprep.mubr.f32.mxu0 0.0
        %1727 = vmatmul.mubr.f32.gmra.mrb[0].mxu0 %v1629
        %v1728 = vpop.f32.mrb[0].mxu0
        %v1729 = vadd.f32 0.0, %v1728
        %v1730 = vpop.f32.mrb[0].mxu0
        %1731 = vmatprep.mubr.f32.mxu0 0.0
        %1732 = vmatmul.mubr.f32.gmra.mrb[0].mxu0 %v1632
        %v1733 = vpop.f32.mrb[0].mxu0
        %v1734 = vadd.f32 0.0, %v1733
        %v1735 = vpop.f32.mrb[0].mxu0
        %1736 = vmatprep.mubr.f32.mxu0 0.0
        %1737 = vmatmul.mubr.f32.gmra.mrb[0].mxu0 %v1635
        %v1738 = vpop.f32.mrb[0].mxu0
        %v1739 = vadd.f32 0.0, %v1738
        %v1740 = vpop.f32.mrb[0].mxu0
        %1741 = vmatprep.mubr.f32.mxu0 0.0
        %1742 = vmatmul.mubr.f32.gmra.mrb[0].mxu0 %v1638
        %v1743 = vpop.f32.mrb[0].mxu0
        %v1744 = vadd.f32 0.0, %v1743
        %v1745 = vpop.f32.mrb[0].mxu0
        %1746 = vmatprep.mubr.f32.mxu0 0.0
        %1747 = vmatmul.mubr.f32.gmra.mrb[0].mxu0 %v1641
        %v1748 = vpop.f32.mrb[0].mxu0
        %v1749 = vadd.f32 0.0, %v1748
        %v1750 = vpop.f32.mrb[0].mxu0
        %1751 = vdwg.mxu0
        %v1753 = vsel %vm1618, %v1298, 0
        %v1756 = vsel %vm1618, %v1303, 0
        %v1759 = vsel %vm1618, %v1308, 0
        %v1762 = vsel %vm1618, %v1313, 0
        %v1765 = vsel %vm1618, %v1318, 0
        %v1768 = vsel %vm1618, %v1323, 0
        %v1771 = vsel %vm1618, %v1328, 0
        %v1774 = vsel %vm1618, %v1333, 0
        %v1777 = vsel %vm1643, %v1616, 0
        %1779 = vmatprep.subr.mxu0 0.0
        %1780 = vmatpush1.msra.mxu0 %v1777
        %1781 = vmatprep.subr.mxu0 0.0
        %1782 = vmatpush1.msra.mxu0 0.0
        %1783 = vmatprep.subr.mxu0 0.0
        %1784 = vmatpush1.msra.mxu0 0.0
        %1785 = vmatprep.subr.mxu0 0.0
        %1786 = vmatpush1.msra.mxu0 0.0
        %1787 = vmatprep.subr.mxu0 0.0
        %1788 = vmatpush1.msra.mxu0 0.0
        %1789 = vmatprep.subr.mxu0 0.0
        %1790 = vmatpush1.msra.mxu0 0.0
        %1791 = vmatprep.subr.mxu0 0.0
        %1792 = vmatpush1.msra.mxu0 0.0
        %1793 = vmatprep.subr.mxu0 0.0
        %1794 = vmatpush1.msra.mxu0 0.0
        %1795 = vmatprep.subr.mxu0 0.0
        %1796 = vmatpush1.msra.mxu0 0.0
        %1797 = vmatprep.subr.mxu0 0.0
        %1798 = vmatpush1.msra.mxu0 0.0
        %1799 = vmatprep.subr.mxu0 0.0
        %1800 = vmatpush1.msra.mxu0 0.0
        %1801 = vmatprep.subr.mxu0 0.0
        %1802 = vmatpush1.msra.mxu0 0.0
        %1803 = vmatprep.subr.mxu0 0.0
        %1804 = vmatpush1.msra.mxu0 0.0
        %1805 = vmatprep.subr.mxu0 0.0
        %1806 = vmatpush1.msra.mxu0 0.0
        %1807 = vmatprep.subr.mxu0 0.0
        %1808 = vmatpush1.msra.mxu0 0.0
        %1809 = vmatprep.subr.mxu0 0.0
        %1810 = vmatpush1.msra.mxu0 0.0
        %1811 = vmatprep.subr.mxu0 0.0
        %1812 = vmatpush1.msra.mxu0 0.0
        %1813 = vmatprep.subr.mxu0 0.0
        %1814 = vmatpush1.msra.mxu0 0.0
        %1815 = vmatprep.subr.mxu0 0.0
        %1816 = vmatpush1.msra.mxu0 0.0
        %1817 = vmatprep.subr.mxu0 0.0
        %1818 = vmatpush1.msra.mxu0 0.0
        %1819 = vmatprep.subr.mxu0 0.0
        %1820 = vmatpush1.msra.mxu0 0.0
        %1821 = vmatprep.subr.mxu0 0.0
        %1822 = vmatpush1.msra.mxu0 0.0
        %1823 = vmatprep.subr.mxu0 0.0
        %1824 = vmatpush1.msra.mxu0 0.0
        %1825 = vmatprep.subr.mxu0 0.0
        %1826 = vmatpush1.msra.mxu0 0.0
        %1827 = vmatprep.subr.mxu0 0.0
        %1828 = vmatpush1.msra.mxu0 0.0
        %1829 = vmatprep.subr.mxu0 0.0
        %1830 = vmatpush1.msra.mxu0 0.0
        %1831 = vmatprep.subr.mxu0 0.0
        %1832 = vmatpush1.msra.mxu0 0.0
        %1833 = vmatprep.subr.mxu0 0.0
        %1834 = vmatpush1.msra.mxu0 0.0
        %1835 = vmatprep.subr.mxu0 0.0
        %1836 = vmatpush1.msra.mxu0 0.0
        %1837 = vmatprep.subr.mxu0 0.0
        %1838 = vmatpush1.msra.mxu0 0.0
        %1839 = vmatprep.subr.mxu0 0.0
        %1840 = vmatpush1.msra.mxu0 0.0
        %1841 = vmatprep.subr.mxu0 0.0
        %1842 = vmatpush1.msra.mxu0 0.0
        %1843 = vmatprep.mubr.f32.mxu0 0.0
        %1844 = vmatmul.mubr.f32.gmra.mrb[0].mxu0 %v1753
        %v1845 = vpop.f32.mrb[0].mxu0
        %v1846 = vadd.f32 %v1714, %v1845
        %v1847 = vpop.f32.mrb[0].mxu0
        %1848 = vmatprep.mubr.f32.mxu0 0.0
        %1849 = vmatmul.mubr.f32.gmra.mrb[0].mxu0 %v1756
        %v1850 = vpop.f32.mrb[0].mxu0
        %v1851 = vadd.f32 %v1719, %v1850
        %v1852 = vpop.f32.mrb[0].mxu0
        %1853 = vmatprep.mubr.f32.mxu0 0.0
        %1854 = vmatmul.mubr.f32.gmra.mrb[0].mxu0 %v1759
        %v1855 = vpop.f32.mrb[0].mxu0
        %v1856 = vadd.f32 %v1724, %v1855
        %v1857 = vpop.f32.mrb[0].mxu0
        %1858 = vmatprep.mubr.f32.mxu0 0.0
        %1859 = vmatmul.mubr.f32.gmra.mrb[0].mxu0 %v1762
        %v1860 = vpop.f32.mrb[0].mxu0
        %v1861 = vadd.f32 %v1729, %v1860
        %v1862 = vpop.f32.mrb[0].mxu0
        %1863 = vmatprep.mubr.f32.mxu0 0.0
        %1864 = vmatmul.mubr.f32.gmra.mrb[0].mxu0 %v1765
        %v1865 = vpop.f32.mrb[0].mxu0
        %v1866 = vadd.f32 %v1734, %v1865
        %v1867 = vpop.f32.mrb[0].mxu0
        %1868 = vmatprep.mubr.f32.mxu0 0.0
        %1869 = vmatmul.mubr.f32.gmra.mrb[0].mxu0 %v1768
        %v1870 = vpop.f32.mrb[0].mxu0
        %v1871 = vadd.f32 %v1739, %v1870
        %v1872 = vpop.f32.mrb[0].mxu0
        %1873 = vmatprep.mubr.f32.mxu0 0.0
        %1874 = vmatmul.mubr.f32.gmra.mrb[0].mxu0 %v1771
        %v1875 = vpop.f32.mrb[0].mxu0
        %v1876 = vadd.f32 %v1744, %v1875
        %v1877 = vpop.f32.mrb[0].mxu0
        %1878 = vmatprep.mubr.f32.mxu0 0.0
        %1879 = vmatmul.mubr.f32.gmra.mrb[0].mxu0 %v1774
        %v1880 = vpop.f32.mrb[0].mxu0
        %v1881 = vadd.f32 %v1749, %v1880
        %v1882 = vpop.f32.mrb[0].mxu0
        %1883 = vdwg.mxu0
        %v1884 = vld [vmem:[%s11 + $0x8] sm:$0xf]
        %v1886 = vsel %vm1618, %v1378, 0
        %v1889 = vsel %vm1618, %v1383, 0
        %v1892 = vsel %vm1618, %v1388, 0
        %v1895 = vsel %vm1618, %v1393, 0
        %v1898 = vsel %vm1618, %v1398, 0
        %v1901 = vsel %vm1618, %v1403, 0
        %v1904 = vsel %vm1618, %v1408, 0
        %v1907 = vsel %vm1618, %v1413, 0
        %v1910 = vsel %vm1643, %v1884, 0
        %1912 = vmatprep.subr.mxu0 0.0
        %1913 = vmatpush1.msra.mxu0 %v1910
        %1914 = vmatprep.subr.mxu0 0.0
        %1915 = vmatpush1.msra.mxu0 0.0
        %1916 = vmatprep.subr.mxu0 0.0
        %1917 = vmatpush1.msra.mxu0 0.0
        %1918 = vmatprep.subr.mxu0 0.0
        %1919 = vmatpush1.msra.mxu0 0.0
        %1920 = vmatprep.subr.mxu0 0.0
        %1921 = vmatpush1.msra.mxu0 0.0
        %1922 = vmatprep.subr.mxu0 0.0
        %1923 = vmatpush1.msra.mxu0 0.0
        %1924 = vmatprep.subr.mxu0 0.0
        %1925 = vmatpush1.msra.mxu0 0.0
        %1926 = vmatprep.subr.mxu0 0.0
        %1927 = vmatpush1.msra.mxu0 0.0
        %1928 = vmatprep.subr.mxu0 0.0
        %1929 = vmatpush1.msra.mxu0 0.0
        %1930 = vmatprep.subr.mxu0 0.0
        %1931 = vmatpush1.msra.mxu0 0.0
        %1932 = vmatprep.subr.mxu0 0.0
        %1933 = vmatpush1.msra.mxu0 0.0
        %1934 = vmatprep.subr.mxu0 0.0
        %1935 = vmatpush1.msra.mxu0 0.0
        %1936 = vmatprep.subr.mxu0 0.0
        %1937 = vmatpush1.msra.mxu0 0.0
        %1938 = vmatprep.subr.mxu0 0.0
        %1939 = vmatpush1.msra.mxu0 0.0
        %1940 = vmatprep.subr.mxu0 0.0
        %1941 = vmatpush1.msra.mxu0 0.0
        %1942 = vmatprep.subr.mxu0 0.0
        %1943 = vmatpush1.msra.mxu0 0.0
        %1944 = vmatprep.subr.mxu0 0.0
        %1945 = vmatpush1.msra.mxu0 0.0
        %1946 = vmatprep.subr.mxu0 0.0
        %1947 = vmatpush1.msra.mxu0 0.0
        %1948 = vmatprep.subr.mxu0 0.0
        %1949 = vmatpush1.msra.mxu0 0.0
        %1950 = vmatprep.subr.mxu0 0.0
        %1951 = vmatpush1.msra.mxu0 0.0
        %1952 = vmatprep.subr.mxu0 0.0
        %1953 = vmatpush1.msra.mxu0 0.0
        %1954 = vmatprep.subr.mxu0 0.0
        %1955 = vmatpush1.msra.mxu0 0.0
        %1956 = vmatprep.subr.mxu0 0.0
        %1957 = vmatpush1.msra.mxu0 0.0
        %1958 = vmatprep.subr.mxu0 0.0
        %1959 = vmatpush1.msra.mxu0 0.0
        %1960 = vmatprep.subr.mxu0 0.0
        %1961 = vmatpush1.msra.mxu0 0.0
        %1962 = vmatprep.subr.mxu0 0.0
        %1963 = vmatpush1.msra.mxu0 0.0
        %1964 = vmatprep.subr.mxu0 0.0
        %1965 = vmatpush1.msra.mxu0 0.0
        %1966 = vmatprep.subr.mxu0 0.0
        %1967 = vmatpush1.msra.mxu0 0.0
        %1968 = vmatprep.subr.mxu0 0.0
        %1969 = vmatpush1.msra.mxu0 0.0
        %1970 = vmatprep.subr.mxu0 0.0
        %1971 = vmatpush1.msra.mxu0 0.0
        %1972 = vmatprep.subr.mxu0 0.0
        %1973 = vmatpush1.msra.mxu0 0.0
        %1974 = vmatprep.subr.mxu0 0.0
        %1975 = vmatpush1.msra.mxu0 0.0
        %1976 = vmatprep.mubr.f32.mxu0 0.0
        %1977 = vmatmul.mubr.f32.gmra.mrb[0].mxu0 %v1886
        %v1978 = vpop.f32.mrb[0].mxu0
        %v1979 = vadd.f32 0.0, %v1978
        %v1980 = vpop.f32.mrb[0].mxu0
        %1981 = vmatprep.mubr.f32.mxu0 0.0
        %1982 = vmatmul.mubr.f32.gmra.mrb[0].mxu0 %v1889
        %v1983 = vpop.f32.mrb[0].mxu0
        %v1984 = vadd.f32 0.0, %v1983
        %v1985 = vpop.f32.mrb[0].mxu0
        %1986 = vmatprep.mubr.f32.mxu0 0.0
        %1987 = vmatmul.mubr.f32.gmra.mrb[0].mxu0 %v1892
        %v1988 = vpop.f32.mrb[0].mxu0
        %v1989 = vadd.f32 0.0, %v1988
        %v1990 = vpop.f32.mrb[0].mxu0
        %1991 = vmatprep.mubr.f32.mxu0 0.0
        %1992 = vmatmul.mubr.f32.gmra.mrb[0].mxu0 %v1895
        %v1993 = vpop.f32.mrb[0].mxu0
        %v1994 = vadd.f32 0.0, %v1993
        %v1995 = vpop.f32.mrb[0].mxu0
        %1996 = vmatprep.mubr.f32.mxu0 0.0
        %1997 = vmatmul.mubr.f32.gmra.mrb[0].mxu0 %v1898
        %v1998 = vpop.f32.mrb[0].mxu0
        %v1999 = vadd.f32 0.0, %v1998
        %v2000 = vpop.f32.mrb[0].mxu0
        %2001 = vmatprep.mubr.f32.mxu0 0.0
        %2002 = vmatmul.mubr.f32.gmra.mrb[0].mxu0 %v1901
        %v2003 = vpop.f32.mrb[0].mxu0
        %v2004 = vadd.f32 0.0, %v2003
        %v2005 = vpop.f32.mrb[0].mxu0
        %2006 = vmatprep.mubr.f32.mxu0 0.0
        %2007 = vmatmul.mubr.f32.gmra.mrb[0].mxu0 %v1904
        %v2008 = vpop.f32.mrb[0].mxu0
        %v2009 = vadd.f32 0.0, %v2008
        %v2010 = vpop.f32.mrb[0].mxu0
        %2011 = vmatprep.mubr.f32.mxu0 0.0
        %2012 = vmatmul.mubr.f32.gmra.mrb[0].mxu0 %v1907
        %v2013 = vpop.f32.mrb[0].mxu0
        %v2014 = vadd.f32 0.0, %v2013
        %v2015 = vpop.f32.mrb[0].mxu0
        %2016 = vdwg.mxu0
        %v2017 = vadd.f32 %v1846, %v1979
        %v2018 = vadd.f32 %v1851, %v1984
        %v2019 = vadd.f32 %v1856, %v1989
        %v2020 = vadd.f32 %v1861, %v1994
        %v2021 = vadd.f32 %v1866, %v1999
        %v2022 = vadd.f32 %v1871, %v2004
        %v2023 = vadd.f32 %v1876, %v2009
        %v2024 = vadd.f32 %v1881, %v2014
        %v2025 = vld [vmem:[%s11 + $0xc] sm:$0xf]
        %v2027 = vsel %vm1618, %v1418, 0
        %v2030 = vsel %vm1618, %v1423, 0
        %v2033 = vsel %vm1618, %v1428, 0
        %v2036 = vsel %vm1618, %v1433, 0
        %v2039 = vsel %vm1618, %v1438, 0
        %v2042 = vsel %vm1618, %v1443, 0
        %v2045 = vsel %vm1618, %v1448, 0
        %v2048 = vsel %vm1618, %v1453, 0
        %v2051 = vsel %vm1643, %v2025, 0
        %2053 = vmatprep.subr.mxu0 0.0
        %2054 = vmatpush1.msra.mxu0 %v2051
        %2055 = vmatprep.subr.mxu0 0.0
        %2056 = vmatpush1.msra.mxu0 0.0
        %2057 = vmatprep.subr.mxu0 0.0
        %2058 = vmatpush1.msra.mxu0 0.0
        %2059 = vmatprep.subr.mxu0 0.0
        %2060 = vmatpush1.msra.mxu0 0.0
        %2061 = vmatprep.subr.mxu0 0.0
        %2062 = vmatpush1.msra.mxu0 0.0
        %2063 = vmatprep.subr.mxu0 0.0
        %2064 = vmatpush1.msra.mxu0 0.0
        %2065 = vmatprep.subr.mxu0 0.0
        %2066 = vmatpush1.msra.mxu0 0.0
        %2067 = vmatprep.subr.mxu0 0.0
        %2068 = vmatpush1.msra.mxu0 0.0
        %2069 = vmatprep.subr.mxu0 0.0
        %2070 = vmatpush1.msra.mxu0 0.0
        %2071 = vmatprep.subr.mxu0 0.0
        %2072 = vmatpush1.msra.mxu0 0.0
        %2073 = vmatprep.subr.mxu0 0.0
        %2074 = vmatpush1.msra.mxu0 0.0
        %2075 = vmatprep.subr.mxu0 0.0
        %2076 = vmatpush1.msra.mxu0 0.0
        %2077 = vmatprep.subr.mxu0 0.0
        %2078 = vmatpush1.msra.mxu0 0.0
        %2079 = vmatprep.subr.mxu0 0.0
        %2080 = vmatpush1.msra.mxu0 0.0
        %2081 = vmatprep.subr.mxu0 0.0
        %2082 = vmatpush1.msra.mxu0 0.0
        %2083 = vmatprep.subr.mxu0 0.0
        %2084 = vmatpush1.msra.mxu0 0.0
        %2085 = vmatprep.subr.mxu0 0.0
        %2086 = vmatpush1.msra.mxu0 0.0
        %2087 = vmatprep.subr.mxu0 0.0
        %2088 = vmatpush1.msra.mxu0 0.0
        %2089 = vmatprep.subr.mxu0 0.0
        %2090 = vmatpush1.msra.mxu0 0.0
        %2091 = vmatprep.subr.mxu0 0.0
        %2092 = vmatpush1.msra.mxu0 0.0
        %2093 = vmatprep.subr.mxu0 0.0
        %2094 = vmatpush1.msra.mxu0 0.0
        %2095 = vmatprep.subr.mxu0 0.0
        %2096 = vmatpush1.msra.mxu0 0.0
        %2097 = vmatprep.subr.mxu0 0.0
        %2098 = vmatpush1.msra.mxu0 0.0
        %2099 = vmatprep.subr.mxu0 0.0
        %2100 = vmatpush1.msra.mxu0 0.0
        %2101 = vmatprep.subr.mxu0 0.0
        %2102 = vmatpush1.msra.mxu0 0.0
        %2103 = vmatprep.subr.mxu0 0.0
        %2104 = vmatpush1.msra.mxu0 0.0
        %2105 = vmatprep.subr.mxu0 0.0
        %2106 = vmatpush1.msra.mxu0 0.0
        %2107 = vmatprep.subr.mxu0 0.0
        %2108 = vmatpush1.msra.mxu0 0.0
        %2109 = vmatprep.subr.mxu0 0.0
        %2110 = vmatpush1.msra.mxu0 0.0
        %2111 = vmatprep.subr.mxu0 0.0
        %2112 = vmatpush1.msra.mxu0 0.0
        %2113 = vmatprep.subr.mxu0 0.0
        %2114 = vmatpush1.msra.mxu0 0.0
        %2115 = vmatprep.subr.mxu0 0.0
        %2116 = vmatpush1.msra.mxu0 0.0
        %2117 = vmatprep.mubr.f32.mxu0 0.0
        %2118 = vmatmul.mubr.f32.gmra.mrb[0].mxu0 %v2027
        %v2119 = vpop.f32.mrb[0].mxu0
        %v2120 = vadd.f32 0.0, %v2119
        %v2121 = vpop.f32.mrb[0].mxu0
        %2122 = vmatprep.mubr.f32.mxu0 0.0
        %2123 = vmatmul.mubr.f32.gmra.mrb[0].mxu0 %v2030
        %v2124 = vpop.f32.mrb[0].mxu0
        %v2125 = vadd.f32 0.0, %v2124
        %v2126 = vpop.f32.mrb[0].mxu0
        %2127 = vmatprep.mubr.f32.mxu0 0.0
        %2128 = vmatmul.mubr.f32.gmra.mrb[0].mxu0 %v2033
        %v2129 = vpop.f32.mrb[0].mxu0
        %v2130 = vadd.f32 0.0, %v2129
        %v2131 = vpop.f32.mrb[0].mxu0
        %2132 = vmatprep.mubr.f32.mxu0 0.0
        %2133 = vmatmul.mubr.f32.gmra.mrb[0].mxu0 %v2036
        %v2134 = vpop.f32.mrb[0].mxu0
        %v2135 = vadd.f32 0.0, %v2134
        %v2136 = vpop.f32.mrb[0].mxu0
        %2137 = vmatprep.mubr.f32.mxu0 0.0
        %2138 = vmatmul.mubr.f32.gmra.mrb[0].mxu0 %v2039
        %v2139 = vpop.f32.mrb[0].mxu0
        %v2140 = vadd.f32 0.0, %v2139
        %v2141 = vpop.f32.mrb[0].mxu0
        %2142 = vmatprep.mubr.f32.mxu0 0.0
        %2143 = vmatmul.mubr.f32.gmra.mrb[0].mxu0 %v2042
        %v2144 = vpop.f32.mrb[0].mxu0
        %v2145 = vadd.f32 0.0, %v2144
        %v2146 = vpop.f32.mrb[0].mxu0
        %2147 = vmatprep.mubr.f32.mxu0 0.0
        %2148 = vmatmul.mubr.f32.gmra.mrb[0].mxu0 %v2045
        %v2149 = vpop.f32.mrb[0].mxu0
        %v2150 = vadd.f32 0.0, %v2149
        %v2151 = vpop.f32.mrb[0].mxu0
        %2152 = vmatprep.mubr.f32.mxu0 0.0
        %2153 = vmatmul.mubr.f32.gmra.mrb[0].mxu0 %v2048
        %v2154 = vpop.f32.mrb[0].mxu0
        %v2155 = vadd.f32 0.0, %v2154
        %v2156 = vpop.f32.mrb[0].mxu0
        %2157 = vdwg.mxu0
        %v2158 = vadd.f32 %v2017, %v2120
        %v2159 = vadd.f32 %v2018, %v2125
        %v2160 = vadd.f32 %v2019, %v2130
        %v2161 = vadd.f32 %v2020, %v2135
        %v2162 = vadd.f32 %v2021, %v2140
        %v2163 = vadd.f32 %v2022, %v2145
        %v2164 = vadd.f32 %v2023, %v2150
        %v2165 = vadd.f32 %v2024, %v2155
        %v2166 = vld [vmem:[%s11 + $0x10] sm:$0xf]
        %v2168 = vsel %vm1618, %v1458, 0
        %v2171 = vsel %vm1618, %v1463, 0
        %v2174 = vsel %vm1618, %v1468, 0
        %v2177 = vsel %vm1618, %v1473, 0
        %v2180 = vsel %vm1618, %v1478, 0
        %v2183 = vsel %vm1618, %v1483, 0
        %v2186 = vsel %vm1618, %v1488, 0
        %v2189 = vsel %vm1618, %v1493, 0
        %v2192 = vsel %vm1643, %v2166, 0
        %2194 = vmatprep.subr.mxu0 0.0
        %2195 = vmatpush1.msra.mxu0 %v2192
        %2196 = vmatprep.subr.mxu0 0.0
        %2197 = vmatpush1.msra.mxu0 0.0
        %2198 = vmatprep.subr.mxu0 0.0
        %2199 = vmatpush1.msra.mxu0 0.0
        %2200 = vmatprep.subr.mxu0 0.0
        %2201 = vmatpush1.msra.mxu0 0.0
        %2202 = vmatprep.subr.mxu0 0.0
        %2203 = vmatpush1.msra.mxu0 0.0
        %2204 = vmatprep.subr.mxu0 0.0
        %2205 = vmatpush1.msra.mxu0 0.0
        %2206 = vmatprep.subr.mxu0 0.0
        %2207 = vmatpush1.msra.mxu0 0.0
        %2208 = vmatprep.subr.mxu0 0.0
        %2209 = vmatpush1.msra.mxu0 0.0
        %2210 = vmatprep.subr.mxu0 0.0
        %2211 = vmatpush1.msra.mxu0 0.0
        %2212 = vmatprep.subr.mxu0 0.0
        %2213 = vmatpush1.msra.mxu0 0.0
        %2214 = vmatprep.subr.mxu0 0.0
        %2215 = vmatpush1.msra.mxu0 0.0
        %2216 = vmatprep.subr.mxu0 0.0
        %2217 = vmatpush1.msra.mxu0 0.0
        %2218 = vmatprep.subr.mxu0 0.0
        %2219 = vmatpush1.msra.mxu0 0.0
        %2220 = vmatprep.subr.mxu0 0.0
        %2221 = vmatpush1.msra.mxu0 0.0
        %2222 = vmatprep.subr.mxu0 0.0
        %2223 = vmatpush1.msra.mxu0 0.0
        %2224 = vmatprep.subr.mxu0 0.0
        %2225 = vmatpush1.msra.mxu0 0.0
        %2226 = vmatprep.subr.mxu0 0.0
        %2227 = vmatpush1.msra.mxu0 0.0
        %2228 = vmatprep.subr.mxu0 0.0
        %2229 = vmatpush1.msra.mxu0 0.0
        %2230 = vmatprep.subr.mxu0 0.0
        %2231 = vmatpush1.msra.mxu0 0.0
        %2232 = vmatprep.subr.mxu0 0.0
        %2233 = vmatpush1.msra.mxu0 0.0
        %2234 = vmatprep.subr.mxu0 0.0
        %2235 = vmatpush1.msra.mxu0 0.0
        %2236 = vmatprep.subr.mxu0 0.0
        %2237 = vmatpush1.msra.mxu0 0.0
        %2238 = vmatprep.subr.mxu0 0.0
        %2239 = vmatpush1.msra.mxu0 0.0
        %2240 = vmatprep.subr.mxu0 0.0
        %2241 = vmatpush1.msra.mxu0 0.0
        %2242 = vmatprep.subr.mxu0 0.0
        %2243 = vmatpush1.msra.mxu0 0.0
        %2244 = vmatprep.subr.mxu0 0.0
        %2245 = vmatpush1.msra.mxu0 0.0
        %2246 = vmatprep.subr.mxu0 0.0
        %2247 = vmatpush1.msra.mxu0 0.0
        %2248 = vmatprep.subr.mxu0 0.0
        %2249 = vmatpush1.msra.mxu0 0.0
        %2250 = vmatprep.subr.mxu0 0.0
        %2251 = vmatpush1.msra.mxu0 0.0
        %2252 = vmatprep.subr.mxu0 0.0
        %2253 = vmatpush1.msra.mxu0 0.0
        %2254 = vmatprep.subr.mxu0 0.0
        %2255 = vmatpush1.msra.mxu0 0.0
        %2256 = vmatprep.subr.mxu0 0.0
        %2257 = vmatpush1.msra.mxu0 0.0
        %2258 = vmatprep.mubr.f32.mxu0 0.0
        %2259 = vmatmul.mubr.f32.gmra.mrb[0].mxu0 %v2168
        %v2260 = vpop.f32.mrb[0].mxu0
        %v2261 = vadd.f32 0.0, %v2260
        %v2262 = vpop.f32.mrb[0].mxu0
        %2263 = vmatprep.mubr.f32.mxu0 0.0
        %2264 = vmatmul.mubr.f32.gmra.mrb[0].mxu0 %v2171
        %v2265 = vpop.f32.mrb[0].mxu0
        %v2266 = vadd.f32 0.0, %v2265
        %v2267 = vpop.f32.mrb[0].mxu0
        %2268 = vmatprep.mubr.f32.mxu0 0.0
        %2269 = vmatmul.mubr.f32.gmra.mrb[0].mxu0 %v2174
        %v2270 = vpop.f32.mrb[0].mxu0
        %v2271 = vadd.f32 0.0, %v2270
        %v2272 = vpop.f32.mrb[0].mxu0
        %2273 = vmatprep.mubr.f32.mxu0 0.0
        %2274 = vmatmul.mubr.f32.gmra.mrb[0].mxu0 %v2177
        %v2275 = vpop.f32.mrb[0].mxu0
        %v2276 = vadd.f32 0.0, %v2275
        %v2277 = vpop.f32.mrb[0].mxu0
        %2278 = vmatprep.mubr.f32.mxu0 0.0
        %2279 = vmatmul.mubr.f32.gmra.mrb[0].mxu0 %v2180
        %v2280 = vpop.f32.mrb[0].mxu0
        %v2281 = vadd.f32 0.0, %v2280
        %v2282 = vpop.f32.mrb[0].mxu0
        %2283 = vmatprep.mubr.f32.mxu0 0.0
        %2284 = vmatmul.mubr.f32.gmra.mrb[0].mxu0 %v2183
        %v2285 = vpop.f32.mrb[0].mxu0
        %v2286 = vadd.f32 0.0, %v2285
        %v2287 = vpop.f32.mrb[0].mxu0
        %2288 = vmatprep.mubr.f32.mxu0 0.0
        %2289 = vmatmul.mubr.f32.gmra.mrb[0].mxu0 %v2186
        %v2290 = vpop.f32.mrb[0].mxu0
        %v2291 = vadd.f32 0.0, %v2290
        %v2292 = vpop.f32.mrb[0].mxu0
        %2293 = vmatprep.mubr.f32.mxu0 0.0
        %2294 = vmatmul.mubr.f32.gmra.mrb[0].mxu0 %v2189
        %v2295 = vpop.f32.mrb[0].mxu0
        %v2296 = vadd.f32 0.0, %v2295
        %v2297 = vpop.f32.mrb[0].mxu0
        %2298 = vdwg.mxu0
        %v2299 = vadd.f32 %v2158, %v2261
        %v2300 = vadd.f32 %v2159, %v2266
        %v2301 = vadd.f32 %v2160, %v2271
        %v2302 = vadd.f32 %v2161, %v2276
        %v2303 = vadd.f32 %v2162, %v2281
        %v2304 = vadd.f32 %v2163, %v2286
        %v2305 = vadd.f32 %v2164, %v2291
        %v2306 = vadd.f32 %v2165, %v2296
        %v2307 = vld [vmem:[%s11 + $0x14] sm:$0xf]
        %v2309 = vsel %vm1618, %v1498, 0
        %v2312 = vsel %vm1618, %v1503, 0
        %v2315 = vsel %vm1618, %v1508, 0
        %v2318 = vsel %vm1618, %v1513, 0
        %v2321 = vsel %vm1618, %v1518, 0
        %v2324 = vsel %vm1618, %v1523, 0
        %v2327 = vsel %vm1618, %v1528, 0
        %v2330 = vsel %vm1618, %v1533, 0
        %v2333 = vsel %vm1643, %v2307, 0
        %2335 = vmatprep.subr.mxu0 0.0
        %2336 = vmatpush1.msra.mxu0 %v2333
        %2337 = vmatprep.subr.mxu0 0.0
        %2338 = vmatpush1.msra.mxu0 0.0
        %2339 = vmatprep.subr.mxu0 0.0
        %2340 = vmatpush1.msra.mxu0 0.0
        %2341 = vmatprep.subr.mxu0 0.0
        %2342 = vmatpush1.msra.mxu0 0.0
        %2343 = vmatprep.subr.mxu0 0.0
        %2344 = vmatpush1.msra.mxu0 0.0
        %2345 = vmatprep.subr.mxu0 0.0
        %2346 = vmatpush1.msra.mxu0 0.0
        %2347 = vmatprep.subr.mxu0 0.0
        %2348 = vmatpush1.msra.mxu0 0.0
        %2349 = vmatprep.subr.mxu0 0.0
        %2350 = vmatpush1.msra.mxu0 0.0
        %2351 = vmatprep.subr.mxu0 0.0
        %2352 = vmatpush1.msra.mxu0 0.0
        %2353 = vmatprep.subr.mxu0 0.0
        %2354 = vmatpush1.msra.mxu0 0.0
        %2355 = vmatprep.subr.mxu0 0.0
        %2356 = vmatpush1.msra.mxu0 0.0
        %2357 = vmatprep.subr.mxu0 0.0
        %2358 = vmatpush1.msra.mxu0 0.0
        %2359 = vmatprep.subr.mxu0 0.0
        %2360 = vmatpush1.msra.mxu0 0.0
        %2361 = vmatprep.subr.mxu0 0.0
        %2362 = vmatpush1.msra.mxu0 0.0
        %2363 = vmatprep.subr.mxu0 0.0
        %2364 = vmatpush1.msra.mxu0 0.0
        %2365 = vmatprep.subr.mxu0 0.0
        %2366 = vmatpush1.msra.mxu0 0.0
        %2367 = vmatprep.subr.mxu0 0.0
        %2368 = vmatpush1.msra.mxu0 0.0
        %2369 = vmatprep.subr.mxu0 0.0
        %2370 = vmatpush1.msra.mxu0 0.0
        %2371 = vmatprep.subr.mxu0 0.0
        %2372 = vmatpush1.msra.mxu0 0.0
        %2373 = vmatprep.subr.mxu0 0.0
        %2374 = vmatpush1.msra.mxu0 0.0
        %2375 = vmatprep.subr.mxu0 0.0
        %2376 = vmatpush1.msra.mxu0 0.0
        %2377 = vmatprep.subr.mxu0 0.0
        %2378 = vmatpush1.msra.mxu0 0.0
        %2379 = vmatprep.subr.mxu0 0.0
        %2380 = vmatpush1.msra.mxu0 0.0
        %2381 = vmatprep.subr.mxu0 0.0
        %2382 = vmatpush1.msra.mxu0 0.0
        %2383 = vmatprep.subr.mxu0 0.0
        %2384 = vmatpush1.msra.mxu0 0.0
        %2385 = vmatprep.subr.mxu0 0.0
        %2386 = vmatpush1.msra.mxu0 0.0
        %2387 = vmatprep.subr.mxu0 0.0
        %2388 = vmatpush1.msra.mxu0 0.0
        %2389 = vmatprep.subr.mxu0 0.0
        %2390 = vmatpush1.msra.mxu0 0.0
        %2391 = vmatprep.subr.mxu0 0.0
        %2392 = vmatpush1.msra.mxu0 0.0
        %2393 = vmatprep.subr.mxu0 0.0
        %2394 = vmatpush1.msra.mxu0 0.0
        %2395 = vmatprep.subr.mxu0 0.0
        %2396 = vmatpush1.msra.mxu0 0.0
        %2397 = vmatprep.subr.mxu0 0.0
        %2398 = vmatpush1.msra.mxu0 0.0
        %2399 = vmatprep.mubr.f32.mxu0 0.0
        %2400 = vmatmul.mubr.f32.gmra.mrb[0].mxu0 %v2309
        %v2401 = vpop.f32.mrb[0].mxu0
        %v2402 = vadd.f32 0.0, %v2401
        %v2403 = vpop.f32.mrb[0].mxu0
        %2404 = vmatprep.mubr.f32.mxu0 0.0
        %2405 = vmatmul.mubr.f32.gmra.mrb[0].mxu0 %v2312
        %v2406 = vpop.f32.mrb[0].mxu0
        %v2407 = vadd.f32 0.0, %v2406
        %v2408 = vpop.f32.mrb[0].mxu0
        %2409 = vmatprep.mubr.f32.mxu0 0.0
        %2410 = vmatmul.mubr.f32.gmra.mrb[0].mxu0 %v2315
        %v2411 = vpop.f32.mrb[0].mxu0
        %v2412 = vadd.f32 0.0, %v2411
        %v2413 = vpop.f32.mrb[0].mxu0
        %2414 = vmatprep.mubr.f32.mxu0 0.0
        %2415 = vmatmul.mubr.f32.gmra.mrb[0].mxu0 %v2318
        %v2416 = vpop.f32.mrb[0].mxu0
        %v2417 = vadd.f32 0.0, %v2416
        %v2418 = vpop.f32.mrb[0].mxu0
        %2419 = vmatprep.mubr.f32.mxu0 0.0
        %2420 = vmatmul.mubr.f32.gmra.mrb[0].mxu0 %v2321
        %v2421 = vpop.f32.mrb[0].mxu0
        %v2422 = vadd.f32 0.0, %v2421
        %v2423 = vpop.f32.mrb[0].mxu0
        %2424 = vmatprep.mubr.f32.mxu0 0.0
        %2425 = vmatmul.mubr.f32.gmra.mrb[0].mxu0 %v2324
        %v2426 = vpop.f32.mrb[0].mxu0
        %v2427 = vadd.f32 0.0, %v2426
        %v2428 = vpop.f32.mrb[0].mxu0
        %2429 = vmatprep.mubr.f32.mxu0 0.0
        %2430 = vmatmul.mubr.f32.gmra.mrb[0].mxu0 %v2327
        %v2431 = vpop.f32.mrb[0].mxu0
        %v2432 = vadd.f32 0.0, %v2431
        %v2433 = vpop.f32.mrb[0].mxu0
        %2434 = vmatprep.mubr.f32.mxu0 0.0
        %2435 = vmatmul.mubr.f32.gmra.mrb[0].mxu0 %v2330
        %v2436 = vpop.f32.mrb[0].mxu0
        %v2437 = vadd.f32 0.0, %v2436
        %v2438 = vpop.f32.mrb[0].mxu0
        %2439 = vdwg.mxu0
        %v2440 = vadd.f32 %v2299, %v2402
        %v2441 = vadd.f32 %v2300, %v2407
        %v2442 = vadd.f32 %v2301, %v2412
        %v2443 = vadd.f32 %v2302, %v2417
        %v2444 = vadd.f32 %v2303, %v2422
        %v2445 = vadd.f32 %v2304, %v2427
        %v2446 = vadd.f32 %v2305, %v2432
        %v2447 = vadd.f32 %v2306, %v2437
        %v2448 = vld [vmem:[%s11 + $0x18] sm:$0xf]
        %v2450 = vsel %vm1618, %v1538, 0
        %v2453 = vsel %vm1618, %v1543, 0
        %v2456 = vsel %vm1618, %v1548, 0
        %v2459 = vsel %vm1618, %v1553, 0
        %v2462 = vsel %vm1618, %v1558, 0
        %v2465 = vsel %vm1618, %v1563, 0
        %v2468 = vsel %vm1618, %v1568, 0
        %v2471 = vsel %vm1618, %v1573, 0
        %v2474 = vsel %vm1643, %v2448, 0
        %2476 = vmatprep.subr.mxu0 0.0
        %2477 = vmatpush1.msra.mxu0 %v2474
        %2478 = vmatprep.subr.mxu0 0.0
        %2479 = vmatpush1.msra.mxu0 0.0
        %2480 = vmatprep.subr.mxu0 0.0
        %2481 = vmatpush1.msra.mxu0 0.0
        %2482 = vmatprep.subr.mxu0 0.0
        %2483 = vmatpush1.msra.mxu0 0.0
        %2484 = vmatprep.subr.mxu0 0.0
        %2485 = vmatpush1.msra.mxu0 0.0
        %2486 = vmatprep.subr.mxu0 0.0
        %2487 = vmatpush1.msra.mxu0 0.0
        %2488 = vmatprep.subr.mxu0 0.0
        %2489 = vmatpush1.msra.mxu0 0.0
        %2490 = vmatprep.subr.mxu0 0.0
        %2491 = vmatpush1.msra.mxu0 0.0
        %2492 = vmatprep.subr.mxu0 0.0
        %2493 = vmatpush1.msra.mxu0 0.0
        %2494 = vmatprep.subr.mxu0 0.0
        %2495 = vmatpush1.msra.mxu0 0.0
        %2496 = vmatprep.subr.mxu0 0.0
        %2497 = vmatpush1.msra.mxu0 0.0
        %2498 = vmatprep.subr.mxu0 0.0
        %2499 = vmatpush1.msra.mxu0 0.0
        %2500 = vmatprep.subr.mxu0 0.0
        %2501 = vmatpush1.msra.mxu0 0.0
        %2502 = vmatprep.subr.mxu0 0.0
        %2503 = vmatpush1.msra.mxu0 0.0
        %2504 = vmatprep.subr.mxu0 0.0
        %2505 = vmatpush1.msra.mxu0 0.0
        %2506 = vmatprep.subr.mxu0 0.0
        %2507 = vmatpush1.msra.mxu0 0.0
        %2508 = vmatprep.subr.mxu0 0.0
        %2509 = vmatpush1.msra.mxu0 0.0
        %2510 = vmatprep.subr.mxu0 0.0
        %2511 = vmatpush1.msra.mxu0 0.0
        %2512 = vmatprep.subr.mxu0 0.0
        %2513 = vmatpush1.msra.mxu0 0.0
        %2514 = vmatprep.subr.mxu0 0.0
        %2515 = vmatpush1.msra.mxu0 0.0
        %2516 = vmatprep.subr.mxu0 0.0
        %2517 = vmatpush1.msra.mxu0 0.0
        %2518 = vmatprep.subr.mxu0 0.0
        %2519 = vmatpush1.msra.mxu0 0.0
        %2520 = vmatprep.subr.mxu0 0.0
        %2521 = vmatpush1.msra.mxu0 0.0
        %2522 = vmatprep.subr.mxu0 0.0
        %2523 = vmatpush1.msra.mxu0 0.0
        %2524 = vmatprep.subr.mxu0 0.0
        %2525 = vmatpush1.msra.mxu0 0.0
        %2526 = vmatprep.subr.mxu0 0.0
        %2527 = vmatpush1.msra.mxu0 0.0
        %2528 = vmatprep.subr.mxu0 0.0
        %2529 = vmatpush1.msra.mxu0 0.0
        %2530 = vmatprep.subr.mxu0 0.0
        %2531 = vmatpush1.msra.mxu0 0.0
        %2532 = vmatprep.subr.mxu0 0.0
        %2533 = vmatpush1.msra.mxu0 0.0
        %2534 = vmatprep.subr.mxu0 0.0
        %2535 = vmatpush1.msra.mxu0 0.0
        %2536 = vmatprep.subr.mxu0 0.0
        %2537 = vmatpush1.msra.mxu0 0.0
        %2538 = vmatprep.subr.mxu0 0.0
        %2539 = vmatpush1.msra.mxu0 0.0
        %2540 = vmatprep.mubr.f32.mxu0 0.0
        %2541 = vmatmul.mubr.f32.gmra.mrb[0].mxu0 %v2450
        %v2542 = vpop.f32.mrb[0].mxu0
        %v2543 = vadd.f32 0.0, %v2542
        %v2544 = vpop.f32.mrb[0].mxu0
        %2545 = vmatprep.mubr.f32.mxu0 0.0
        %2546 = vmatmul.mubr.f32.gmra.mrb[0].mxu0 %v2453
        %v2547 = vpop.f32.mrb[0].mxu0
        %v2548 = vadd.f32 0.0, %v2547
        %v2549 = vpop.f32.mrb[0].mxu0
        %2550 = vmatprep.mubr.f32.mxu0 0.0
        %2551 = vmatmul.mubr.f32.gmra.mrb[0].mxu0 %v2456
        %v2552 = vpop.f32.mrb[0].mxu0
        %v2553 = vadd.f32 0.0, %v2552
        %v2554 = vpop.f32.mrb[0].mxu0
        %2555 = vmatprep.mubr.f32.mxu0 0.0
        %2556 = vmatmul.mubr.f32.gmra.mrb[0].mxu0 %v2459
        %v2557 = vpop.f32.mrb[0].mxu0
        %v2558 = vadd.f32 0.0, %v2557
        %v2559 = vpop.f32.mrb[0].mxu0
        %2560 = vmatprep.mubr.f32.mxu0 0.0
        %2561 = vmatmul.mubr.f32.gmra.mrb[0].mxu0 %v2462
        %v2562 = vpop.f32.mrb[0].mxu0
        %v2563 = vadd.f32 0.0, %v2562
        %v2564 = vpop.f32.mrb[0].mxu0
        %2565 = vmatprep.mubr.f32.mxu0 0.0
        %2566 = vmatmul.mubr.f32.gmra.mrb[0].mxu0 %v2465
        %v2567 = vpop.f32.mrb[0].mxu0
        %v2568 = vadd.f32 0.0, %v2567
        %v2569 = vpop.f32.mrb[0].mxu0
        %2570 = vmatprep.mubr.f32.mxu0 0.0
        %2571 = vmatmul.mubr.f32.gmra.mrb[0].mxu0 %v2468
        %v2572 = vpop.f32.mrb[0].mxu0
        %v2573 = vadd.f32 0.0, %v2572
        %v2574 = vpop.f32.mrb[0].mxu0
        %2575 = vmatprep.mubr.f32.mxu0 0.0
        %2576 = vmatmul.mubr.f32.gmra.mrb[0].mxu0 %v2471
        %v2577 = vpop.f32.mrb[0].mxu0
        %v2578 = vadd.f32 0.0, %v2577
        %v2579 = vpop.f32.mrb[0].mxu0
        %2580 = vdwg.mxu0
        %v2581 = vadd.f32 %v2440, %v2543
        %v2582 = vadd.f32 %v2441, %v2548
        %v2583 = vadd.f32 %v2442, %v2553
        %v2584 = vadd.f32 %v2443, %v2558
        %v2585 = vadd.f32 %v2444, %v2563
        %v2586 = vadd.f32 %v2445, %v2568
        %v2587 = vadd.f32 %v2446, %v2573
        %v2588 = vadd.f32 %v2447, %v2578
        %v2589 = vld [vmem:[%s11 + $0x1c] sm:$0xf]
        %v2591 = vsel %vm1618, %v1578, 0
        %v2594 = vsel %vm1618, %v1583, 0
        %v2597 = vsel %vm1618, %v1588, 0
        %v2600 = vsel %vm1618, %v1593, 0
        %v2603 = vsel %vm1618, %v1598, 0
        %v2606 = vsel %vm1618, %v1603, 0
        %v2609 = vsel %vm1618, %v1608, 0
        %v2612 = vsel %vm1618, %v1613, 0
        %v2615 = vsel %vm1643, %v2589, 0
        %2617 = vmatprep.subr.mxu0 0.0
        %2618 = vmatpush1.msra.mxu0 %v2615
        %2619 = vmatprep.subr.mxu0 0.0
        %2620 = vmatpush1.msra.mxu0 0.0
        %2621 = vmatprep.subr.mxu0 0.0
        %2622 = vmatpush1.msra.mxu0 0.0
        %2623 = vmatprep.subr.mxu0 0.0
        %2624 = vmatpush1.msra.mxu0 0.0
        %2625 = vmatprep.subr.mxu0 0.0
        %2626 = vmatpush1.msra.mxu0 0.0
        %2627 = vmatprep.subr.mxu0 0.0
        %2628 = vmatpush1.msra.mxu0 0.0
        %2629 = vmatprep.subr.mxu0 0.0
        %2630 = vmatpush1.msra.mxu0 0.0
        %2631 = vmatprep.subr.mxu0 0.0
        %2632 = vmatpush1.msra.mxu0 0.0
        %2633 = vmatprep.subr.mxu0 0.0
        %2634 = vmatpush1.msra.mxu0 0.0
        %2635 = vmatprep.subr.mxu0 0.0
        %2636 = vmatpush1.msra.mxu0 0.0
        %2637 = vmatprep.subr.mxu0 0.0
        %2638 = vmatpush1.msra.mxu0 0.0
        %2639 = vmatprep.subr.mxu0 0.0
        %2640 = vmatpush1.msra.mxu0 0.0
        %2641 = vmatprep.subr.mxu0 0.0
        %2642 = vmatpush1.msra.mxu0 0.0
        %2643 = vmatprep.subr.mxu0 0.0
        %2644 = vmatpush1.msra.mxu0 0.0
        %2645 = vmatprep.subr.mxu0 0.0
        %2646 = vmatpush1.msra.mxu0 0.0
        %2647 = vmatprep.subr.mxu0 0.0
        %2648 = vmatpush1.msra.mxu0 0.0
        %2649 = vmatprep.subr.mxu0 0.0
        %2650 = vmatpush1.msra.mxu0 0.0
        %2651 = vmatprep.subr.mxu0 0.0
        %2652 = vmatpush1.msra.mxu0 0.0
        %2653 = vmatprep.subr.mxu0 0.0
        %2654 = vmatpush1.msra.mxu0 0.0
        %2655 = vmatprep.subr.mxu0 0.0
        %2656 = vmatpush1.msra.mxu0 0.0
        %2657 = vmatprep.subr.mxu0 0.0
        %2658 = vmatpush1.msra.mxu0 0.0
        %2659 = vmatprep.subr.mxu0 0.0
        %2660 = vmatpush1.msra.mxu0 0.0
        %2661 = vmatprep.subr.mxu0 0.0
        %2662 = vmatpush1.msra.mxu0 0.0
        %2663 = vmatprep.subr.mxu0 0.0
        %2664 = vmatpush1.msra.mxu0 0.0
        %2665 = vmatprep.subr.mxu0 0.0
        %2666 = vmatpush1.msra.mxu0 0.0
        %2667 = vmatprep.subr.mxu0 0.0
        %2668 = vmatpush1.msra.mxu0 0.0
        %2669 = vmatprep.subr.mxu0 0.0
        %2670 = vmatpush1.msra.mxu0 0.0
        %2671 = vmatprep.subr.mxu0 0.0
        %2672 = vmatpush1.msra.mxu0 0.0
        %2673 = vmatprep.subr.mxu0 0.0
        %2674 = vmatpush1.msra.mxu0 0.0
        %2675 = vmatprep.subr.mxu0 0.0
        %2676 = vmatpush1.msra.mxu0 0.0
        %2677 = vmatprep.subr.mxu0 0.0
        %2678 = vmatpush1.msra.mxu0 0.0
        %2679 = vmatprep.subr.mxu0 0.0
        %2680 = vmatpush1.msra.mxu0 0.0
        %2681 = vmatprep.mubr.f32.mxu0 0.0
        %2682 = vmatmul.mubr.f32.gmra.mrb[0].mxu0 %v2591
        %v2683 = vpop.f32.mrb[0].mxu0
        %v2684 = vadd.f32 0.0, %v2683
        %v2685 = vpop.f32.mrb[0].mxu0
        %2686 = vmatprep.mubr.f32.mxu0 0.0
        %2687 = vmatmul.mubr.f32.gmra.mrb[0].mxu0 %v2594
        %v2688 = vpop.f32.mrb[0].mxu0
        %v2689 = vadd.f32 0.0, %v2688
        %v2690 = vpop.f32.mrb[0].mxu0
        %2691 = vmatprep.mubr.f32.mxu0 0.0
        %2692 = vmatmul.mubr.f32.gmra.mrb[0].mxu0 %v2597
        %v2693 = vpop.f32.mrb[0].mxu0
        %v2694 = vadd.f32 0.0, %v2693
        %v2695 = vpop.f32.mrb[0].mxu0
        %2696 = vmatprep.mubr.f32.mxu0 0.0
        %2697 = vmatmul.mubr.f32.gmra.mrb[0].mxu0 %v2600
        %v2698 = vpop.f32.mrb[0].mxu0
        %v2699 = vadd.f32 0.0, %v2698
        %v2700 = vpop.f32.mrb[0].mxu0
        %2701 = vmatprep.mubr.f32.mxu0 0.0
        %2702 = vmatmul.mubr.f32.gmra.mrb[0].mxu0 %v2603
        %v2703 = vpop.f32.mrb[0].mxu0
        %v2704 = vadd.f32 0.0, %v2703
        %v2705 = vpop.f32.mrb[0].mxu0
        %2706 = vmatprep.mubr.f32.mxu0 0.0
        %2707 = vmatmul.mubr.f32.gmra.mrb[0].mxu0 %v2606
        %v2708 = vpop.f32.mrb[0].mxu0
        %v2709 = vadd.f32 0.0, %v2708
        %v2710 = vpop.f32.mrb[0].mxu0
        %2711 = vmatprep.mubr.f32.mxu0 0.0
        %2712 = vmatmul.mubr.f32.gmra.mrb[0].mxu0 %v2609
        %v2713 = vpop.f32.mrb[0].mxu0
        %v2714 = vadd.f32 0.0, %v2713
        %v2715 = vpop.f32.mrb[0].mxu0
        %2716 = vmatprep.mubr.f32.mxu0 0.0
        %2717 = vmatmul.mubr.f32.gmra.mrb[0].mxu0 %v2612
        %v2718 = vpop.f32.mrb[0].mxu0
        %v2719 = vadd.f32 0.0, %v2718
        %v2720 = vpop.f32.mrb[0].mxu0
        %2721 = vdwg.mxu0
        %v2722 = vadd.f32 %v2581, %v2684
        %v2723 = vadd.f32 %v2582, %v2689
        %v2724 = vadd.f32 %v2583, %v2694
        %v2725 = vadd.f32 %v2584, %v2699
        %v2726 = vadd.f32 %v2585, %v2704
        %v2727 = vadd.f32 %v2586, %v2709
        %v2728 = vadd.f32 %v2587, %v2714
        %v2729 = vadd.f32 %v2588, %v2719
        %v2730 = vld [vmem:[%s12] sm:$0xff]
        %v2731 = vld [vmem:[%s12 + $0x8] sm:$0xff]
        %v2732 = vld [vmem:[%s12 + $0x10] sm:$0xff]
        %v2733 = vld [vmem:[%s12 + $0x18] sm:$0xff]
        %v2734 = vld [vmem:[%s754] sm:$0xff]
        %v2735 = vld [vmem:[%s754 + $0x8] sm:$0xff]
        %v2736 = vld [vmem:[%s754 + $0x10] sm:$0xff]
        %v2737 = vld [vmem:[%s754 + $0x18] sm:$0xff]
        %v2738 = vld [vmem:[%s754 + $0x20] sm:$0xff]
        %v2739 = vld [vmem:[%s754 + $0x28] sm:$0xff]
        %v2740 = vld [vmem:[%s754 + $0x30] sm:$0xff]
        %v2741 = vld [vmem:[%s754 + $0x38] sm:$0xff]
        %v2742 = vld [vmem:[%s13] sm:$0xff]
        %v2743 = vld [vmem:[%s13 + $0x8] sm:$0xff]
        %v2744 = vld [vmem:[%s13 + $0x10] sm:$0xff]
        %v2745 = vld [vmem:[%s13 + $0x18] sm:$0xff]
        %v2746 = vld [vmem:[%s759] sm:$0xff]
        %v2747 = vld [vmem:[%s759 + $0x8] sm:$0xff]
        %v2748 = vld [vmem:[%s759 + $0x10] sm:$0xff]
        %v2749 = vld [vmem:[%s759 + $0x18] sm:$0xff]
        %v2750 = vld [vmem:[%s759 + $0x20] sm:$0xff]
        %v2751 = vld [vmem:[%s759 + $0x28] sm:$0xff]
        %v2752 = vld [vmem:[%s759 + $0x30] sm:$0xff]
        %v2753 = vld [vmem:[%s759 + $0x38] sm:$0xff]
        %v2755 = vsel %vm795, %v2742, 0
        %v2758 = vsel %vm795, %v2743, 0
        %v2761 = vsel %vm795, %v2744, 0
        %v2764 = vsel %vm795, %v2745, 0
        %2766 = vmatprep.subr.mxu0 0.0
        %2767 = vmatpush1.msra.mxu0 %v2746
        %2768 = vmatprep.subr.mxu0 0.0
        %2769 = vmatpush1.msra.mxu0 %v2747
        %2770 = vmatprep.subr.mxu0 0.0
        %2771 = vmatpush1.msra.mxu0 %v2748
        %2772 = vmatprep.subr.mxu0 0.0
        %2773 = vmatpush1.msra.mxu0 %v2749
        %2774 = vmatprep.subr.mxu0 0.0
        %2775 = vmatpush1.msra.mxu0 %v2750
        %2776 = vmatprep.subr.mxu0 0.0
        %2777 = vmatpush1.msra.mxu0 %v2751
        %2778 = vmatprep.subr.mxu0 0.0
        %2779 = vmatpush1.msra.mxu0 %v2752
        %2780 = vmatprep.subr.mxu0 0.0
        %2781 = vmatpush1.msra.mxu0 %v2753
        %2782 = vmatprep.subr.mxu0 0.0
        %2783 = vmatpush1.msra.mxu0 0.0
        %2784 = vmatprep.subr.mxu0 0.0
        %2785 = vmatpush1.msra.mxu0 0.0
        %2786 = vmatprep.subr.mxu0 0.0
        %2787 = vmatpush1.msra.mxu0 0.0
        %2788 = vmatprep.subr.mxu0 0.0
        %2789 = vmatpush1.msra.mxu0 0.0
        %2790 = vmatprep.subr.mxu0 0.0
        %2791 = vmatpush1.msra.mxu0 0.0
        %2792 = vmatprep.subr.mxu0 0.0
        %2793 = vmatpush1.msra.mxu0 0.0
        %2794 = vmatprep.subr.mxu0 0.0
        %2795 = vmatpush1.msra.mxu0 0.0
        %2796 = vmatprep.subr.mxu0 0.0
        %2797 = vmatpush1.msra.mxu0 0.0
        %2798 = vmatprep.subr.mxu0 0.0
        %2799 = vmatpush1.msra.mxu0 0.0
        %2800 = vmatprep.subr.mxu0 0.0
        %2801 = vmatpush1.msra.mxu0 0.0
        %2802 = vmatprep.subr.mxu0 0.0
        %2803 = vmatpush1.msra.mxu0 0.0
        %2804 = vmatprep.subr.mxu0 0.0
        %2805 = vmatpush1.msra.mxu0 0.0
        %2806 = vmatprep.subr.mxu0 0.0
        %2807 = vmatpush1.msra.mxu0 0.0
        %2808 = vmatprep.subr.mxu0 0.0
        %2809 = vmatpush1.msra.mxu0 0.0
        %2810 = vmatprep.subr.mxu0 0.0
        %2811 = vmatpush1.msra.mxu0 0.0
        %2812 = vmatprep.subr.mxu0 0.0
        %2813 = vmatpush1.msra.mxu0 0.0
        %2814 = vmatprep.subr.mxu0 0.0
        %2815 = vmatpush1.msra.mxu0 0.0
        %2816 = vmatprep.subr.mxu0 0.0
        %2817 = vmatpush1.msra.mxu0 0.0
        %2818 = vmatprep.subr.mxu0 0.0
        %2819 = vmatpush1.msra.mxu0 0.0
        %2820 = vmatprep.subr.mxu0 0.0
        %2821 = vmatpush1.msra.mxu0 0.0
        %2822 = vmatprep.subr.mxu0 0.0
        %2823 = vmatpush1.msra.mxu0 0.0
        %2824 = vmatprep.subr.mxu0 0.0
        %2825 = vmatpush1.msra.mxu0 0.0
        %2826 = vmatprep.subr.mxu0 0.0
        %2827 = vmatpush1.msra.mxu0 0.0
        %2828 = vmatprep.subr.mxu0 0.0
        %2829 = vmatpush1.msra.mxu0 0.0
        %2830 = vmatprep.mubr.f32.mxu0 0.0
        %2831 = vmatmul.mubr.f32.gmra.mrb[0].mxu0 %v2755
        %v2832 = vpop.f32.mrb[0].mxu0
        %v2833 = vadd.f32 0.0, %v2832
        %v2834 = vpop.f32.mrb[0].mxu0
        %2835 = vmatprep.mubr.f32.mxu0 0.0
        %2836 = vmatmul.mubr.f32.gmra.mrb[0].mxu0 %v2758
        %v2837 = vpop.f32.mrb[0].mxu0
        %v2838 = vadd.f32 0.0, %v2837
        %v2839 = vpop.f32.mrb[0].mxu0
        %2840 = vmatprep.mubr.f32.mxu0 0.0
        %2841 = vmatmul.mubr.f32.gmra.mrb[0].mxu0 %v2761
        %v2842 = vpop.f32.mrb[0].mxu0
        %v2843 = vadd.f32 0.0, %v2842
        %v2844 = vpop.f32.mrb[0].mxu0
        %2845 = vmatprep.mubr.f32.mxu0 0.0
        %2846 = vmatmul.mubr.f32.gmra.mrb[0].mxu0 %v2764
        %v2847 = vpop.f32.mrb[0].mxu0
        %v2848 = vadd.f32 0.0, %v2847
        %v2849 = vpop.f32.mrb[0].mxu0
        %2850 = vdwg.mxu0
        %v2852 = vsel %vm795, %v2730, 0
        %v2855 = vsel %vm795, %v2731, 0
        %v2858 = vsel %vm795, %v2732, 0
        %v2861 = vsel %vm795, %v2733, 0
        %2863 = vmatprep.subr.mxu0 0.0
        %2864 = vmatpush1.msra.mxu0 %v2734
        %2865 = vmatprep.subr.mxu0 0.0
        %2866 = vmatpush1.msra.mxu0 %v2735
        %2867 = vmatprep.subr.mxu0 0.0
        %2868 = vmatpush1.msra.mxu0 %v2736
        %2869 = vmatprep.subr.mxu0 0.0
        %2870 = vmatpush1.msra.mxu0 %v2737
        %2871 = vmatprep.subr.mxu0 0.0
        %2872 = vmatpush1.msra.mxu0 %v2738
        %2873 = vmatprep.subr.mxu0 0.0
        %2874 = vmatpush1.msra.mxu0 %v2739
        %2875 = vmatprep.subr.mxu0 0.0
        %2876 = vmatpush1.msra.mxu0 %v2740
        %2877 = vmatprep.subr.mxu0 0.0
        %2878 = vmatpush1.msra.mxu0 %v2741
        %2879 = vmatprep.subr.mxu0 0.0
        %2880 = vmatpush1.msra.mxu0 0.0
        %2881 = vmatprep.subr.mxu0 0.0
        %2882 = vmatpush1.msra.mxu0 0.0
        %2883 = vmatprep.subr.mxu0 0.0
        %2884 = vmatpush1.msra.mxu0 0.0
        %2885 = vmatprep.subr.mxu0 0.0
        %2886 = vmatpush1.msra.mxu0 0.0
        %2887 = vmatprep.subr.mxu0 0.0
        %2888 = vmatpush1.msra.mxu0 0.0
        %2889 = vmatprep.subr.mxu0 0.0
        %2890 = vmatpush1.msra.mxu0 0.0
        %2891 = vmatprep.subr.mxu0 0.0
        %2892 = vmatpush1.msra.mxu0 0.0
        %2893 = vmatprep.subr.mxu0 0.0
        %2894 = vmatpush1.msra.mxu0 0.0
        %2895 = vmatprep.subr.mxu0 0.0
        %2896 = vmatpush1.msra.mxu0 0.0
        %2897 = vmatprep.subr.mxu0 0.0
        %2898 = vmatpush1.msra.mxu0 0.0
        %2899 = vmatprep.subr.mxu0 0.0
        %2900 = vmatpush1.msra.mxu0 0.0
        %2901 = vmatprep.subr.mxu0 0.0
        %2902 = vmatpush1.msra.mxu0 0.0
        %2903 = vmatprep.subr.mxu0 0.0
        %2904 = vmatpush1.msra.mxu0 0.0
        %2905 = vmatprep.subr.mxu0 0.0
        %2906 = vmatpush1.msra.mxu0 0.0
        %2907 = vmatprep.subr.mxu0 0.0
        %2908 = vmatpush1.msra.mxu0 0.0
        %2909 = vmatprep.subr.mxu0 0.0
        %2910 = vmatpush1.msra.mxu0 0.0
        %2911 = vmatprep.subr.mxu0 0.0
        %2912 = vmatpush1.msra.mxu0 0.0
        %2913 = vmatprep.subr.mxu0 0.0
        %2914 = vmatpush1.msra.mxu0 0.0
        %2915 = vmatprep.subr.mxu0 0.0
        %2916 = vmatpush1.msra.mxu0 0.0
        %2917 = vmatprep.subr.mxu0 0.0
        %2918 = vmatpush1.msra.mxu0 0.0
        %2919 = vmatprep.subr.mxu0 0.0
        %2920 = vmatpush1.msra.mxu0 0.0
        %2921 = vmatprep.subr.mxu0 0.0
        %2922 = vmatpush1.msra.mxu0 0.0
        %2923 = vmatprep.subr.mxu0 0.0
        %2924 = vmatpush1.msra.mxu0 0.0
        %2925 = vmatprep.subr.mxu0 0.0
        %2926 = vmatpush1.msra.mxu0 0.0
        %2927 = vmatprep.mubr.f32.mxu0 0.0
        %2928 = vmatmul.mubr.f32.gmra.mrb[0].mxu0 %v2852
        %v2929 = vpop.f32.mrb[0].mxu0
        %v2930 = vadd.f32 %v2833, %v2929
        %v2931 = vpop.f32.mrb[0].mxu0
        %2932 = vmatprep.mubr.f32.mxu0 0.0
        %2933 = vmatmul.mubr.f32.gmra.mrb[0].mxu0 %v2855
        %v2934 = vpop.f32.mrb[0].mxu0
        %v2935 = vadd.f32 %v2838, %v2934
        %v2936 = vpop.f32.mrb[0].mxu0
        %2937 = vmatprep.mubr.f32.mxu0 0.0
        %2938 = vmatmul.mubr.f32.gmra.mrb[0].mxu0 %v2858
        %v2939 = vpop.f32.mrb[0].mxu0
        %v2940 = vadd.f32 %v2843, %v2939
        %v2941 = vpop.f32.mrb[0].mxu0
        %2942 = vmatprep.mubr.f32.mxu0 0.0
        %2943 = vmatmul.mubr.f32.gmra.mrb[0].mxu0 %v2861
        %v2944 = vpop.f32.mrb[0].mxu0
        %v2945 = vadd.f32 %v2848, %v2944
        %v2946 = vpop.f32.mrb[0].mxu0
        %2947 = vdwg.mxu0
        %v2948 = vld [vmem:[%s14] sm:$0xff]
        %v2949 = vld [vmem:[%s14 + $0x8] sm:$0xff]
        %v2950 = vld [vmem:[%s14 + $0x10] sm:$0xff]
        %v2951 = vld [vmem:[%s14 + $0x18] sm:$0xff]
        %2953 = vset.pattern.permute.xlu0 0
        %2954 = vperm.xlu0 %2953, %v2948
        %v2955 = vpop.permute.xlu0 %2954
        %2958 = vset.pattern.permute.xlu0 0
        %2959 = vperm.xlu0 %2958, %v2949
        %v2960 = vpop.permute.xlu0 %2959
        %2963 = vset.pattern.permute.xlu0 0
        %2964 = vperm.xlu0 %2963, %v2950
        %v2965 = vpop.permute.xlu0 %2964
        %2968 = vset.pattern.permute.xlu0 0
        %2969 = vperm.xlu0 %2968, %v2951
        %v2970 = vpop.permute.xlu0 %2969
        %v2972 = vadd.f32 %v2930, %v2955
        %v2973 = vadd.f32 %v2935, %v2960
        %v2974 = vadd.f32 %v2940, %v2965
        %v2975 = vadd.f32 %v2945, %v2970
        %v2976 = vmax.f32 %v2972, 0.0
        %v2977 = vmax.f32 %v2973, 0.0
        %v2978 = vmax.f32 %v2974, 0.0
        %v2979 = vmax.f32 %v2975, 0.0
        %v2980 = vld [vmem:[%s15] sm:$0xff]
        %v2981 = vld [vmem:[%s15 + $0x8] sm:$0xff]
        %v2982 = vld [vmem:[%s15 + $0x10] sm:$0xff]
        %v2983 = vld [vmem:[%s15 + $0x18] sm:$0xff]
        %v2984 = vld [vmem:[%s15 + $0x20] sm:$0xff]
        %v2985 = vld [vmem:[%s15 + $0x28] sm:$0xff]
        %v2986 = vld [vmem:[%s15 + $0x30] sm:$0xff]
        %v2987 = vld [vmem:[%s15 + $0x38] sm:$0xff]
        %v2988 = vld [vmem:[%s15 + $0x40] sm:$0xff]
        %v2989 = vld [vmem:[%s15 + $0x48] sm:$0xff]
        %v2990 = vld [vmem:[%s15 + $0x50] sm:$0xff]
        %v2991 = vld [vmem:[%s15 + $0x58] sm:$0xff]
        %v2992 = vld [vmem:[%s15 + $0x60] sm:$0xff]
        %v2993 = vld [vmem:[%s15 + $0x68] sm:$0xff]
        %v2994 = vld [vmem:[%s15 + $0x70] sm:$0xff]
        %v2995 = vld [vmem:[%s15 + $0x78] sm:$0xff]
        %v2996 = vld [vmem:[%s15 + $0x80] sm:$0xff]
        %v2997 = vld [vmem:[%s15 + $0x88] sm:$0xff]
        %v2998 = vld [vmem:[%s15 + $0x90] sm:$0xff]
        %v2999 = vld [vmem:[%s15 + $0x98] sm:$0xff]
        %v3000 = vld [vmem:[%s15 + $0xa0] sm:$0xff]
        %v3001 = vld [vmem:[%s15 + $0xa8] sm:$0xff]
        %v3002 = vld [vmem:[%s15 + $0xb0] sm:$0xff]
        %v3003 = vld [vmem:[%s15 + $0xb8] sm:$0xff]
        %vm3004 = vcmask 261120
        %v3006 = vsel %vm3004, %v2980, 0
        %v3009 = vsel %vm3004, %v2981, 0
        %v3012 = vsel %vm3004, %v2982, 0
        %v3015 = vsel %vm3004, %v2983, 0
        %v3018 = vsel %vm3004, %v2984, 0
        %v3021 = vsel %vm3004, %v2985, 0
        %v3024 = vsel %vm3004, %v2986, 0
        %v3027 = vsel %vm3004, %v2987, 0
        %v3030 = vsel %vm3004, %v2988, 0
        %v3033 = vsel %vm3004, %v2989, 0
        %v3036 = vsel %vm3004, %v2990, 0
        %v3039 = vsel %vm3004, %v2991, 0
        %v3042 = vsel %vm3004, %v2992, 0
        %v3045 = vsel %vm3004, %v2993, 0
        %v3048 = vsel %vm3004, %v2994, 0
        %v3051 = vsel %vm3004, %v2995, 0
        %v3054 = vsel %vm3004, %v2996, 0
        %v3057 = vsel %vm3004, %v2997, 0
        %v3060 = vsel %vm3004, %v2998, 0
        %v3063 = vsel %vm3004, %v2999, 0
        %v3066 = vsel %vm3004, %v3000, 0
        %v3069 = vsel %vm3004, %v3001, 0
        %v3072 = vsel %vm3004, %v3002, 0
        %v3075 = vsel %vm3004, %v3003, 0
        %3077 = vmatprep.subr.mxu0 0.0
        %3078 = vmatpush1.msra.mxu0 %v2976
        %3079 = vmatprep.subr.mxu0 0.0
        %3080 = vmatpush1.msra.mxu0 %v2977
        %3081 = vmatprep.subr.mxu0 0.0
        %3082 = vmatpush1.msra.mxu0 %v2978
        %3083 = vmatprep.subr.mxu0 0.0
        %3084 = vmatpush1.msra.mxu0 %v2979
        %3085 = vmatprep.subr.mxu0 0.0
        %3086 = vmatpush1.msra.mxu0 0.0
        %3087 = vmatprep.subr.mxu0 0.0
        %3088 = vmatpush1.msra.mxu0 0.0
        %3089 = vmatprep.subr.mxu0 0.0
        %3090 = vmatpush1.msra.mxu0 0.0
        %3091 = vmatprep.subr.mxu0 0.0
        %3092 = vmatpush1.msra.mxu0 0.0
        %3093 = vmatprep.subr.mxu0 0.0
        %3094 = vmatpush1.msra.mxu0 0.0
        %3095 = vmatprep.subr.mxu0 0.0
        %3096 = vmatpush1.msra.mxu0 0.0
        %3097 = vmatprep.subr.mxu0 0.0
        %3098 = vmatpush1.msra.mxu0 0.0
        %3099 = vmatprep.subr.mxu0 0.0
        %3100 = vmatpush1.msra.mxu0 0.0
        %3101 = vmatprep.subr.mxu0 0.0
        %3102 = vmatpush1.msra.mxu0 0.0
        %3103 = vmatprep.subr.mxu0 0.0
        %3104 = vmatpush1.msra.mxu0 0.0
        %3105 = vmatprep.subr.mxu0 0.0
        %3106 = vmatpush1.msra.mxu0 0.0
        %3107 = vmatprep.subr.mxu0 0.0
        %3108 = vmatpush1.msra.mxu0 0.0
        %3109 = vmatprep.subr.mxu0 0.0
        %3110 = vmatpush1.msra.mxu0 0.0
        %3111 = vmatprep.subr.mxu0 0.0
        %3112 = vmatpush1.msra.mxu0 0.0
        %3113 = vmatprep.subr.mxu0 0.0
        %3114 = vmatpush1.msra.mxu0 0.0
        %3115 = vmatprep.subr.mxu0 0.0
        %3116 = vmatpush1.msra.mxu0 0.0
        %3117 = vmatprep.subr.mxu0 0.0
        %3118 = vmatpush1.msra.mxu0 0.0
        %3119 = vmatprep.subr.mxu0 0.0
        %3120 = vmatpush1.msra.mxu0 0.0
        %3121 = vmatprep.subr.mxu0 0.0
        %3122 = vmatpush1.msra.mxu0 0.0
        %3123 = vmatprep.subr.mxu0 0.0
        %3124 = vmatpush1.msra.mxu0 0.0
        %3125 = vmatprep.subr.mxu0 0.0
        %3126 = vmatpush1.msra.mxu0 0.0
        %3127 = vmatprep.subr.mxu0 0.0
        %3128 = vmatpush1.msra.mxu0 0.0
        %3129 = vmatprep.subr.mxu0 0.0
        %3130 = vmatpush1.msra.mxu0 0.0
        %3131 = vmatprep.subr.mxu0 0.0
        %3132 = vmatpush1.msra.mxu0 0.0
        %3133 = vmatprep.subr.mxu0 0.0
        %3134 = vmatpush1.msra.mxu0 0.0
        %3135 = vmatprep.subr.mxu0 0.0
        %3136 = vmatpush1.msra.mxu0 0.0
        %3137 = vmatprep.subr.mxu0 0.0
        %3138 = vmatpush1.msra.mxu0 0.0
        %3139 = vmatprep.subr.mxu0 0.0
        %3140 = vmatpush1.msra.mxu0 0.0
        %3141 = vmatprep.mubr.f32.mxu0 0.0
        %3142 = vmatmul.mubr.f32.gmra.mrb[0].mxu0 %v3006
        %v3143 = vpop.f32.mrb[0].mxu0
        %v3144 = vadd.f32 0.0, %v3143
        %v3145 = vpop.f32.mrb[0].mxu0
        %3146 = vmatprep.mubr.f32.mxu0 0.0
        %3147 = vmatmul.mubr.f32.gmra.mrb[0].mxu0 %v3009
        %v3148 = vpop.f32.mrb[0].mxu0
        %v3149 = vadd.f32 0.0, %v3148
        %v3150 = vpop.f32.mrb[0].mxu0
        %3151 = vmatprep.mubr.f32.mxu0 0.0
        %3152 = vmatmul.mubr.f32.gmra.mrb[0].mxu0 %v3012
        %v3153 = vpop.f32.mrb[0].mxu0
        %v3154 = vadd.f32 0.0, %v3153
        %v3155 = vpop.f32.mrb[0].mxu0
        %3156 = vmatprep.mubr.f32.mxu0 0.0
        %3157 = vmatmul.mubr.f32.gmra.mrb[0].mxu0 %v3015
        %v3158 = vpop.f32.mrb[0].mxu0
        %v3159 = vadd.f32 0.0, %v3158
        %v3160 = vpop.f32.mrb[0].mxu0
        %3161 = vmatprep.mubr.f32.mxu0 0.0
        %3162 = vmatmul.mubr.f32.gmra.mrb[0].mxu0 %v3018
        %v3163 = vpop.f32.mrb[0].mxu0
        %v3164 = vadd.f32 0.0, %v3163
        %v3165 = vpop.f32.mrb[0].mxu0
        %3166 = vmatprep.mubr.f32.mxu0 0.0
        %3167 = vmatmul.mubr.f32.gmra.mrb[0].mxu0 %v3021
        %v3168 = vpop.f32.mrb[0].mxu0
        %v3169 = vadd.f32 0.0, %v3168
        %v3170 = vpop.f32.mrb[0].mxu0
        %3171 = vmatprep.mubr.f32.mxu0 0.0
        %3172 = vmatmul.mubr.f32.gmra.mrb[0].mxu0 %v3024
        %v3173 = vpop.f32.mrb[0].mxu0
        %v3174 = vadd.f32 0.0, %v3173
        %v3175 = vpop.f32.mrb[0].mxu0
        %3176 = vmatprep.mubr.f32.mxu0 0.0
        %3177 = vmatmul.mubr.f32.gmra.mrb[0].mxu0 %v3027
        %v3178 = vpop.f32.mrb[0].mxu0
        %v3179 = vadd.f32 0.0, %v3178
        %v3180 = vpop.f32.mrb[0].mxu0
        %3181 = vmatprep.mubr.f32.mxu0 0.0
        %3182 = vmatmul.mubr.f32.gmra.mrb[0].mxu0 %v3030
        %v3183 = vpop.f32.mrb[0].mxu0
        %v3184 = vadd.f32 0.0, %v3183
        %v3185 = vpop.f32.mrb[0].mxu0
        %3186 = vmatprep.mubr.f32.mxu0 0.0
        %3187 = vmatmul.mubr.f32.gmra.mrb[0].mxu0 %v3033
        %v3188 = vpop.f32.mrb[0].mxu0
        %v3189 = vadd.f32 0.0, %v3188
        %v3190 = vpop.f32.mrb[0].mxu0
        %3191 = vmatprep.mubr.f32.mxu0 0.0
        %3192 = vmatmul.mubr.f32.gmra.mrb[0].mxu0 %v3036
        %v3193 = vpop.f32.mrb[0].mxu0
        %v3194 = vadd.f32 0.0, %v3193
        %v3195 = vpop.f32.mrb[0].mxu0
        %3196 = vmatprep.mubr.f32.mxu0 0.0
        %3197 = vmatmul.mubr.f32.gmra.mrb[0].mxu0 %v3039
        %v3198 = vpop.f32.mrb[0].mxu0
        %v3199 = vadd.f32 0.0, %v3198
        %v3200 = vpop.f32.mrb[0].mxu0
        %3201 = vmatprep.mubr.f32.mxu0 0.0
        %3202 = vmatmul.mubr.f32.gmra.mrb[0].mxu0 %v3042
        %v3203 = vpop.f32.mrb[0].mxu0
        %v3204 = vadd.f32 0.0, %v3203
        %v3205 = vpop.f32.mrb[0].mxu0
        %3206 = vmatprep.mubr.f32.mxu0 0.0
        %3207 = vmatmul.mubr.f32.gmra.mrb[0].mxu0 %v3045
        %v3208 = vpop.f32.mrb[0].mxu0
        %v3209 = vadd.f32 0.0, %v3208
        %v3210 = vpop.f32.mrb[0].mxu0
        %3211 = vmatprep.mubr.f32.mxu0 0.0
        %3212 = vmatmul.mubr.f32.gmra.mrb[0].mxu0 %v3048
        %v3213 = vpop.f32.mrb[0].mxu0
        %v3214 = vadd.f32 0.0, %v3213
        %v3215 = vpop.f32.mrb[0].mxu0
        %3216 = vmatprep.mubr.f32.mxu0 0.0
        %3217 = vmatmul.mubr.f32.gmra.mrb[0].mxu0 %v3051
        %v3218 = vpop.f32.mrb[0].mxu0
        %v3219 = vadd.f32 0.0, %v3218
        %v3220 = vpop.f32.mrb[0].mxu0
        %3221 = vmatprep.mubr.f32.mxu0 0.0
        %3222 = vmatmul.mubr.f32.gmra.mrb[0].mxu0 %v3054
        %v3223 = vpop.f32.mrb[0].mxu0
        %v3224 = vadd.f32 0.0, %v3223
        %v3225 = vpop.f32.mrb[0].mxu0
        %3226 = vmatprep.mubr.f32.mxu0 0.0
        %3227 = vmatmul.mubr.f32.gmra.mrb[0].mxu0 %v3057
        %v3228 = vpop.f32.mrb[0].mxu0
        %v3229 = vadd.f32 0.0, %v3228
        %v3230 = vpop.f32.mrb[0].mxu0
        %3231 = vmatprep.mubr.f32.mxu0 0.0
        %3232 = vmatmul.mubr.f32.gmra.mrb[0].mxu0 %v3060
        %v3233 = vpop.f32.mrb[0].mxu0
        %v3234 = vadd.f32 0.0, %v3233
        %v3235 = vpop.f32.mrb[0].mxu0
        %3236 = vmatprep.mubr.f32.mxu0 0.0
        %3237 = vmatmul.mubr.f32.gmra.mrb[0].mxu0 %v3063
        %v3238 = vpop.f32.mrb[0].mxu0
        %v3239 = vadd.f32 0.0, %v3238
        %v3240 = vpop.f32.mrb[0].mxu0
        %3241 = vmatprep.mubr.f32.mxu0 0.0
        %3242 = vmatmul.mubr.f32.gmra.mrb[0].mxu0 %v3066
        %v3243 = vpop.f32.mrb[0].mxu0
        %v3244 = vadd.f32 0.0, %v3243
        %v3245 = vpop.f32.mrb[0].mxu0
        %3246 = vmatprep.mubr.f32.mxu0 0.0
        %3247 = vmatmul.mubr.f32.gmra.mrb[0].mxu0 %v3069
        %v3248 = vpop.f32.mrb[0].mxu0
        %v3249 = vadd.f32 0.0, %v3248
        %v3250 = vpop.f32.mrb[0].mxu0
        %3251 = vmatprep.mubr.f32.mxu0 0.0
        %3252 = vmatmul.mubr.f32.gmra.mrb[0].mxu0 %v3072
        %v3253 = vpop.f32.mrb[0].mxu0
        %v3254 = vadd.f32 0.0, %v3253
        %v3255 = vpop.f32.mrb[0].mxu0
        %3256 = vmatprep.mubr.f32.mxu0 0.0
        %3257 = vmatmul.mubr.f32.gmra.mrb[0].mxu0 %v3075
        %v3258 = vpop.f32.mrb[0].mxu0
        %v3259 = vadd.f32 0.0, %v3258
        %v3260 = vpop.f32.mrb[0].mxu0
        %3261 = vdwg.mxu0
        %v3262 = vld [vmem:[%s16] sm:$0xff]
        %vm3263 = vcmask 64512
        %v3265 = vsel %vm3263, %v3144, 0
        %v3268 = vsel %vm3263, %v3149, 0
        %v3271 = vsel %vm3263, %v3154, 0
        %v3274 = vsel %vm3263, %v3159, 0
        %v3277 = vsel %vm3263, %v3164, 0
        %v3280 = vsel %vm3263, %v3169, 0
        %v3283 = vsel %vm3263, %v3174, 0
        %v3286 = vsel %vm3263, %v3179, 0
        %3288 = vmatprep.subr.mxu0 0.0
        %3289 = vmatpush1.msra.mxu0 %v3262
        %3290 = vmatprep.subr.mxu0 0.0
        %3291 = vmatpush1.msra.mxu0 0.0
        %3292 = vmatprep.subr.mxu0 0.0
        %3293 = vmatpush1.msra.mxu0 0.0
        %3294 = vmatprep.subr.mxu0 0.0
        %3295 = vmatpush1.msra.mxu0 0.0
        %3296 = vmatprep.subr.mxu0 0.0
        %3297 = vmatpush1.msra.mxu0 0.0
        %3298 = vmatprep.subr.mxu0 0.0
        %3299 = vmatpush1.msra.mxu0 0.0
        %3300 = vmatprep.subr.mxu0 0.0
        %3301 = vmatpush1.msra.mxu0 0.0
        %3302 = vmatprep.subr.mxu0 0.0
        %3303 = vmatpush1.msra.mxu0 0.0
        %3304 = vmatprep.subr.mxu0 0.0
        %3305 = vmatpush1.msra.mxu0 0.0
        %3306 = vmatprep.subr.mxu0 0.0
        %3307 = vmatpush1.msra.mxu0 0.0
        %3308 = vmatprep.subr.mxu0 0.0
        %3309 = vmatpush1.msra.mxu0 0.0
        %3310 = vmatprep.subr.mxu0 0.0
        %3311 = vmatpush1.msra.mxu0 0.0
        %3312 = vmatprep.subr.mxu0 0.0
        %3313 = vmatpush1.msra.mxu0 0.0
        %3314 = vmatprep.subr.mxu0 0.0
        %3315 = vmatpush1.msra.mxu0 0.0
        %3316 = vmatprep.subr.mxu0 0.0
        %3317 = vmatpush1.msra.mxu0 0.0
        %3318 = vmatprep.subr.mxu0 0.0
        %3319 = vmatpush1.msra.mxu0 0.0
        %3320 = vmatprep.subr.mxu0 0.0
        %3321 = vmatpush1.msra.mxu0 0.0
        %3322 = vmatprep.subr.mxu0 0.0
        %3323 = vmatpush1.msra.mxu0 0.0
        %3324 = vmatprep.subr.mxu0 0.0
        %3325 = vmatpush1.msra.mxu0 0.0
        %3326 = vmatprep.subr.mxu0 0.0
        %3327 = vmatpush1.msra.mxu0 0.0
        %3328 = vmatprep.subr.mxu0 0.0
        %3329 = vmatpush1.msra.mxu0 0.0
        %3330 = vmatprep.subr.mxu0 0.0
        %3331 = vmatpush1.msra.mxu0 0.0
        %3332 = vmatprep.subr.mxu0 0.0
        %3333 = vmatpush1.msra.mxu0 0.0
        %3334 = vmatprep.subr.mxu0 0.0
        %3335 = vmatpush1.msra.mxu0 0.0
        %3336 = vmatprep.subr.mxu0 0.0
        %3337 = vmatpush1.msra.mxu0 0.0
        %3338 = vmatprep.subr.mxu0 0.0
        %3339 = vmatpush1.msra.mxu0 0.0
        %3340 = vmatprep.subr.mxu0 0.0
        %3341 = vmatpush1.msra.mxu0 0.0
        %3342 = vmatprep.subr.mxu0 0.0
        %3343 = vmatpush1.msra.mxu0 0.0
        %3344 = vmatprep.subr.mxu0 0.0
        %3345 = vmatpush1.msra.mxu0 0.0
        %3346 = vmatprep.subr.mxu0 0.0
        %3347 = vmatpush1.msra.mxu0 0.0
        %3348 = vmatprep.subr.mxu0 0.0
        %3349 = vmatpush1.msra.mxu0 0.0
        %3350 = vmatprep.subr.mxu0 0.0
        %3351 = vmatpush1.msra.mxu0 0.0
        %3352 = vmatprep.mubr.f32.mxu0 0.0
        %3353 = vmatmul.mubr.f32.gmra.mrb[0].mxu0 %v3265
        %v3354 = vpop.f32.mrb[0].mxu0
        %v3355 = vadd.f32 0.0, %v3354
        %v3356 = vpop.f32.mrb[0].mxu0
        %3357 = vmatprep.mubr.f32.mxu0 0.0
        %3358 = vmatmul.mubr.f32.gmra.mrb[0].mxu0 %v3268
        %v3359 = vpop.f32.mrb[0].mxu0
        %v3360 = vadd.f32 0.0, %v3359
        %v3361 = vpop.f32.mrb[0].mxu0
        %3362 = vmatprep.mubr.f32.mxu0 0.0
        %3363 = vmatmul.mubr.f32.gmra.mrb[0].mxu0 %v3271
        %v3364 = vpop.f32.mrb[0].mxu0
        %v3365 = vadd.f32 0.0, %v3364
        %v3366 = vpop.f32.mrb[0].mxu0
        %3367 = vmatprep.mubr.f32.mxu0 0.0
        %3368 = vmatmul.mubr.f32.gmra.mrb[0].mxu0 %v3274
        %v3369 = vpop.f32.mrb[0].mxu0
        %v3370 = vadd.f32 0.0, %v3369
        %v3371 = vpop.f32.mrb[0].mxu0
        %3372 = vmatprep.mubr.f32.mxu0 0.0
        %3373 = vmatmul.mubr.f32.gmra.mrb[0].mxu0 %v3277
        %v3374 = vpop.f32.mrb[0].mxu0
        %v3375 = vadd.f32 0.0, %v3374
        %v3376 = vpop.f32.mrb[0].mxu0
        %3377 = vmatprep.mubr.f32.mxu0 0.0
        %3378 = vmatmul.mubr.f32.gmra.mrb[0].mxu0 %v3280
        %v3379 = vpop.f32.mrb[0].mxu0
        %v3380 = vadd.f32 0.0, %v3379
        %v3381 = vpop.f32.mrb[0].mxu0
        %3382 = vmatprep.mubr.f32.mxu0 0.0
        %3383 = vmatmul.mubr.f32.gmra.mrb[0].mxu0 %v3283
        %v3384 = vpop.f32.mrb[0].mxu0
        %v3385 = vadd.f32 0.0, %v3384
        %v3386 = vpop.f32.mrb[0].mxu0
        %3387 = vmatprep.mubr.f32.mxu0 0.0
        %3388 = vmatmul.mubr.f32.gmra.mrb[0].mxu0 %v3286
        %v3389 = vpop.f32.mrb[0].mxu0
        %v3390 = vadd.f32 0.0, %v3389
        %v3391 = vpop.f32.mrb[0].mxu0
        %3392 = vdwg.mxu0
        %v3393 = vadd.f32 %v2722, %v3355
        %v3394 = vadd.f32 %v2723, %v3360
        %v3395 = vadd.f32 %v2724, %v3365
        %v3396 = vadd.f32 %v2725, %v3370
        %v3397 = vadd.f32 %v2726, %v3375
        %v3398 = vadd.f32 %v2727, %v3380
        %v3399 = vadd.f32 %v2728, %v3385
        %v3400 = vadd.f32 %v2729, %v3390
        %v3401 = vld [vmem:[%s16 + $0x8] sm:$0xff]
        %v3403 = vsel %vm3263, %v3184, 0
        %v3406 = vsel %vm3263, %v3189, 0
        %v3409 = vsel %vm3263, %v3194, 0
        %v3412 = vsel %vm3263, %v3199, 0
        %v3415 = vsel %vm3263, %v3204, 0
        %v3418 = vsel %vm3263, %v3209, 0
        %v3421 = vsel %vm3263, %v3214, 0
        %v3424 = vsel %vm3263, %v3219, 0
        %3426 = vmatprep.subr.mxu0 0.0
        %3427 = vmatpush1.msra.mxu0 %v3401
        %3428 = vmatprep.subr.mxu0 0.0
        %3429 = vmatpush1.msra.mxu0 0.0
        %3430 = vmatprep.subr.mxu0 0.0
        %3431 = vmatpush1.msra.mxu0 0.0
        %3432 = vmatprep.subr.mxu0 0.0
        %3433 = vmatpush1.msra.mxu0 0.0
        %3434 = vmatprep.subr.mxu0 0.0
        %3435 = vmatpush1.msra.mxu0 0.0
        %3436 = vmatprep.subr.mxu0 0.0
        %3437 = vmatpush1.msra.mxu0 0.0
        %3438 = vmatprep.subr.mxu0 0.0
        %3439 = vmatpush1.msra.mxu0 0.0
        %3440 = vmatprep.subr.mxu0 0.0
        %3441 = vmatpush1.msra.mxu0 0.0
        %3442 = vmatprep.subr.mxu0 0.0
        %3443 = vmatpush1.msra.mxu0 0.0
        %3444 = vmatprep.subr.mxu0 0.0
        %3445 = vmatpush1.msra.mxu0 0.0
        %3446 = vmatprep.subr.mxu0 0.0
        %3447 = vmatpush1.msra.mxu0 0.0
        %3448 = vmatprep.subr.mxu0 0.0
        %3449 = vmatpush1.msra.mxu0 0.0
        %3450 = vmatprep.subr.mxu0 0.0
        %3451 = vmatpush1.msra.mxu0 0.0
        %3452 = vmatprep.subr.mxu0 0.0
        %3453 = vmatpush1.msra.mxu0 0.0
        %3454 = vmatprep.subr.mxu0 0.0
        %3455 = vmatpush1.msra.mxu0 0.0
        %3456 = vmatprep.subr.mxu0 0.0
        %3457 = vmatpush1.msra.mxu0 0.0
        %3458 = vmatprep.subr.mxu0 0.0
        %3459 = vmatpush1.msra.mxu0 0.0
        %3460 = vmatprep.subr.mxu0 0.0
        %3461 = vmatpush1.msra.mxu0 0.0
        %3462 = vmatprep.subr.mxu0 0.0
        %3463 = vmatpush1.msra.mxu0 0.0
        %3464 = vmatprep.subr.mxu0 0.0
        %3465 = vmatpush1.msra.mxu0 0.0
        %3466 = vmatprep.subr.mxu0 0.0
        %3467 = vmatpush1.msra.mxu0 0.0
        %3468 = vmatprep.subr.mxu0 0.0
        %3469 = vmatpush1.msra.mxu0 0.0
        %3470 = vmatprep.subr.mxu0 0.0
        %3471 = vmatpush1.msra.mxu0 0.0
        %3472 = vmatprep.subr.mxu0 0.0
        %3473 = vmatpush1.msra.mxu0 0.0
        %3474 = vmatprep.subr.mxu0 0.0
        %3475 = vmatpush1.msra.mxu0 0.0
        %3476 = vmatprep.subr.mxu0 0.0
        %3477 = vmatpush1.msra.mxu0 0.0
        %3478 = vmatprep.subr.mxu0 0.0
        %3479 = vmatpush1.msra.mxu0 0.0
        %3480 = vmatprep.subr.mxu0 0.0
        %3481 = vmatpush1.msra.mxu0 0.0
        %3482 = vmatprep.subr.mxu0 0.0
        %3483 = vmatpush1.msra.mxu0 0.0
        %3484 = vmatprep.subr.mxu0 0.0
        %3485 = vmatpush1.msra.mxu0 0.0
        %3486 = vmatprep.subr.mxu0 0.0
        %3487 = vmatpush1.msra.mxu0 0.0
        %3488 = vmatprep.subr.mxu0 0.0
        %3489 = vmatpush1.msra.mxu0 0.0
        %3490 = vmatprep.mubr.f32.mxu0 0.0
        %3491 = vmatmul.mubr.f32.gmra.mrb[0].mxu0 %v3403
        %v3492 = vpop.f32.mrb[0].mxu0
        %v3493 = vadd.f32 0.0, %v3492
        %v3494 = vpop.f32.mrb[0].mxu0
        %3495 = vmatprep.mubr.f32.mxu0 0.0
        %3496 = vmatmul.mubr.f32.gmra.mrb[0].mxu0 %v3406
        %v3497 = vpop.f32.mrb[0].mxu0
        %v3498 = vadd.f32 0.0, %v3497
        %v3499 = vpop.f32.mrb[0].mxu0
        %3500 = vmatprep.mubr.f32.mxu0 0.0
        %3501 = vmatmul.mubr.f32.gmra.mrb[0].mxu0 %v3409
        %v3502 = vpop.f32.mrb[0].mxu0
        %v3503 = vadd.f32 0.0, %v3502
        %v3504 = vpop.f32.mrb[0].mxu0
        %3505 = vmatprep.mubr.f32.mxu0 0.0
        %3506 = vmatmul.mubr.f32.gmra.mrb[0].mxu0 %v3412
        %v3507 = vpop.f32.mrb[0].mxu0
        %v3508 = vadd.f32 0.0, %v3507
        %v3509 = vpop.f32.mrb[0].mxu0
        %3510 = vmatprep.mubr.f32.mxu0 0.0
        %3511 = vmatmul.mubr.f32.gmra.mrb[0].mxu0 %v3415
        %v3512 = vpop.f32.mrb[0].mxu0
        %v3513 = vadd.f32 0.0, %v3512
        %v3514 = vpop.f32.mrb[0].mxu0
        %3515 = vmatprep.mubr.f32.mxu0 0.0
        %3516 = vmatmul.mubr.f32.gmra.mrb[0].mxu0 %v3418
        %v3517 = vpop.f32.mrb[0].mxu0
        %v3518 = vadd.f32 0.0, %v3517
        %v3519 = vpop.f32.mrb[0].mxu0
        %3520 = vmatprep.mubr.f32.mxu0 0.0
        %3521 = vmatmul.mubr.f32.gmra.mrb[0].mxu0 %v3421
        %v3522 = vpop.f32.mrb[0].mxu0
        %v3523 = vadd.f32 0.0, %v3522
        %v3524 = vpop.f32.mrb[0].mxu0
        %3525 = vmatprep.mubr.f32.mxu0 0.0
        %3526 = vmatmul.mubr.f32.gmra.mrb[0].mxu0 %v3424
        %v3527 = vpop.f32.mrb[0].mxu0
        %v3528 = vadd.f32 0.0, %v3527
        %v3529 = vpop.f32.mrb[0].mxu0
        %3530 = vdwg.mxu0
        %v3531 = vadd.f32 %v3393, %v3493
        %v3532 = vadd.f32 %v3394, %v3498
        %v3533 = vadd.f32 %v3395, %v3503
        %v3534 = vadd.f32 %v3396, %v3508
        %v3535 = vadd.f32 %v3397, %v3513
        %v3536 = vadd.f32 %v3398, %v3518
        %v3537 = vadd.f32 %v3399, %v3523
        %v3538 = vadd.f32 %v3400, %v3528
        %v3539 = vld [vmem:[%s16 + $0x10] sm:$0xff]
        %v3541 = vsel %vm3263, %v3224, 0
        %v3544 = vsel %vm3263, %v3229, 0
        %v3547 = vsel %vm3263, %v3234, 0
        %v3550 = vsel %vm3263, %v3239, 0
        %v3553 = vsel %vm3263, %v3244, 0
        %v3556 = vsel %vm3263, %v3249, 0
        %v3559 = vsel %vm3263, %v3254, 0
        %v3562 = vsel %vm3263, %v3259, 0
        %3564 = vmatprep.subr.mxu0 0.0
        %3565 = vmatpush1.msra.mxu0 %v3539
        %3566 = vmatprep.subr.mxu0 0.0
        %3567 = vmatpush1.msra.mxu0 0.0
        %3568 = vmatprep.subr.mxu0 0.0
        %3569 = vmatpush1.msra.mxu0 0.0
        %3570 = vmatprep.subr.mxu0 0.0
        %3571 = vmatpush1.msra.mxu0 0.0
        %3572 = vmatprep.subr.mxu0 0.0
        %3573 = vmatpush1.msra.mxu0 0.0
        %3574 = vmatprep.subr.mxu0 0.0
        %3575 = vmatpush1.msra.mxu0 0.0
        %3576 = vmatprep.subr.mxu0 0.0
        %3577 = vmatpush1.msra.mxu0 0.0
        %3578 = vmatprep.subr.mxu0 0.0
        %3579 = vmatpush1.msra.mxu0 0.0
        %3580 = vmatprep.subr.mxu0 0.0
        %3581 = vmatpush1.msra.mxu0 0.0
        %3582 = vmatprep.subr.mxu0 0.0
        %3583 = vmatpush1.msra.mxu0 0.0
        %3584 = vmatprep.subr.mxu0 0.0
        %3585 = vmatpush1.msra.mxu0 0.0
        %3586 = vmatprep.subr.mxu0 0.0
        %3587 = vmatpush1.msra.mxu0 0.0
        %3588 = vmatprep.subr.mxu0 0.0
        %3589 = vmatpush1.msra.mxu0 0.0
        %3590 = vmatprep.subr.mxu0 0.0
        %3591 = vmatpush1.msra.mxu0 0.0
        %3592 = vmatprep.subr.mxu0 0.0
        %3593 = vmatpush1.msra.mxu0 0.0
        %3594 = vmatprep.subr.mxu0 0.0
        %3595 = vmatpush1.msra.mxu0 0.0
        %3596 = vmatprep.subr.mxu0 0.0
        %3597 = vmatpush1.msra.mxu0 0.0
        %3598 = vmatprep.subr.mxu0 0.0
        %3599 = vmatpush1.msra.mxu0 0.0
        %3600 = vmatprep.subr.mxu0 0.0
        %3601 = vmatpush1.msra.mxu0 0.0
        %3602 = vmatprep.subr.mxu0 0.0
        %3603 = vmatpush1.msra.mxu0 0.0
        %3604 = vmatprep.subr.mxu0 0.0
        %3605 = vmatpush1.msra.mxu0 0.0
        %3606 = vmatprep.subr.mxu0 0.0
        %3607 = vmatpush1.msra.mxu0 0.0
        %3608 = vmatprep.subr.mxu0 0.0
        %3609 = vmatpush1.msra.mxu0 0.0
        %3610 = vmatprep.subr.mxu0 0.0
        %3611 = vmatpush1.msra.mxu0 0.0
        %3612 = vmatprep.subr.mxu0 0.0
        %3613 = vmatpush1.msra.mxu0 0.0
        %3614 = vmatprep.subr.mxu0 0.0
        %3615 = vmatpush1.msra.mxu0 0.0
        %3616 = vmatprep.subr.mxu0 0.0
        %3617 = vmatpush1.msra.mxu0 0.0
        %3618 = vmatprep.subr.mxu0 0.0
        %3619 = vmatpush1.msra.mxu0 0.0
        %3620 = vmatprep.subr.mxu0 0.0
        %3621 = vmatpush1.msra.mxu0 0.0
        %3622 = vmatprep.subr.mxu0 0.0
        %3623 = vmatpush1.msra.mxu0 0.0
        %3624 = vmatprep.subr.mxu0 0.0
        %3625 = vmatpush1.msra.mxu0 0.0
        %3626 = vmatprep.subr.mxu0 0.0
        %3627 = vmatpush1.msra.mxu0 0.0
        %3628 = vmatprep.mubr.f32.mxu0 0.0
        %3629 = vmatmul.mubr.f32.gmra.mrb[0].mxu0 %v3541
        %v3630 = vpop.f32.mrb[0].mxu0
        %v3631 = vadd.f32 0.0, %v3630
        %v3632 = vpop.f32.mrb[0].mxu0
        %3633 = vmatprep.mubr.f32.mxu0 0.0
        %3634 = vmatmul.mubr.f32.gmra.mrb[0].mxu0 %v3544
        %v3635 = vpop.f32.mrb[0].mxu0
        %v3636 = vadd.f32 0.0, %v3635
        %v3637 = vpop.f32.mrb[0].mxu0
        %3638 = vmatprep.mubr.f32.mxu0 0.0
        %3639 = vmatmul.mubr.f32.gmra.mrb[0].mxu0 %v3547
        %v3640 = vpop.f32.mrb[0].mxu0
        %v3641 = vadd.f32 0.0, %v3640
        %v3642 = vpop.f32.mrb[0].mxu0
        %3643 = vmatprep.mubr.f32.mxu0 0.0
        %3644 = vmatmul.mubr.f32.gmra.mrb[0].mxu0 %v3550
        %v3645 = vpop.f32.mrb[0].mxu0
        %v3646 = vadd.f32 0.0, %v3645
        %v3647 = vpop.f32.mrb[0].mxu0
        %3648 = vmatprep.mubr.f32.mxu0 0.0
        %3649 = vmatmul.mubr.f32.gmra.mrb[0].mxu0 %v3553
        %v3650 = vpop.f32.mrb[0].mxu0
        %v3651 = vadd.f32 0.0, %v3650
        %v3652 = vpop.f32.mrb[0].mxu0
        %3653 = vmatprep.mubr.f32.mxu0 0.0
        %3654 = vmatmul.mubr.f32.gmra.mrb[0].mxu0 %v3556
        %v3655 = vpop.f32.mrb[0].mxu0
        %v3656 = vadd.f32 0.0, %v3655
        %v3657 = vpop.f32.mrb[0].mxu0
        %3658 = vmatprep.mubr.f32.mxu0 0.0
        %3659 = vmatmul.mubr.f32.gmra.mrb[0].mxu0 %v3559
        %v3660 = vpop.f32.mrb[0].mxu0
        %v3661 = vadd.f32 0.0, %v3660
        %v3662 = vpop.f32.mrb[0].mxu0
        %3663 = vmatprep.mubr.f32.mxu0 0.0
        %3664 = vmatmul.mubr.f32.gmra.mrb[0].mxu0 %v3562
        %v3665 = vpop.f32.mrb[0].mxu0
        %v3666 = vadd.f32 0.0, %v3665
        %v3667 = vpop.f32.mrb[0].mxu0
        %3668 = vdwg.mxu0
        %v3669 = vadd.f32 %v3531, %v3631
        %v3670 = vadd.f32 %v3532, %v3636
        %v3671 = vadd.f32 %v3533, %v3641
        %v3672 = vadd.f32 %v3534, %v3646
        %v3673 = vadd.f32 %v3535, %v3651
        %v3674 = vadd.f32 %v3536, %v3656
        %v3675 = vadd.f32 %v3537, %v3661
        %v3676 = vadd.f32 %v3538, %v3666
        %v3677 = vld [vmem:[%s17] sm:$0xff]
        %v3678 = vld [vmem:[%s17 + $0x8] sm:$0xff]
        %v3679 = vld [vmem:[%s17 + $0x10] sm:$0xff]
        %v3680 = vld [vmem:[%s17 + $0x18] sm:$0xff]
        %v3681 = vld [vmem:[%s17 + $0x20] sm:$0xff]
        %v3682 = vld [vmem:[%s17 + $0x28] sm:$0xff]
        %v3683 = vld [vmem:[%s17 + $0x30] sm:$0xff]
        %v3684 = vld [vmem:[%s17 + $0x38] sm:$0xff]
        %v3685 = vld [vmem:[%s764] sm:$0xff]
        %v3686 = vld [vmem:[%s764 + $0x8] sm:$0xff]
        %v3687 = vld [vmem:[%s764 + $0x10] sm:$0xff]
        %v3688 = vld [vmem:[%s764 + $0x18] sm:$0xff]
        %v3689 = vld [vmem:[%s764 + $0x20] sm:$0xff]
        %v3690 = vld [vmem:[%s764 + $0x28] sm:$0xff]
        %v3691 = vld [vmem:[%s764 + $0x30] sm:$0xff]
        %v3692 = vld [vmem:[%s764 + $0x38] sm:$0xff]
        %v3693 = vld [vmem:[%s18] sm:$0xff]
        %v3694 = vld [vmem:[%s18 + $0x8] sm:$0xff]
        %v3695 = vld [vmem:[%s18 + $0x10] sm:$0xff]
        %v3696 = vld [vmem:[%s18 + $0x18] sm:$0xff]
        %v3697 = vld [vmem:[%s18 + $0x20] sm:$0xff]
        %v3698 = vld [vmem:[%s18 + $0x28] sm:$0xff]
        %v3699 = vld [vmem:[%s18 + $0x30] sm:$0xff]
        %v3700 = vld [vmem:[%s18 + $0x38] sm:$0xff]
        %v3701 = vld [vmem:[%s769] sm:$0xff]
        %v3702 = vld [vmem:[%s769 + $0x8] sm:$0xff]
        %v3703 = vld [vmem:[%s769 + $0x10] sm:$0xff]
        %v3704 = vld [vmem:[%s769 + $0x18] sm:$0xff]
        %v3705 = vld [vmem:[%s769 + $0x20] sm:$0xff]
        %v3706 = vld [vmem:[%s769 + $0x28] sm:$0xff]
        %v3707 = vld [vmem:[%s769 + $0x30] sm:$0xff]
        %v3708 = vld [vmem:[%s769 + $0x38] sm:$0xff]
        %v3710 = vsel %vm795, %v3693, 0
        %v3713 = vsel %vm795, %v3694, 0
        %v3716 = vsel %vm795, %v3695, 0
        %v3719 = vsel %vm795, %v3696, 0
        %v3722 = vsel %vm795, %v3697, 0
        %v3725 = vsel %vm795, %v3698, 0
        %v3728 = vsel %vm795, %v3699, 0
        %v3731 = vsel %vm795, %v3700, 0
        %3733 = vmatprep.subr.mxu0 0.0
        %3734 = vmatpush1.msra.mxu0 %v3701
        %3735 = vmatprep.subr.mxu0 0.0
        %3736 = vmatpush1.msra.mxu0 %v3702
        %3737 = vmatprep.subr.mxu0 0.0
        %3738 = vmatpush1.msra.mxu0 %v3703
        %3739 = vmatprep.subr.mxu0 0.0
        %3740 = vmatpush1.msra.mxu0 %v3704
        %3741 = vmatprep.subr.mxu0 0.0
        %3742 = vmatpush1.msra.mxu0 %v3705
        %3743 = vmatprep.subr.mxu0 0.0
        %3744 = vmatpush1.msra.mxu0 %v3706
        %3745 = vmatprep.subr.mxu0 0.0
        %3746 = vmatpush1.msra.mxu0 %v3707
        %3747 = vmatprep.subr.mxu0 0.0
        %3748 = vmatpush1.msra.mxu0 %v3708
        %3749 = vmatprep.subr.mxu0 0.0
        %3750 = vmatpush1.msra.mxu0 0.0
        %3751 = vmatprep.subr.mxu0 0.0
        %3752 = vmatpush1.msra.mxu0 0.0
        %3753 = vmatprep.subr.mxu0 0.0
        %3754 = vmatpush1.msra.mxu0 0.0
        %3755 = vmatprep.subr.mxu0 0.0
        %3756 = vmatpush1.msra.mxu0 0.0
        %3757 = vmatprep.subr.mxu0 0.0
        %3758 = vmatpush1.msra.mxu0 0.0
        %3759 = vmatprep.subr.mxu0 0.0
        %3760 = vmatpush1.msra.mxu0 0.0
        %3761 = vmatprep.subr.mxu0 0.0
        %3762 = vmatpush1.msra.mxu0 0.0
        %3763 = vmatprep.subr.mxu0 0.0
        %3764 = vmatpush1.msra.mxu0 0.0
        %3765 = vmatprep.subr.mxu0 0.0
        %3766 = vmatpush1.msra.mxu0 0.0
        %3767 = vmatprep.subr.mxu0 0.0
        %3768 = vmatpush1.msra.mxu0 0.0
        %3769 = vmatprep.subr.mxu0 0.0
        %3770 = vmatpush1.msra.mxu0 0.0
        %3771 = vmatprep.subr.mxu0 0.0
        %3772 = vmatpush1.msra.mxu0 0.0
        %3773 = vmatprep.subr.mxu0 0.0
        %3774 = vmatpush1.msra.mxu0 0.0
        %3775 = vmatprep.subr.mxu0 0.0
        %3776 = vmatpush1.msra.mxu0 0.0
        %3777 = vmatprep.subr.mxu0 0.0
        %3778 = vmatpush1.msra.mxu0 0.0
        %3779 = vmatprep.subr.mxu0 0.0
        %3780 = vmatpush1.msra.mxu0 0.0
        %3781 = vmatprep.subr.mxu0 0.0
        %3782 = vmatpush1.msra.mxu0 0.0
        %3783 = vmatprep.subr.mxu0 0.0
        %3784 = vmatpush1.msra.mxu0 0.0
        %3785 = vmatprep.subr.mxu0 0.0
        %3786 = vmatpush1.msra.mxu0 0.0
        %3787 = vmatprep.subr.mxu0 0.0
        %3788 = vmatpush1.msra.mxu0 0.0
        %3789 = vmatprep.subr.mxu0 0.0
        %3790 = vmatpush1.msra.mxu0 0.0
        %3791 = vmatprep.subr.mxu0 0.0
        %3792 = vmatpush1.msra.mxu0 0.0
        %3793 = vmatprep.subr.mxu0 0.0
        %3794 = vmatpush1.msra.mxu0 0.0
        %3795 = vmatprep.subr.mxu0 0.0
        %3796 = vmatpush1.msra.mxu0 0.0
        %3797 = vmatprep.mubr.f32.mxu0 0.0
        %3798 = vmatmul.mubr.f32.gmra.mrb[0].mxu0 %v3710
        %v3799 = vpop.f32.mrb[0].mxu0
        %v3800 = vadd.f32 0.0, %v3799
        %v3801 = vpop.f32.mrb[0].mxu0
        %3802 = vmatprep.mubr.f32.mxu0 0.0
        %3803 = vmatmul.mubr.f32.gmra.mrb[0].mxu0 %v3713
        %v3804 = vpop.f32.mrb[0].mxu0
        %v3805 = vadd.f32 0.0, %v3804
        %v3806 = vpop.f32.mrb[0].mxu0
        %3807 = vmatprep.mubr.f32.mxu0 0.0
        %3808 = vmatmul.mubr.f32.gmra.mrb[0].mxu0 %v3716
        %v3809 = vpop.f32.mrb[0].mxu0
        %v3810 = vadd.f32 0.0, %v3809
        %v3811 = vpop.f32.mrb[0].mxu0
        %3812 = vmatprep.mubr.f32.mxu0 0.0
        %3813 = vmatmul.mubr.f32.gmra.mrb[0].mxu0 %v3719
        %v3814 = vpop.f32.mrb[0].mxu0
        %v3815 = vadd.f32 0.0, %v3814
        %v3816 = vpop.f32.mrb[0].mxu0
        %3817 = vmatprep.mubr.f32.mxu0 0.0
        %3818 = vmatmul.mubr.f32.gmra.mrb[0].mxu0 %v3722
        %v3819 = vpop.f32.mrb[0].mxu0
        %v3820 = vadd.f32 0.0, %v3819
        %v3821 = vpop.f32.mrb[0].mxu0
        %3822 = vmatprep.mubr.f32.mxu0 0.0
        %3823 = vmatmul.mubr.f32.gmra.mrb[0].mxu0 %v3725
        %v3824 = vpop.f32.mrb[0].mxu0
        %v3825 = vadd.f32 0.0, %v3824
        %v3826 = vpop.f32.mrb[0].mxu0
        %3827 = vmatprep.mubr.f32.mxu0 0.0
        %3828 = vmatmul.mubr.f32.gmra.mrb[0].mxu0 %v3728
        %v3829 = vpop.f32.mrb[0].mxu0
        %v3830 = vadd.f32 0.0, %v3829
        %v3831 = vpop.f32.mrb[0].mxu0
        %3832 = vmatprep.mubr.f32.mxu0 0.0
        %3833 = vmatmul.mubr.f32.gmra.mrb[0].mxu0 %v3731
        %v3834 = vpop.f32.mrb[0].mxu0
        %v3835 = vadd.f32 0.0, %v3834
        %v3836 = vpop.f32.mrb[0].mxu0
        %3837 = vdwg.mxu0
        %v3839 = vsel %vm795, %v3677, 0
        %v3842 = vsel %vm795, %v3678, 0
        %v3845 = vsel %vm795, %v3679, 0
        %v3848 = vsel %vm795, %v3680, 0
        %v3851 = vsel %vm795, %v3681, 0
        %v3854 = vsel %vm795, %v3682, 0
        %v3857 = vsel %vm795, %v3683, 0
        %v3860 = vsel %vm795, %v3684, 0
        %3862 = vmatprep.subr.mxu0 0.0
        %3863 = vmatpush1.msra.mxu0 %v3685
        %3864 = vmatprep.subr.mxu0 0.0
        %3865 = vmatpush1.msra.mxu0 %v3686
        %3866 = vmatprep.subr.mxu0 0.0
        %3867 = vmatpush1.msra.mxu0 %v3687
        %3868 = vmatprep.subr.mxu0 0.0
        %3869 = vmatpush1.msra.mxu0 %v3688
        %3870 = vmatprep.subr.mxu0 0.0
        %3871 = vmatpush1.msra.mxu0 %v3689
        %3872 = vmatprep.subr.mxu0 0.0
        %3873 = vmatpush1.msra.mxu0 %v3690
        %3874 = vmatprep.subr.mxu0 0.0
        %3875 = vmatpush1.msra.mxu0 %v3691
        %3876 = vmatprep.subr.mxu0 0.0
        %3877 = vmatpush1.msra.mxu0 %v3692
        %3878 = vmatprep.subr.mxu0 0.0
        %3879 = vmatpush1.msra.mxu0 0.0
        %3880 = vmatprep.subr.mxu0 0.0
        %3881 = vmatpush1.msra.mxu0 0.0
        %3882 = vmatprep.subr.mxu0 0.0
        %3883 = vmatpush1.msra.mxu0 0.0
        %3884 = vmatprep.subr.mxu0 0.0
        %3885 = vmatpush1.msra.mxu0 0.0
        %3886 = vmatprep.subr.mxu0 0.0
        %3887 = vmatpush1.msra.mxu0 0.0
        %3888 = vmatprep.subr.mxu0 0.0
        %3889 = vmatpush1.msra.mxu0 0.0
        %3890 = vmatprep.subr.mxu0 0.0
        %3891 = vmatpush1.msra.mxu0 0.0
        %3892 = vmatprep.subr.mxu0 0.0
        %3893 = vmatpush1.msra.mxu0 0.0
        %3894 = vmatprep.subr.mxu0 0.0
        %3895 = vmatpush1.msra.mxu0 0.0
        %3896 = vmatprep.subr.mxu0 0.0
        %3897 = vmatpush1.msra.mxu0 0.0
        %3898 = vmatprep.subr.mxu0 0.0
        %3899 = vmatpush1.msra.mxu0 0.0
        %3900 = vmatprep.subr.mxu0 0.0
        %3901 = vmatpush1.msra.mxu0 0.0
        %3902 = vmatprep.subr.mxu0 0.0
        %3903 = vmatpush1.msra.mxu0 0.0
        %3904 = vmatprep.subr.mxu0 0.0
        %3905 = vmatpush1.msra.mxu0 0.0
        %3906 = vmatprep.subr.mxu0 0.0
        %3907 = vmatpush1.msra.mxu0 0.0
        %3908 = vmatprep.subr.mxu0 0.0
        %3909 = vmatpush1.msra.mxu0 0.0
        %3910 = vmatprep.subr.mxu0 0.0
        %3911 = vmatpush1.msra.mxu0 0.0
        %3912 = vmatprep.subr.mxu0 0.0
        %3913 = vmatpush1.msra.mxu0 0.0
        %3914 = vmatprep.subr.mxu0 0.0
        %3915 = vmatpush1.msra.mxu0 0.0
        %3916 = vmatprep.subr.mxu0 0.0
        %3917 = vmatpush1.msra.mxu0 0.0
        %3918 = vmatprep.subr.mxu0 0.0
        %3919 = vmatpush1.msra.mxu0 0.0
        %3920 = vmatprep.subr.mxu0 0.0
        %3921 = vmatpush1.msra.mxu0 0.0
        %3922 = vmatprep.subr.mxu0 0.0
        %3923 = vmatpush1.msra.mxu0 0.0
        %3924 = vmatprep.subr.mxu0 0.0
        %3925 = vmatpush1.msra.mxu0 0.0
        %3926 = vmatprep.mubr.f32.mxu0 0.0
        %3927 = vmatmul.mubr.f32.gmra.mrb[0].mxu0 %v3839
        %v3928 = vpop.f32.mrb[0].mxu0
        %v3929 = vadd.f32 %v3800, %v3928
        %v3930 = vpop.f32.mrb[0].mxu0
        %3931 = vmatprep.mubr.f32.mxu0 0.0
        %3932 = vmatmul.mubr.f32.gmra.mrb[0].mxu0 %v3842
        %v3933 = vpop.f32.mrb[0].mxu0
        %v3934 = vadd.f32 %v3805, %v3933
        %v3935 = vpop.f32.mrb[0].mxu0
        %3936 = vmatprep.mubr.f32.mxu0 0.0
        %3937 = vmatmul.mubr.f32.gmra.mrb[0].mxu0 %v3845
        %v3938 = vpop.f32.mrb[0].mxu0
        %v3939 = vadd.f32 %v3810, %v3938
        %v3940 = vpop.f32.mrb[0].mxu0
        %3941 = vmatprep.mubr.f32.mxu0 0.0
        %3942 = vmatmul.mubr.f32.gmra.mrb[0].mxu0 %v3848
        %v3943 = vpop.f32.mrb[0].mxu0
        %v3944 = vadd.f32 %v3815, %v3943
        %v3945 = vpop.f32.mrb[0].mxu0
        %3946 = vmatprep.mubr.f32.mxu0 0.0
        %3947 = vmatmul.mubr.f32.gmra.mrb[0].mxu0 %v3851
        %v3948 = vpop.f32.mrb[0].mxu0
        %v3949 = vadd.f32 %v3820, %v3948
        %v3950 = vpop.f32.mrb[0].mxu0
        %3951 = vmatprep.mubr.f32.mxu0 0.0
        %3952 = vmatmul.mubr.f32.gmra.mrb[0].mxu0 %v3854
        %v3953 = vpop.f32.mrb[0].mxu0
        %v3954 = vadd.f32 %v3825, %v3953
        %v3955 = vpop.f32.mrb[0].mxu0
        %3956 = vmatprep.mubr.f32.mxu0 0.0
        %3957 = vmatmul.mubr.f32.gmra.mrb[0].mxu0 %v3857
        %v3958 = vpop.f32.mrb[0].mxu0
        %v3959 = vadd.f32 %v3830, %v3958
        %v3960 = vpop.f32.mrb[0].mxu0
        %3961 = vmatprep.mubr.f32.mxu0 0.0
        %3962 = vmatmul.mubr.f32.gmra.mrb[0].mxu0 %v3860
        %v3963 = vpop.f32.mrb[0].mxu0
        %v3964 = vadd.f32 %v3835, %v3963
        %v3965 = vpop.f32.mrb[0].mxu0
        %3966 = vdwg.mxu0
        %v3967 = vld [vmem:[%s19] sm:$0xff]
        %v3968 = vld [vmem:[%s19 + $0x8] sm:$0xff]
        %v3969 = vld [vmem:[%s19 + $0x10] sm:$0xff]
        %v3970 = vld [vmem:[%s19 + $0x18] sm:$0xff]
        %v3971 = vld [vmem:[%s19 + $0x20] sm:$0xff]
        %v3972 = vld [vmem:[%s19 + $0x28] sm:$0xff]
        %v3973 = vld [vmem:[%s19 + $0x30] sm:$0xff]
        %v3974 = vld [vmem:[%s19 + $0x38] sm:$0xff]
        %v3975 = vld [vmem:[%s774] sm:$0xff]
        %v3976 = vld [vmem:[%s774 + $0x8] sm:$0xff]
        %v3977 = vld [vmem:[%s774 + $0x10] sm:$0xff]
        %v3978 = vld [vmem:[%s774 + $0x18] sm:$0xff]
        %v3979 = vld [vmem:[%s774 + $0x20] sm:$0xff]
        %v3980 = vld [vmem:[%s774 + $0x28] sm:$0xff]
        %v3981 = vld [vmem:[%s774 + $0x30] sm:$0xff]
        %v3982 = vld [vmem:[%s774 + $0x38] sm:$0xff]
        %v3984 = vsel %vm795, %v3967, 0
        %v3987 = vsel %vm795, %v3968, 0
        %v3990 = vsel %vm795, %v3969, 0
        %v3993 = vsel %vm795, %v3970, 0
        %v3996 = vsel %vm795, %v3971, 0
        %v3999 = vsel %vm795, %v3972, 0
        %v4002 = vsel %vm795, %v3973, 0
        %v4005 = vsel %vm795, %v3974, 0
        %4007 = vmatprep.subr.mxu0 0.0
        %4008 = vmatpush1.msra.mxu0 %v3975
        %4009 = vmatprep.subr.mxu0 0.0
        %4010 = vmatpush1.msra.mxu0 %v3976
        %4011 = vmatprep.subr.mxu0 0.0
        %4012 = vmatpush1.msra.mxu0 %v3977
        %4013 = vmatprep.subr.mxu0 0.0
        %4014 = vmatpush1.msra.mxu0 %v3978
        %4015 = vmatprep.subr.mxu0 0.0
        %4016 = vmatpush1.msra.mxu0 %v3979
        %4017 = vmatprep.subr.mxu0 0.0
        %4018 = vmatpush1.msra.mxu0 %v3980
        %4019 = vmatprep.subr.mxu0 0.0
        %4020 = vmatpush1.msra.mxu0 %v3981
        %4021 = vmatprep.subr.mxu0 0.0
        %4022 = vmatpush1.msra.mxu0 %v3982
        %4023 = vmatprep.subr.mxu0 0.0
        %4024 = vmatpush1.msra.mxu0 0.0
        %4025 = vmatprep.subr.mxu0 0.0
        %4026 = vmatpush1.msra.mxu0 0.0
        %4027 = vmatprep.subr.mxu0 0.0
        %4028 = vmatpush1.msra.mxu0 0.0
        %4029 = vmatprep.subr.mxu0 0.0
        %4030 = vmatpush1.msra.mxu0 0.0
        %4031 = vmatprep.subr.mxu0 0.0
        %4032 = vmatpush1.msra.mxu0 0.0
        %4033 = vmatprep.subr.mxu0 0.0
        %4034 = vmatpush1.msra.mxu0 0.0
        %4035 = vmatprep.subr.mxu0 0.0
        %4036 = vmatpush1.msra.mxu0 0.0
        %4037 = vmatprep.subr.mxu0 0.0
        %4038 = vmatpush1.msra.mxu0 0.0
        %4039 = vmatprep.subr.mxu0 0.0
        %4040 = vmatpush1.msra.mxu0 0.0
        %4041 = vmatprep.subr.mxu0 0.0
        %4042 = vmatpush1.msra.mxu0 0.0
        %4043 = vmatprep.subr.mxu0 0.0
        %4044 = vmatpush1.msra.mxu0 0.0
        %4045 = vmatprep.subr.mxu0 0.0
        %4046 = vmatpush1.msra.mxu0 0.0
        %4047 = vmatprep.subr.mxu0 0.0
        %4048 = vmatpush1.msra.mxu0 0.0
        %4049 = vmatprep.subr.mxu0 0.0
        %4050 = vmatpush1.msra.mxu0 0.0
        %4051 = vmatprep.subr.mxu0 0.0
        %4052 = vmatpush1.msra.mxu0 0.0
        %4053 = vmatprep.subr.mxu0 0.0
        %4054 = vmatpush1.msra.mxu0 0.0
        %4055 = vmatprep.subr.mxu0 0.0
        %4056 = vmatpush1.msra.mxu0 0.0
        %4057 = vmatprep.subr.mxu0 0.0
        %4058 = vmatpush1.msra.mxu0 0.0
        %4059 = vmatprep.subr.mxu0 0.0
        %4060 = vmatpush1.msra.mxu0 0.0
        %4061 = vmatprep.subr.mxu0 0.0
        %4062 = vmatpush1.msra.mxu0 0.0
        %4063 = vmatprep.subr.mxu0 0.0
        %4064 = vmatpush1.msra.mxu0 0.0
        %4065 = vmatprep.subr.mxu0 0.0
        %4066 = vmatpush1.msra.mxu0 0.0
        %4067 = vmatprep.subr.mxu0 0.0
        %4068 = vmatpush1.msra.mxu0 0.0
        %4069 = vmatprep.subr.mxu0 0.0
        %4070 = vmatpush1.msra.mxu0 0.0
        %4071 = vmatprep.mubr.f32.mxu0 0.0
        %4072 = vmatmul.mubr.f32.gmra.mrb[0].mxu0 %v3984
        %v4073 = vpop.f32.mrb[0].mxu0
        %v4074 = vadd.f32 0.0, %v4073
        %v4075 = vpop.f32.mrb[0].mxu0
        %4076 = vmatprep.mubr.f32.mxu0 0.0
        %4077 = vmatmul.mubr.f32.gmra.mrb[0].mxu0 %v3987
        %v4078 = vpop.f32.mrb[0].mxu0
        %v4079 = vadd.f32 0.0, %v4078
        %v4080 = vpop.f32.mrb[0].mxu0
        %4081 = vmatprep.mubr.f32.mxu0 0.0
        %4082 = vmatmul.mubr.f32.gmra.mrb[0].mxu0 %v3990
        %v4083 = vpop.f32.mrb[0].mxu0
        %v4084 = vadd.f32 0.0, %v4083
        %v4085 = vpop.f32.mrb[0].mxu0
        %4086 = vmatprep.mubr.f32.mxu0 0.0
        %4087 = vmatmul.mubr.f32.gmra.mrb[0].mxu0 %v3993
        %v4088 = vpop.f32.mrb[0].mxu0
        %v4089 = vadd.f32 0.0, %v4088
        %v4090 = vpop.f32.mrb[0].mxu0
        %4091 = vmatprep.mubr.f32.mxu0 0.0
        %4092 = vmatmul.mubr.f32.gmra.mrb[0].mxu0 %v3996
        %v4093 = vpop.f32.mrb[0].mxu0
        %v4094 = vadd.f32 0.0, %v4093
        %v4095 = vpop.f32.mrb[0].mxu0
        %4096 = vmatprep.mubr.f32.mxu0 0.0
        %4097 = vmatmul.mubr.f32.gmra.mrb[0].mxu0 %v3999
        %v4098 = vpop.f32.mrb[0].mxu0
        %v4099 = vadd.f32 0.0, %v4098
        %v4100 = vpop.f32.mrb[0].mxu0
        %4101 = vmatprep.mubr.f32.mxu0 0.0
        %4102 = vmatmul.mubr.f32.gmra.mrb[0].mxu0 %v4002
        %v4103 = vpop.f32.mrb[0].mxu0
        %v4104 = vadd.f32 0.0, %v4103
        %v4105 = vpop.f32.mrb[0].mxu0
        %4106 = vmatprep.mubr.f32.mxu0 0.0
        %4107 = vmatmul.mubr.f32.gmra.mrb[0].mxu0 %v4005
        %v4108 = vpop.f32.mrb[0].mxu0
        %v4109 = vadd.f32 0.0, %v4108
        %v4110 = vpop.f32.mrb[0].mxu0
        %4111 = vdwg.mxu0
        %v4112 = vadd.f32 %v3929, %v4074
        %v4113 = vadd.f32 %v3934, %v4079
        %v4114 = vadd.f32 %v3939, %v4084
        %v4115 = vadd.f32 %v3944, %v4089
        %v4116 = vadd.f32 %v3949, %v4094
        %v4117 = vadd.f32 %v3954, %v4099
        %v4118 = vadd.f32 %v3959, %v4104
        %v4119 = vadd.f32 %v3964, %v4109
        %v4120 = vld [vmem:[%s20] sm:$0xff]
        %v4121 = vld [vmem:[%s20 + $0x8] sm:$0xff]
        %v4122 = vld [vmem:[%s20 + $0x10] sm:$0xff]
        %v4123 = vld [vmem:[%s20 + $0x18] sm:$0xff]
        %v4124 = vld [vmem:[%s20 + $0x20] sm:$0xff]
        %v4125 = vld [vmem:[%s20 + $0x28] sm:$0xff]
        %v4126 = vld [vmem:[%s20 + $0x30] sm:$0xff]
        %v4127 = vld [vmem:[%s20 + $0x38] sm:$0xff]
        %4129 = vset.pattern.permute.xlu0 0
        %4130 = vperm.xlu0 %4129, %v4120
        %v4131 = vpop.permute.xlu0 %4130
        %4134 = vset.pattern.permute.xlu0 0
        %4135 = vperm.xlu0 %4134, %v4121
        %v4136 = vpop.permute.xlu0 %4135
        %4139 = vset.pattern.permute.xlu0 0
        %4140 = vperm.xlu0 %4139, %v4122
        %v4141 = vpop.permute.xlu0 %4140
        %4144 = vset.pattern.permute.xlu0 0
        %4145 = vperm.xlu0 %4144, %v4123
        %v4146 = vpop.permute.xlu0 %4145
        %4149 = vset.pattern.permute.xlu0 0
        %4150 = vperm.xlu0 %4149, %v4124
        %v4151 = vpop.permute.xlu0 %4150
        %4154 = vset.pattern.permute.xlu0 0
        %4155 = vperm.xlu0 %4154, %v4125
        %v4156 = vpop.permute.xlu0 %4155
        %4159 = vset.pattern.permute.xlu0 0
        %4160 = vperm.xlu0 %4159, %v4126
        %v4161 = vpop.permute.xlu0 %4160
        %4164 = vset.pattern.permute.xlu0 0
        %4165 = vperm.xlu0 %4164, %v4127
        %v4166 = vpop.permute.xlu0 %4165
        %v4168 = vadd.f32 %v4112, %v4131
        %v4169 = vadd.f32 %v4113, %v4136
        %v4170 = vadd.f32 %v4114, %v4141
        %v4171 = vadd.f32 %v4115, %v4146
        %v4172 = vadd.f32 %v4116, %v4151
        %v4173 = vadd.f32 %v4117, %v4156
        %v4174 = vadd.f32 %v4118, %v4161
        %v4175 = vadd.f32 %v4119, %v4166
        %v4176 = vadd.f32 %v3669, %v4168
        %v4177 = vadd.f32 %v3670, %v4169
        %v4178 = vadd.f32 %v3671, %v4170
        %v4179 = vadd.f32 %v3672, %v4171
        %v4180 = vadd.f32 %v3673, %v4172
        %v4181 = vadd.f32 %v3674, %v4173
        %v4182 = vadd.f32 %v3675, %v4174
        %v4183 = vadd.f32 %v3676, %v4175
        %v4184 = vmax.f32 %v4176, 0.0
        %v4185 = vmax.f32 %v4177, 0.0
        %v4186 = vmax.f32 %v4178, 0.0
        %v4187 = vmax.f32 %v4179, 0.0
        %v4188 = vmax.f32 %v4180, 0.0
        %v4189 = vmax.f32 %v4181, 0.0
        %v4190 = vmax.f32 %v4182, 0.0
        %v4191 = vmax.f32 %v4183, 0.0
        %4192 = vst.msk [vmem:[%s739] sm:$0xff] %vm1038, %v4184
        %4193 = vst.msk [vmem:[%s739 + $0x8] sm:$0xff] %vm1038, %v4185
        %4194 = vst.msk [vmem:[%s739 + $0x10] sm:$0xff] %vm1038, %v4186
        %4195 = vst.msk [vmem:[%s739 + $0x18] sm:$0xff] %vm1038, %v4187
        %4196 = vst.msk [vmem:[%s739 + $0x20] sm:$0xff] %vm1038, %v4188
        %4197 = vst.msk [vmem:[%s739 + $0x28] sm:$0xff] %vm1038, %v4189
        %4198 = vst.msk [vmem:[%s739 + $0x30] sm:$0xff] %vm1038, %v4190
        %4199 = vst.msk [vmem:[%s739 + $0x38] sm:$0xff] %vm1038, %v4191
        %s4200 = sand.u32 %s519, 1
        %s4201 = scalar_lea.sflag [#allocation3], %s4200
        %s4202 = sand.u32 %s519, 1
        %s4203 = smul.addr %s4202, 64
        %s4204 = scalar_lea.vmem [#allocation2], %s4203
        // Predicated region
        $region105: #{fb_forward.1} parent=103 // pred_check
          %p4205 = pneg %p529
        $region106: #{fb_forward.1} parent=103 // pred_check_branch
          %4207 = sbr.rel (%p4205) target = $region108
        $region107: #{fb_forward.1} parent=103 // pred_region
          %s4209 = ssub.s32 1024, 1024
          %4210 = vsyncadd %s4201, %s4209
          %s4211 = smul.addr %s35, 8
          %s4212 = smul.addr %s4211, 128
          %s4213 = scalar_lea.hbm %s21, %s4212
          %s4214 = sshll.u32 %s4204, 4
          %s4215 = int_to_ptr.vmem [resolvable:$true] %s4214
          %4220 = dma.vmem_to_hbm [thread:$0]  %s4215, 1024, %s4213, %s4201, 128, 128, 8
        $region108: #{fb_forward.1} parent=103 // pred_fallthru
          _
      $region104: #{fb_forward.1} parent=5 // pred_fallthru
        _
      %p4221 = scmp.le.s32.totalorder 2, %s30
      // Predicated region
      $region109: #{fb_forward.1} parent=5 // pred_check
        %p4222 = pneg %p4221
      $region110: #{fb_forward.1} parent=5 // pred_check_branch
        %4224 = sbr.rel (%p4222) target = $region112
      $region111: #{fb_forward.1} parent=5 // pred_region
        %s4225 = ssub.s32 %s30, 2
        // Predicated region
        $region113: #{fb_forward.1} parent=111 // pred_check
          %p4226 = pneg %p535
        $region114: #{fb_forward.1} parent=111 // pred_check_branch
          %4228 = sbr.rel (%p4226) target = $region116
        $region115: #{fb_forward.1} parent=111 // pred_region
          %s4229 = sand.u32 %s520, 1
          %s4230 = scalar_lea.sflag [#allocation3], %s4229
          %s4231 = sand.u32 %s520, 1
          %s4232 = smul.addr %s4231, 64
          %s4233 = scalar_lea.vmem [#allocation2], %s4232
          %4234 = dma.done %s4230, 1024
        $region116: #{fb_forward.1} parent=111 // pred_fallthru
          _
      $region112: #{fb_forward.1} parent=5 // pred_fallthru
        _
    $region6: #{fb_forward.1} parent=1 // loop_footer
      %s34 = sadd.s32 1, %s30
    $region7: #{fb_forward.1} parent=1 // loop_footer_branch
      %29 = sbr.rel target = $region3
    $region8: #{fb_forward.1} parent=1 // loop_exit
      _
    %4235 = vsyncpa [#allocation3], 1
    %s4236 = scalar_lea.sflag [#allocation3], 1
    %4237 = vsyncpa %s4236, 1

</llo_original>
